<compile_context>
chip_gen: v7x
topology: tpu7x:2x2x1
jax: 0.10.0
libtpu: 0.0.40
codegen_flags: <defaults>
</compile_context>

<pallas_src>
import numpy as np

import jax
import jax.numpy as jnp
from jax import lax
from jax.experimental import pallas as pl
from jax.experimental.pallas import tpu as pltpu

# ----- small, module-consistent shapes -----
B, L_DEC, L_ENC = 2, 8, 12
D_MODEL, N_HEADS, D_FF = 32, 4, 64
D_HEAD = D_MODEL // N_HEADS
EPS = 1e-5  # nn.LayerNorm default

N_Q = B * L_DEC    # 16 folded decoder rows
N_KV = B * L_ENC   # 24 folded encoder rows
LANES = 128

# ----- packed, lane-dense weight-slab layout (single f32 [168, 128] array) ---
R_BLK0 = 0     # rows  0:32   [Wq_s | Wk_s | Wv_s | Wd]
R_BLK1 = 32    # rows 32:64   [Wq_c | Wk_c | Wv_c | Wo_s]
R_BLK2 = 64    # rows 64:96   [Wf1 (lanes 0:64) | Wo_c (64:96) | 0]
R_BLK3 = 96    # rows 96:160  [Wf2 (64x32, lanes 0:32) | 0]
R_VEC = 160    # 5 packed 1x128 vector rows:
#   R_VEC+0: [bq_s | bk_s | bv_s | bd ]
#   R_VEC+1: [bq_c | bk_c | bv_c | 0  ]
#   R_VEC+2: [bo_s | bo_c | bf2  | 0  ]
#   R_VEC+3: [bf1 (64)    | g1   | be1]
#   R_VEC+4: [g2   | be2  | 0    | 0  ]
SLAB_ROWS = 168  # 165 used, padded to a multiple of 8 sublanes

# ----- output-slab column layout (256 lanes = two full 128-lane tiles) -------
C_XF = 0                               # x_freq            lanes   0:32
C_TR = D_MODEL                         # trend_out         lanes  32:64
C_ASA = 2 * D_MODEL                    # self-attn weights lanes  64:128
C_ACR = C_ASA + N_HEADS * N_Q          # cross-attn weights lanes 128:224
OUT_COLS = 256                         # lanes 224:256 are zero padding


def _layernorm(z, g, b):
    mu = jnp.mean(z, axis=-1, keepdims=True)
    var = jnp.mean((z - mu) ** 2, axis=-1, keepdims=True)
    return (z - mu) * lax.rsqrt(var + EPS) * g + b


def decoder_layer_kernel(xt_ref, cross_ref, w_ref, mask_s_ref, mask_c_ref, out_ref):
    scale = 1.0 / (D_HEAD ** 0.5)
    xt = xt_ref[...]               # [32, 32] rows 0:16 = x, rows 16:32 = trend
    x = xt[0:N_Q, :]               # [16, 32]
    cross = cross_ref[...]         # [24, 32]
    mask_s = mask_s_ref[...]       # [16, 16] additive 0 / -1e30 (static)
    mask_c = mask_c_ref[...]       # [16, 24]

    def vrow(i):                   # one packed [1, 128] bias / LN row
        r = R_VEC + i
        return w_ref[r:r + 1, :]

    def attend(q, k, v, mask, wo, bo):
        # q [16,32], k/v [nk,32]; per-head static loop, one W_o push at the end
        pv_heads, a_heads = [], []
        for h in range(N_HEADS):
            sl = slice(h * D_HEAD, (h + 1) * D_HEAD)
            qh, kh, vh = q[:, sl], k[:, sl], v[:, sl]
            s = lax.dot_general(qh, kh, (((1,), (1,)), ((), ())),
                                preferred_element_type=jnp.float32) * scale + mask
            s = s - jnp.max(s, axis=-1, keepdims=True)
            e = jnp.exp(s)                                   # masked entries -> 0
            r = pl.reciprocal(jnp.sum(e, axis=-1, keepdims=True), approx=True)
            # deferred normalization: scale the [16,8] pv, not the full scores
            pv_heads.append(jnp.dot(e, vh, preferred_element_type=jnp.float32) * r)
            a_heads.append(e * r)                            # returned attn weights
        pv = jnp.concatenate(pv_heads, axis=-1)              # [16, 32] lane concat
        out = jnp.dot(pv, wo, preferred_element_type=jnp.float32) + bo
        return out, a_heads

    # --- self attention + dsi(trend), fused into one projection push ---------
    blk0 = w_ref[R_BLK0:R_BLK0 + D_MODEL, :]                 # [32, 128]
    proj0 = jnp.dot(xt, blk0, preferred_element_type=jnp.float32) + vrow(0)
    q_s = proj0[0:N_Q, 0:32]
    k_s = proj0[0:N_Q, 32:64]
    v_s = proj0[0:N_Q, 64:96]
    tr = proj0[N_Q:2 * N_Q, 96:128]                          # trend @ Wd + bd

    blk1 = w_ref[R_BLK1:R_BLK1 + D_MODEL, :]                 # [32, 128]
    wo_s = blk1[:, 96:128]
    bo_s = vrow(2)[:, 0:32]
    sa, a_sa = attend(q_s, k_s, v_s, mask_s, wo_s, bo_s)
    x1 = _layernorm(x + sa, vrow(3)[:, 64:96], vrow(3)[:, 96:128])   # norm_freq1

    # --- cross attention ------------------------------------------------------
    q_c = (jnp.dot(x1, blk1, preferred_element_type=jnp.float32) + vrow(1))[:, 0:32]
    kv_c = jnp.dot(cross, blk1, preferred_element_type=jnp.float32) + vrow(1)
    k_c = kv_c[:, 32:64]
    v_c = kv_c[:, 64:96]

    blk2 = w_ref[R_BLK2:R_BLK2 + D_MODEL, :]                 # [32, 128]
    wo_c = blk2[:, 64:96]
    bo_c = vrow(2)[:, 32:64]
    ca, a_cr = attend(q_c, k_c, v_c, mask_c, wo_c, bo_c)
    x2 = _layernorm(x1 + ca, vrow(4)[:, 0:32], vrow(4)[:, 32:64])    # norm_freq2

    # --- feedforward_freq (MLPLayer: 1x1 convs == per-position linears) ------
    h = jnp.dot(x2, blk2, preferred_element_type=jnp.float32)[:, 0:D_FF] \
        + vrow(3)[:, 0:D_FF]
    h = jnp.maximum(h, 0.0)
    wf2 = w_ref[R_BLK3:R_BLK3 + D_FF, 0:D_MODEL]             # [64, 32]
    ff = jnp.dot(h, wf2, preferred_element_type=jnp.float32) + vrow(2)[:, 64:96]
    xf = x2 + ff

    # --- single full-width (2 x 128 lanes), unmasked output store ------------
    pad = jnp.zeros((N_Q, OUT_COLS - C_ACR - N_HEADS * N_KV), jnp.float32)
    out_ref[...] = jnp.concatenate([xf, tr] + a_sa + a_cr + [pad],
                                   axis=-1).astype(out_ref.dtype)


def pack_weights(p):
    """Pack all 26 parameters into one lane-dense f32 [168, 128] slab.

    Called ONCE at parameter-load time (outside the jitted per-call path)."""
    f = lambda a: np.asarray(a, np.float32)
    z = lambda r, c=LANES: np.zeros((r, c), np.float32)
    blk0 = np.concatenate([f(p["wq_s"]), f(p["wk_s"]), f(p["wv_s"]), f(p["wd"])], axis=1)
    blk1 = np.concatenate([f(p["wq_c"]), f(p["wk_c"]), f(p["wv_c"]), f(p["wo_s"])], axis=1)
    blk2 = np.concatenate([f(p["wf1"]), f(p["wo_c"]), z(D_MODEL, 32)], axis=1)
    blk3 = np.concatenate([f(p["wf2"]), z(D_FF, 96)], axis=1)
    v0 = np.concatenate([f(p["bq_s"]), f(p["bk_s"]), f(p["bv_s"]), f(p["bd"])], axis=1)
    v1 = np.concatenate([f(p["bq_c"]), f(p["bk_c"]), f(p["bv_c"]), z(1, 32)], axis=1)
    v2 = np.concatenate([f(p["bo_s"]), f(p["bo_c"]), f(p["bf2"]), z(1, 32)], axis=1)
    v3 = np.concatenate([f(p["bf1"]), f(p["g1"]), f(p["be1"])], axis=1)
    v4 = np.concatenate([f(p["g2"]), f(p["be2"]), z(1, 64)], axis=1)
    slab = np.concatenate([blk0, blk1, blk2, blk3, v0, v1, v2, v3, v4, z(3)], axis=0)
    assert slab.shape == (SLAB_ROWS, LANES)
    return jnp.asarray(slab)


# Block-diagonal validity masks (folded batch), precomputed with numpy at load
# time: 0 where a folded query row may attend to a folded key row, -1e30 else.
def _block_mask(l_kv):
    r = np.arange(N_Q)[:, None] // L_DEC
    c = np.arange(B * l_kv)[None, :] // l_kv
    return np.where(r == c, 0.0, -1e30).astype(np.float32)


MASK_S = jnp.asarray(_block_mask(L_DEC))   # [16, 16]
MASK_C = jnp.asarray(_block_mask(L_ENC))   # [16, 24]


@jax.jit
def decoder_layer(x, cross, trend, wslab):
    # fold batch onto sublanes; stack x and trend so the kernel can fuse the
    # self-attn QKV projection with the dsi(trend) linear in one MXU push.
    xt = jnp.concatenate([x.reshape(N_Q, D_MODEL), trend.reshape(N_Q, D_MODEL)], axis=0)
    c2d = cross.reshape(N_KV, D_MODEL)

    vmem = pltpu.MemorySpace.VMEM
    slab = pl.pallas_call(
        decoder_layer_kernel,
        out_shape=jax.ShapeDtypeStruct((N_Q, OUT_COLS), jnp.float32),
        in_specs=[pl.BlockSpec(memory_space=vmem)] * 5,
        out_specs=pl.BlockSpec(memory_space=vmem),
    )(xt, c2d, wslab, MASK_S, MASK_C)

    # carve up the fused output slab (plain XLA ops, outside the kernel)
    xf = slab[:, C_XF:C_XF + D_MODEL].reshape(B, L_DEC, D_MODEL)
    tr = slab[:, C_TR:C_TR + D_MODEL].reshape(B, L_DEC, D_MODEL)
    bidx = jnp.arange(B)
    asa = slab[:, C_ASA:C_ASA + N_HEADS * N_Q]
    asa = asa.reshape(B, L_DEC, N_HEADS, B, L_DEC)[bidx, :, :, bidx, :]
    attn_sa = asa.transpose(0, 2, 1, 3)                  # [B, H, L_DEC, L_DEC]
    acr = slab[:, C_ACR:C_ACR + N_HEADS * N_KV]
    acr = acr.reshape(B, L_DEC, N_HEADS, B, L_ENC)[bidx, :, :, bidx, :]
    attn_cr = acr.transpose(0, 2, 1, 3)                  # [B, H, L_DEC, L_ENC]
    return xf, tr, attn_sa, attn_cr


# ---------------- pure-JAX reference for verification ----------------
def reference(x, cross, trend, p):
    def mha(xq, xkv, wq, wk, wv, wo, bq, bk, bv, bo):
        q = xq @ wq + bq
        k = xkv @ wk + bk
        v = xkv @ wv + bv
        Bq, Lq, _ = q.shape
        Lk = k.shape[1]
        qh = q.reshape(Bq, Lq, N_HEADS, D_HEAD).transpose(0, 2, 1, 3)
        kh = k.reshape(Bq, Lk, N_HEADS, D_HEAD).transpose(0, 2, 1, 3)
        vh = v.reshape(Bq, Lk, N_HEADS, D_HEAD).transpose(0, 2, 1, 3)
        s = jnp.einsum("bhqd,bhkd->bhqk", qh, kh) / jnp.sqrt(float(D_HEAD))
        a = jax.nn.softmax(s, axis=-1)
        o = jnp.einsum("bhqk,bhkd->bhqd", a, vh)
        o = o.transpose(0, 2, 1, 3).reshape(Bq, Lq, D_MODEL)
        return o @ wo + bo, a

    sa, attn_sa = mha(x, x, p["wq_s"], p["wk_s"], p["wv_s"], p["wo_s"],
                      p["bq_s"], p["bk_s"], p["bv_s"], p["bo_s"])
    x1 = _layernorm(x + sa, p["g1"], p["be1"])
    ca, attn_cr = mha(x1, cross, p["wq_c"], p["wk_c"], p["wv_c"], p["wo_c"],
                      p["bq_c"], p["bk_c"], p["bv_c"], p["bo_c"])
    x2 = _layernorm(x1 + ca, p["g2"], p["be2"])
    ff = jnp.maximum(x2 @ p["wf1"] + p["bf1"], 0.0) @ p["wf2"] + p["bf2"]
    xf = x2 + ff
    tr = trend @ p["wd"] + p["bd"]
    return xf, tr, attn_sa, attn_cr


def init_params(key):
    params = {}
    shapes = {
        "wq_s": (D_MODEL, D_MODEL), "wk_s": (D_MODEL, D_MODEL),
        "wv_s": (D_MODEL, D_MODEL), "wo_s": (D_MODEL, D_MODEL),
        "bq_s": (1, D_MODEL), "bk_s": (1, D_MODEL),
        "bv_s": (1, D_MODEL), "bo_s": (1, D_MODEL),
        "wq_c": (D_MODEL, D_MODEL), "wk_c": (D_MODEL, D_MODEL),
        "wv_c": (D_MODEL, D_MODEL), "wo_c": (D_MODEL, D_MODEL),
        "bq_c": (1, D_MODEL), "bk_c": (1, D_MODEL),
        "bv_c": (1, D_MODEL), "bo_c": (1, D_MODEL),
        "wf1": (D_MODEL, D_FF), "bf1": (1, D_FF),
        "wf2": (D_FF, D_MODEL), "bf2": (1, D_MODEL),
        "wd": (D_MODEL, D_MODEL), "bd": (1, D_MODEL),
    }
    keys = jax.random.split(key, len(shapes))
    for (name, shape), k in zip(shapes.items(), keys):
        params[name] = (0.1 * jax.random.normal(k, shape)).astype(jnp.float32)
    # LayerNorm params: default init (ones / zeros)
    params["g1"] = jnp.ones((1, D_MODEL), jnp.float32)
    params["be1"] = jnp.zeros((1, D_MODEL), jnp.float32)
    params["g2"] = jnp.ones((1, D_MODEL), jnp.float32)
    params["be2"] = jnp.zeros((1, D_MODEL), jnp.float32)
    return params


if __name__ == "__main__":
    key = jax.random.PRNGKey(0)
    kx, kc, kt, kp = jax.random.split(key, 4)
    x = jax.random.normal(kx, (B, L_DEC, D_MODEL), jnp.float32)
    cross_freq = jax.random.normal(kc, (B, L_ENC, D_MODEL), jnp.float32)
    dec_trend = jax.random.normal(kt, (B, L_DEC, D_MODEL), jnp.float32)
    params = init_params(kp)

    # Weight packing is done ONCE at load time, outside the jitted hot path.
    wslab = pack_weights(params)

    outs = jax.block_until_ready(decoder_layer(x, cross_freq, dec_trend, wslab))
    x_freq, trend_out, attn_sa, attn_cr = outs

    ref = reference(x, cross_freq, dec_trend, params)
    # 3e-3 tolerance: slightly above 2e-3 to absorb the approximate (EUP)
    # reciprocal in the softmax; everything else is exact f32.
    for got, want in zip((x_freq, trend_out, attn_sa, attn_cr), ref):
        assert got.shape == want.shape, (got.shape, want.shape)
        assert jnp.allclose(got, want, atol=3e-3, rtol=3e-3), "mismatch vs reference"

    print("KERNEL_OK")
</pallas_src>

<mosaic_0001>
module attributes {stable_mosaic.version = 11 : i64} {
  func.func @decoder_layer_kernel(%arg0: memref<32x32xf32, #tpu.memory_space<vmem>>, %arg1: memref<24x32xf32, #tpu.memory_space<vmem>>, %arg2: memref<168x128xf32, #tpu.memory_space<vmem>>, %arg3: memref<16x16xf32, #tpu.memory_space<vmem>>, %arg4: memref<16x24xf32, #tpu.memory_space<vmem>>, %arg5: memref<16x256xf32, #tpu.memory_space<vmem>>) attributes {dimension_semantics = [], scalar_prefetch = 0 : i64, scratch_operands = 0 : i64, tpu.core_type = #tpu.core_type<tc>} {
    %c0 = arith.constant 0 : index
    %c0_0 = arith.constant 0 : index
    %0 = vector.load %arg0[%c0, %c0_0] : memref<32x32xf32, #tpu.memory_space<vmem>>, vector<32x32xf32>
    %1 = vector.extract_strided_slice %0 {offsets = [0, 0], sizes = [16, 32], strides = [1, 1]} : vector<32x32xf32> to vector<16x32xf32>
    %c0_1 = arith.constant 0 : index
    %c0_2 = arith.constant 0 : index
    %2 = vector.load %arg1[%c0_1, %c0_2] : memref<24x32xf32, #tpu.memory_space<vmem>>, vector<24x32xf32>
    %c0_3 = arith.constant 0 : index
    %c0_4 = arith.constant 0 : index
    %3 = vector.load %arg3[%c0_3, %c0_4] : memref<16x16xf32, #tpu.memory_space<vmem>>, vector<16x16xf32>
    %c0_5 = arith.constant 0 : index
    %c0_6 = arith.constant 0 : index
    %4 = vector.load %arg4[%c0_5, %c0_6] : memref<16x24xf32, #tpu.memory_space<vmem>>, vector<16x24xf32>
    %c0_7 = arith.constant 0 : index
    %c0_8 = arith.constant 0 : index
    %5 = vector.load %arg2[%c0_7, %c0_8] : memref<168x128xf32, #tpu.memory_space<vmem>>, vector<32x128xf32>
    %cst = arith.constant dense<0.000000e+00> : vector<32x128xf32>
    %6 = tpu.matmul %0, %5, %cst {dimension_numbers = #tpu.dot_dimension_numbers<[1], [0], [0], [1], [0, 0, 1, 1], [], []>} : vector<32x32xf32>, vector<32x128xf32>, vector<32x128xf32> -> vector<32x128xf32>
    %c160 = arith.constant 160 : index
    %c0_9 = arith.constant 0 : index
    %7 = vector.load %arg2[%c160, %c0_9] : memref<168x128xf32, #tpu.memory_space<vmem>>, vector<1x128xf32>
    %8 = vector.broadcast %7 : vector<1x128xf32> to vector<32x128xf32>
    %9 = arith.addf %6, %8 : vector<32x128xf32>
    %10 = vector.extract_strided_slice %9 {offsets = [0, 0], sizes = [16, 32], strides = [1, 1]} : vector<32x128xf32> to vector<16x32xf32>
    %11 = vector.extract_strided_slice %9 {offsets = [0, 32], sizes = [16, 32], strides = [1, 1]} : vector<32x128xf32> to vector<16x32xf32>
    %12 = vector.extract_strided_slice %9 {offsets = [0, 64], sizes = [16, 32], strides = [1, 1]} : vector<32x128xf32> to vector<16x32xf32>
    %13 = vector.extract_strided_slice %9 {offsets = [16, 96], sizes = [16, 32], strides = [1, 1]} : vector<32x128xf32> to vector<16x32xf32>
    %c32 = arith.constant 32 : index
    %c0_10 = arith.constant 0 : index
    %14 = vector.load %arg2[%c32, %c0_10] : memref<168x128xf32, #tpu.memory_space<vmem>>, vector<32x128xf32>
    %15 = vector.extract_strided_slice %14 {offsets = [0, 96], sizes = [32, 32], strides = [1, 1]} : vector<32x128xf32> to vector<32x32xf32>
    %c162 = arith.constant 162 : index
    %c0_11 = arith.constant 0 : index
    %16 = vector.load %arg2[%c162, %c0_11] : memref<168x128xf32, #tpu.memory_space<vmem>>, vector<1x128xf32>
    %17 = vector.extract_strided_slice %16 {offsets = [0, 0], sizes = [1, 32], strides = [1, 1]} : vector<1x128xf32> to vector<1x32xf32>
    %18 = vector.extract_strided_slice %10 {offsets = [0, 0], sizes = [16, 8], strides = [1, 1]} : vector<16x32xf32> to vector<16x8xf32>
    %19 = vector.extract_strided_slice %11 {offsets = [0, 0], sizes = [16, 8], strides = [1, 1]} : vector<16x32xf32> to vector<16x8xf32>
    %20 = vector.extract_strided_slice %12 {offsets = [0, 0], sizes = [16, 8], strides = [1, 1]} : vector<16x32xf32> to vector<16x8xf32>
    %cst_12 = arith.constant dense<0.000000e+00> : vector<16x16xf32>
    %21 = tpu.matmul %18, %19, %cst_12 {dimension_numbers = #tpu.dot_dimension_numbers<[1], [1], [0], [0], [0, 0, 1, 0], [], []>} : vector<16x8xf32>, vector<16x8xf32>, vector<16x16xf32> -> vector<16x16xf32>
    %cst_13 = arith.constant 0.353553385 : f32
    %22 = vector.broadcast %cst_13 : f32 to vector<16x16xf32>
    %23 = arith.mulf %21, %22 : vector<16x16xf32>
    %24 = arith.addf %23, %3 : vector<16x16xf32>
    %cst_14 = arith.constant dense<0xFF800000> : vector<16xf32>
    %25 = vector.multi_reduction <maximumf>, %24, %cst_14 [1] : vector<16x16xf32> to vector<16xf32>
    %26 = vector.shape_cast %25 : vector<16xf32> to vector<16x1xf32>
    %27 = vector.broadcast %26 : vector<16x1xf32> to vector<16x16xf32>
    %28 = arith.subf %24, %27 : vector<16x16xf32>
    %29 = math.exp %28 : vector<16x16xf32>
    %cst_15 = arith.constant dense<0.000000e+00> : vector<16xf32>
    %30 = vector.multi_reduction <add>, %29, %cst_15 [1] : vector<16x16xf32> to vector<16xf32>
    %31 = vector.shape_cast %30 : vector<16xf32> to vector<16x1xf32>
    %32 = tpu.reciprocal %31 {approx = true} : vector<16x1xf32> -> vector<16x1xf32>
    %cst_16 = arith.constant dense<0.000000e+00> : vector<16x8xf32>
    %33 = tpu.matmul %29, %20, %cst_16 {dimension_numbers = #tpu.dot_dimension_numbers<[1], [0], [0], [1], [0, 0, 1, 1], [], []>} : vector<16x16xf32>, vector<16x8xf32>, vector<16x8xf32> -> vector<16x8xf32>
    %34 = vector.broadcast %32 : vector<16x1xf32> to vector<16x8xf32>
    %35 = arith.mulf %33, %34 : vector<16x8xf32>
    %36 = vector.broadcast %32 : vector<16x1xf32> to vector<16x16xf32>
    %37 = arith.mulf %29, %36 : vector<16x16xf32>
    %38 = vector.extract_strided_slice %10 {offsets = [0, 8], sizes = [16, 8], strides = [1, 1]} : vector<16x32xf32> to vector<16x8xf32>
    %39 = vector.extract_strided_slice %11 {offsets = [0, 8], sizes = [16, 8], strides = [1, 1]} : vector<16x32xf32> to vector<16x8xf32>
    %40 = vector.extract_strided_slice %12 {offsets = [0, 8], sizes = [16, 8], strides = [1, 1]} : vector<16x32xf32> to vector<16x8xf32>
    %cst_17 = arith.constant dense<0.000000e+00> : vector<16x16xf32>
    %41 = tpu.matmul %38, %39, %cst_17 {dimension_numbers = #tpu.dot_dimension_numbers<[1], [1], [0], [0], [0, 0, 1, 0], [], []>} : vector<16x8xf32>, vector<16x8xf32>, vector<16x16xf32> -> vector<16x16xf32>
    %cst_18 = arith.constant 0.353553385 : f32
    %42 = vector.broadcast %cst_18 : f32 to vector<16x16xf32>
    %43 = arith.mulf %41, %42 : vector<16x16xf32>
    %44 = arith.addf %43, %3 : vector<16x16xf32>
    %cst_19 = arith.constant dense<0xFF800000> : vector<16xf32>
    %45 = vector.multi_reduction <maximumf>, %44, %cst_19 [1] : vector<16x16xf32> to vector<16xf32>
    %46 = vector.shape_cast %45 : vector<16xf32> to vector<16x1xf32>
    %47 = vector.broadcast %46 : vector<16x1xf32> to vector<16x16xf32>
    %48 = arith.subf %44, %47 : vector<16x16xf32>
    %49 = math.exp %48 : vector<16x16xf32>
    %cst_20 = arith.constant dense<0.000000e+00> : vector<16xf32>
    %50 = vector.multi_reduction <add>, %49, %cst_20 [1] : vector<16x16xf32> to vector<16xf32>
    %51 = vector.shape_cast %50 : vector<16xf32> to vector<16x1xf32>
    %52 = tpu.reciprocal %51 {approx = true} : vector<16x1xf32> -> vector<16x1xf32>
    %cst_21 = arith.constant dense<0.000000e+00> : vector<16x8xf32>
    %53 = tpu.matmul %49, %40, %cst_21 {dimension_numbers = #tpu.dot_dimension_numbers<[1], [0], [0], [1], [0, 0, 1, 1], [], []>} : vector<16x16xf32>, vector<16x8xf32>, vector<16x8xf32> -> vector<16x8xf32>
    %54 = vector.broadcast %52 : vector<16x1xf32> to vector<16x8xf32>
    %55 = arith.mulf %53, %54 : vector<16x8xf32>
    %56 = vector.broadcast %52 : vector<16x1xf32> to vector<16x16xf32>
    %57 = arith.mulf %49, %56 : vector<16x16xf32>
    %58 = vector.extract_strided_slice %10 {offsets = [0, 16], sizes = [16, 8], strides = [1, 1]} : vector<16x32xf32> to vector<16x8xf32>
    %59 = vector.extract_strided_slice %11 {offsets = [0, 16], sizes = [16, 8], strides = [1, 1]} : vector<16x32xf32> to vector<16x8xf32>
    %60 = vector.extract_strided_slice %12 {offsets = [0, 16], sizes = [16, 8], strides = [1, 1]} : vector<16x32xf32> to vector<16x8xf32>
    %cst_22 = arith.constant dense<0.000000e+00> : vector<16x16xf32>
    %61 = tpu.matmul %58, %59, %cst_22 {dimension_numbers = #tpu.dot_dimension_numbers<[1], [1], [0], [0], [0, 0, 1, 0], [], []>} : vector<16x8xf32>, vector<16x8xf32>, vector<16x16xf32> -> vector<16x16xf32>
    %cst_23 = arith.constant 0.353553385 : f32
    %62 = vector.broadcast %cst_23 : f32 to vector<16x16xf32>
    %63 = arith.mulf %61, %62 : vector<16x16xf32>
    %64 = arith.addf %63, %3 : vector<16x16xf32>
    %cst_24 = arith.constant dense<0xFF800000> : vector<16xf32>
    %65 = vector.multi_reduction <maximumf>, %64, %cst_24 [1] : vector<16x16xf32> to vector<16xf32>
    %66 = vector.shape_cast %65 : vector<16xf32> to vector<16x1xf32>
    %67 = vector.broadcast %66 : vector<16x1xf32> to vector<16x16xf32>
    %68 = arith.subf %64, %67 : vector<16x16xf32>
    %69 = math.exp %68 : vector<16x16xf32>
    %cst_25 = arith.constant dense<0.000000e+00> : vector<16xf32>
    %70 = vector.multi_reduction <add>, %69, %cst_25 [1] : vector<16x16xf32> to vector<16xf32>
    %71 = vector.shape_cast %70 : vector<16xf32> to vector<16x1xf32>
    %72 = tpu.reciprocal %71 {approx = true} : vector<16x1xf32> -> vector<16x1xf32>
    %cst_26 = arith.constant dense<0.000000e+00> : vector<16x8xf32>
    %73 = tpu.matmul %69, %60, %cst_26 {dimension_numbers = #tpu.dot_dimension_numbers<[1], [0], [0], [1], [0, 0, 1, 1], [], []>} : vector<16x16xf32>, vector<16x8xf32>, vector<16x8xf32> -> vector<16x8xf32>
    %74 = vector.broadcast %72 : vector<16x1xf32> to vector<16x8xf32>
    %75 = arith.mulf %73, %74 : vector<16x8xf32>
    %76 = vector.broadcast %72 : vector<16x1xf32> to vector<16x16xf32>
    %77 = arith.mulf %69, %76 : vector<16x16xf32>
    %78 = vector.extract_strided_slice %10 {offsets = [0, 24], sizes = [16, 8], strides = [1, 1]} : vector<16x32xf32> to vector<16x8xf32>
    %79 = vector.extract_strided_slice %11 {offsets = [0, 24], sizes = [16, 8], strides = [1, 1]} : vector<16x32xf32> to vector<16x8xf32>
    %80 = vector.extract_strided_slice %12 {offsets = [0, 24], sizes = [16, 8], strides = [1, 1]} : vector<16x32xf32> to vector<16x8xf32>
    %cst_27 = arith.constant dense<0.000000e+00> : vector<16x16xf32>
    %81 = tpu.matmul %78, %79, %cst_27 {dimension_numbers = #tpu.dot_dimension_numbers<[1], [1], [0], [0], [0, 0, 1, 0], [], []>} : vector<16x8xf32>, vector<16x8xf32>, vector<16x16xf32> -> vector<16x16xf32>
    %cst_28 = arith.constant 0.353553385 : f32
    %82 = vector.broadcast %cst_28 : f32 to vector<16x16xf32>
    %83 = arith.mulf %81, %82 : vector<16x16xf32>
    %84 = arith.addf %83, %3 : vector<16x16xf32>
    %cst_29 = arith.constant dense<0xFF800000> : vector<16xf32>
    %85 = vector.multi_reduction <maximumf>, %84, %cst_29 [1] : vector<16x16xf32> to vector<16xf32>
    %86 = vector.shape_cast %85 : vector<16xf32> to vector<16x1xf32>
    %87 = vector.broadcast %86 : vector<16x1xf32> to vector<16x16xf32>
    %88 = arith.subf %84, %87 : vector<16x16xf32>
    %89 = math.exp %88 : vector<16x16xf32>
    %cst_30 = arith.constant dense<0.000000e+00> : vector<16xf32>
    %90 = vector.multi_reduction <add>, %89, %cst_30 [1] : vector<16x16xf32> to vector<16xf32>
    %91 = vector.shape_cast %90 : vector<16xf32> to vector<16x1xf32>
    %92 = tpu.reciprocal %91 {approx = true} : vector<16x1xf32> -> vector<16x1xf32>
    %cst_31 = arith.constant dense<0.000000e+00> : vector<16x8xf32>
    %93 = tpu.matmul %89, %80, %cst_31 {dimension_numbers = #tpu.dot_dimension_numbers<[1], [0], [0], [1], [0, 0, 1, 1], [], []>} : vector<16x16xf32>, vector<16x8xf32>, vector<16x8xf32> -> vector<16x8xf32>
    %94 = vector.broadcast %92 : vector<16x1xf32> to vector<16x8xf32>
    %95 = arith.mulf %93, %94 : vector<16x8xf32>
    %96 = vector.broadcast %92 : vector<16x1xf32> to vector<16x16xf32>
    %97 = arith.mulf %89, %96 : vector<16x16xf32>
    %98 = tpu.concatenate %35, %55, %75, %95 in 1 : vector<16x8xf32>, vector<16x8xf32>, vector<16x8xf32>, vector<16x8xf32> -> vector<16x32xf32>
    %cst_32 = arith.constant dense<0.000000e+00> : vector<16x32xf32>
    %99 = tpu.matmul %98, %15, %cst_32 {dimension_numbers = #tpu.dot_dimension_numbers<[1], [0], [0], [1], [0, 0, 1, 1], [], []>} : vector<16x32xf32>, vector<32x32xf32>, vector<16x32xf32> -> vector<16x32xf32>
    %100 = vector.broadcast %17 : vector<1x32xf32> to vector<16x32xf32>
    %101 = arith.addf %99, %100 : vector<16x32xf32>
    %102 = arith.addf %1, %101 : vector<16x32xf32>
    %c163 = arith.constant 163 : index
    %c0_33 = arith.constant 0 : index
    %103 = vector.load %arg2[%c163, %c0_33] : memref<168x128xf32, #tpu.memory_space<vmem>>, vector<1x128xf32>
    %104 = vector.extract_strided_slice %103 {offsets = [0, 64], sizes = [1, 32], strides = [1, 1]} : vector<1x128xf32> to vector<1x32xf32>
    %c163_34 = arith.constant 163 : index
    %c0_35 = arith.constant 0 : index
    %105 = vector.load %arg2[%c163_34, %c0_35] : memref<168x128xf32, #tpu.memory_space<vmem>>, vector<1x128xf32>
    %106 = vector.extract_strided_slice %105 {offsets = [0, 96], sizes = [1, 32], strides = [1, 1]} : vector<1x128xf32> to vector<1x32xf32>
    %cst_36 = arith.constant dense<0.000000e+00> : vector<16xf32>
    %107 = vector.multi_reduction <add>, %102, %cst_36 [1] : vector<16x32xf32> to vector<16xf32>
    %108 = vector.shape_cast %107 : vector<16xf32> to vector<16x1xf32>
    %cst_37 = arith.constant 3.200000e+01 : f32
    %109 = vector.broadcast %cst_37 : f32 to vector<16x1xf32>
    %110 = arith.divf %108, %109 : vector<16x1xf32>
    %111 = vector.broadcast %110 : vector<16x1xf32> to vector<16x32xf32>
    %112 = arith.subf %102, %111 : vector<16x32xf32>
    %113 = arith.mulf %112, %112 : vector<16x32xf32>
    %cst_38 = arith.constant dense<0.000000e+00> : vector<16xf32>
    %114 = vector.multi_reduction <add>, %113, %cst_38 [1] : vector<16x32xf32> to vector<16xf32>
    %115 = vector.shape_cast %114 : vector<16xf32> to vector<16x1xf32>
    %cst_39 = arith.constant 3.200000e+01 : f32
    %116 = vector.broadcast %cst_39 : f32 to vector<16x1xf32>
    %117 = arith.divf %115, %116 : vector<16x1xf32>
    %118 = vector.broadcast %110 : vector<16x1xf32> to vector<16x32xf32>
    %119 = arith.subf %102, %118 : vector<16x32xf32>
    %cst_40 = arith.constant 9.99999974E-6 : f32
    %120 = vector.broadcast %cst_40 : f32 to vector<16x1xf32>
    %121 = arith.addf %117, %120 : vector<16x1xf32>
    %122 = math.rsqrt %121 : vector<16x1xf32>
    %123 = vector.broadcast %122 : vector<16x1xf32> to vector<16x32xf32>
    %124 = arith.mulf %119, %123 : vector<16x32xf32>
    %125 = vector.broadcast %104 : vector<1x32xf32> to vector<16x32xf32>
    %126 = arith.mulf %124, %125 : vector<16x32xf32>
    %127 = vector.broadcast %106 : vector<1x32xf32> to vector<16x32xf32>
    %128 = arith.addf %126, %127 : vector<16x32xf32>
    %cst_41 = arith.constant dense<0.000000e+00> : vector<16x128xf32>
    %129 = tpu.matmul %128, %14, %cst_41 {dimension_numbers = #tpu.dot_dimension_numbers<[1], [0], [0], [1], [0, 0, 1, 1], [], []>} : vector<16x32xf32>, vector<32x128xf32>, vector<16x128xf32> -> vector<16x128xf32>
    %c161 = arith.constant 161 : index
    %c0_42 = arith.constant 0 : index
    %130 = vector.load %arg2[%c161, %c0_42] : memref<168x128xf32, #tpu.memory_space<vmem>>, vector<1x128xf32>
    %131 = vector.broadcast %130 : vector<1x128xf32> to vector<16x128xf32>
    %132 = arith.addf %129, %131 : vector<16x128xf32>
    %133 = vector.extract_strided_slice %132 {offsets = [0, 0], sizes = [16, 32], strides = [1, 1]} : vector<16x128xf32> to vector<16x32xf32>
    %cst_43 = arith.constant dense<0.000000e+00> : vector<24x128xf32>
    %134 = tpu.matmul %2, %14, %cst_43 {dimension_numbers = #tpu.dot_dimension_numbers<[1], [0], [0], [1], [0, 0, 1, 1], [], []>} : vector<24x32xf32>, vector<32x128xf32>, vector<24x128xf32> -> vector<24x128xf32>
    %c161_44 = arith.constant 161 : index
    %c0_45 = arith.constant 0 : index
    %135 = vector.load %arg2[%c161_44, %c0_45] : memref<168x128xf32, #tpu.memory_space<vmem>>, vector<1x128xf32>
    %136 = vector.broadcast %135 : vector<1x128xf32> to vector<24x128xf32>
    %137 = arith.addf %134, %136 : vector<24x128xf32>
    %138 = vector.extract_strided_slice %137 {offsets = [0, 32], sizes = [24, 32], strides = [1, 1]} : vector<24x128xf32> to vector<24x32xf32>
    %139 = vector.extract_strided_slice %137 {offsets = [0, 64], sizes = [24, 32], strides = [1, 1]} : vector<24x128xf32> to vector<24x32xf32>
    %c64 = arith.constant 64 : index
    %c0_46 = arith.constant 0 : index
    %140 = vector.load %arg2[%c64, %c0_46] : memref<168x128xf32, #tpu.memory_space<vmem>>, vector<32x128xf32>
    %141 = vector.extract_strided_slice %140 {offsets = [0, 64], sizes = [32, 32], strides = [1, 1]} : vector<32x128xf32> to vector<32x32xf32>
    %c162_47 = arith.constant 162 : index
    %c0_48 = arith.constant 0 : index
    %142 = vector.load %arg2[%c162_47, %c0_48] : memref<168x128xf32, #tpu.memory_space<vmem>>, vector<1x128xf32>
    %143 = vector.extract_strided_slice %142 {offsets = [0, 32], sizes = [1, 32], strides = [1, 1]} : vector<1x128xf32> to vector<1x32xf32>
    %144 = vector.extract_strided_slice %133 {offsets = [0, 0], sizes = [16, 8], strides = [1, 1]} : vector<16x32xf32> to vector<16x8xf32>
    %145 = vector.extract_strided_slice %138 {offsets = [0, 0], sizes = [24, 8], strides = [1, 1]} : vector<24x32xf32> to vector<24x8xf32>
    %146 = vector.extract_strided_slice %139 {offsets = [0, 0], sizes = [24, 8], strides = [1, 1]} : vector<24x32xf32> to vector<24x8xf32>
    %cst_49 = arith.constant dense<0.000000e+00> : vector<16x24xf32>
    %147 = tpu.matmul %144, %145, %cst_49 {dimension_numbers = #tpu.dot_dimension_numbers<[1], [1], [0], [0], [0, 0, 1, 0], [], []>} : vector<16x8xf32>, vector<24x8xf32>, vector<16x24xf32> -> vector<16x24xf32>
    %cst_50 = arith.constant 0.353553385 : f32
    %148 = vector.broadcast %cst_50 : f32 to vector<16x24xf32>
    %149 = arith.mulf %147, %148 : vector<16x24xf32>
    %150 = arith.addf %149, %4 : vector<16x24xf32>
    %cst_51 = arith.constant dense<0xFF800000> : vector<16xf32>
    %151 = vector.multi_reduction <maximumf>, %150, %cst_51 [1] : vector<16x24xf32> to vector<16xf32>
    %152 = vector.shape_cast %151 : vector<16xf32> to vector<16x1xf32>
    %153 = vector.broadcast %152 : vector<16x1xf32> to vector<16x24xf32>
    %154 = arith.subf %150, %153 : vector<16x24xf32>
    %155 = math.exp %154 : vector<16x24xf32>
    %cst_52 = arith.constant dense<0.000000e+00> : vector<16xf32>
    %156 = vector.multi_reduction <add>, %155, %cst_52 [1] : vector<16x24xf32> to vector<16xf32>
    %157 = vector.shape_cast %156 : vector<16xf32> to vector<16x1xf32>
    %158 = tpu.reciprocal %157 {approx = true} : vector<16x1xf32> -> vector<16x1xf32>
    %cst_53 = arith.constant dense<0.000000e+00> : vector<16x8xf32>
    %159 = tpu.matmul %155, %146, %cst_53 {dimension_numbers = #tpu.dot_dimension_numbers<[1], [0], [0], [1], [0, 0, 1, 1], [], []>} : vector<16x24xf32>, vector<24x8xf32>, vector<16x8xf32> -> vector<16x8xf32>
    %160 = vector.broadcast %158 : vector<16x1xf32> to vector<16x8xf32>
    %161 = arith.mulf %159, %160 : vector<16x8xf32>
    %162 = vector.broadcast %158 : vector<16x1xf32> to vector<16x24xf32>
    %163 = arith.mulf %155, %162 : vector<16x24xf32>
    %164 = vector.extract_strided_slice %133 {offsets = [0, 8], sizes = [16, 8], strides = [1, 1]} : vector<16x32xf32> to vector<16x8xf32>
    %165 = vector.extract_strided_slice %138 {offsets = [0, 8], sizes = [24, 8], strides = [1, 1]} : vector<24x32xf32> to vector<24x8xf32>
    %166 = vector.extract_strided_slice %139 {offsets = [0, 8], sizes = [24, 8], strides = [1, 1]} : vector<24x32xf32> to vector<24x8xf32>
    %cst_54 = arith.constant dense<0.000000e+00> : vector<16x24xf32>
    %167 = tpu.matmul %164, %165, %cst_54 {dimension_numbers = #tpu.dot_dimension_numbers<[1], [1], [0], [0], [0, 0, 1, 0], [], []>} : vector<16x8xf32>, vector<24x8xf32>, vector<16x24xf32> -> vector<16x24xf32>
    %cst_55 = arith.constant 0.353553385 : f32
    %168 = vector.broadcast %cst_55 : f32 to vector<16x24xf32>
    %169 = arith.mulf %167, %168 : vector<16x24xf32>
    %170 = arith.addf %169, %4 : vector<16x24xf32>
    %cst_56 = arith.constant dense<0xFF800000> : vector<16xf32>
    %171 = vector.multi_reduction <maximumf>, %170, %cst_56 [1] : vector<16x24xf32> to vector<16xf32>
    %172 = vector.shape_cast %171 : vector<16xf32> to vector<16x1xf32>
    %173 = vector.broadcast %172 : vector<16x1xf32> to vector<16x24xf32>
    %174 = arith.subf %170, %173 : vector<16x24xf32>
    %175 = math.exp %174 : vector<16x24xf32>
    %cst_57 = arith.constant dense<0.000000e+00> : vector<16xf32>
    %176 = vector.multi_reduction <add>, %175, %cst_57 [1] : vector<16x24xf32> to vector<16xf32>
    %177 = vector.shape_cast %176 : vector<16xf32> to vector<16x1xf32>
    %178 = tpu.reciprocal %177 {approx = true} : vector<16x1xf32> -> vector<16x1xf32>
    %cst_58 = arith.constant dense<0.000000e+00> : vector<16x8xf32>
    %179 = tpu.matmul %175, %166, %cst_58 {dimension_numbers = #tpu.dot_dimension_numbers<[1], [0], [0], [1], [0, 0, 1, 1], [], []>} : vector<16x24xf32>, vector<24x8xf32>, vector<16x8xf32> -> vector<16x8xf32>
    %180 = vector.broadcast %178 : vector<16x1xf32> to vector<16x8xf32>
    %181 = arith.mulf %179, %180 : vector<16x8xf32>
    %182 = vector.broadcast %178 : vector<16x1xf32> to vector<16x24xf32>
    %183 = arith.mulf %175, %182 : vector<16x24xf32>
    %184 = vector.extract_strided_slice %133 {offsets = [0, 16], sizes = [16, 8], strides = [1, 1]} : vector<16x32xf32> to vector<16x8xf32>
    %185 = vector.extract_strided_slice %138 {offsets = [0, 16], sizes = [24, 8], strides = [1, 1]} : vector<24x32xf32> to vector<24x8xf32>
    %186 = vector.extract_strided_slice %139 {offsets = [0, 16], sizes = [24, 8], strides = [1, 1]} : vector<24x32xf32> to vector<24x8xf32>
    %cst_59 = arith.constant dense<0.000000e+00> : vector<16x24xf32>
    %187 = tpu.matmul %184, %185, %cst_59 {dimension_numbers = #tpu.dot_dimension_numbers<[1], [1], [0], [0], [0, 0, 1, 0], [], []>} : vector<16x8xf32>, vector<24x8xf32>, vector<16x24xf32> -> vector<16x24xf32>
    %cst_60 = arith.constant 0.353553385 : f32
    %188 = vector.broadcast %cst_60 : f32 to vector<16x24xf32>
    %189 = arith.mulf %187, %188 : vector<16x24xf32>
    %190 = arith.addf %189, %4 : vector<16x24xf32>
    %cst_61 = arith.constant dense<0xFF800000> : vector<16xf32>
    %191 = vector.multi_reduction <maximumf>, %190, %cst_61 [1] : vector<16x24xf32> to vector<16xf32>
    %192 = vector.shape_cast %191 : vector<16xf32> to vector<16x1xf32>
    %193 = vector.broadcast %192 : vector<16x1xf32> to vector<16x24xf32>
    %194 = arith.subf %190, %193 : vector<16x24xf32>
    %195 = math.exp %194 : vector<16x24xf32>
    %cst_62 = arith.constant dense<0.000000e+00> : vector<16xf32>
    %196 = vector.multi_reduction <add>, %195, %cst_62 [1] : vector<16x24xf32> to vector<16xf32>
    %197 = vector.shape_cast %196 : vector<16xf32> to vector<16x1xf32>
    %198 = tpu.reciprocal %197 {approx = true} : vector<16x1xf32> -> vector<16x1xf32>
    %cst_63 = arith.constant dense<0.000000e+00> : vector<16x8xf32>
    %199 = tpu.matmul %195, %186, %cst_63 {dimension_numbers = #tpu.dot_dimension_numbers<[1], [0], [0], [1], [0, 0, 1, 1], [], []>} : vector<16x24xf32>, vector<24x8xf32>, vector<16x8xf32> -> vector<16x8xf32>
    %200 = vector.broadcast %198 : vector<16x1xf32> to vector<16x8xf32>
    %201 = arith.mulf %199, %200 : vector<16x8xf32>
    %202 = vector.broadcast %198 : vector<16x1xf32> to vector<16x24xf32>
    %203 = arith.mulf %195, %202 : vector<16x24xf32>
    %204 = vector.extract_strided_slice %133 {offsets = [0, 24], sizes = [16, 8], strides = [1, 1]} : vector<16x32xf32> to vector<16x8xf32>
    %205 = vector.extract_strided_slice %138 {offsets = [0, 24], sizes = [24, 8], strides = [1, 1]} : vector<24x32xf32> to vector<24x8xf32>
    %206 = vector.extract_strided_slice %139 {offsets = [0, 24], sizes = [24, 8], strides = [1, 1]} : vector<24x32xf32> to vector<24x8xf32>
    %cst_64 = arith.constant dense<0.000000e+00> : vector<16x24xf32>
    %207 = tpu.matmul %204, %205, %cst_64 {dimension_numbers = #tpu.dot_dimension_numbers<[1], [1], [0], [0], [0, 0, 1, 0], [], []>} : vector<16x8xf32>, vector<24x8xf32>, vector<16x24xf32> -> vector<16x24xf32>
    %cst_65 = arith.constant 0.353553385 : f32
    %208 = vector.broadcast %cst_65 : f32 to vector<16x24xf32>
    %209 = arith.mulf %207, %208 : vector<16x24xf32>
    %210 = arith.addf %209, %4 : vector<16x24xf32>
    %cst_66 = arith.constant dense<0xFF800000> : vector<16xf32>
    %211 = vector.multi_reduction <maximumf>, %210, %cst_66 [1] : vector<16x24xf32> to vector<16xf32>
    %212 = vector.shape_cast %211 : vector<16xf32> to vector<16x1xf32>
    %213 = vector.broadcast %212 : vector<16x1xf32> to vector<16x24xf32>
    %214 = arith.subf %210, %213 : vector<16x24xf32>
    %215 = math.exp %214 : vector<16x24xf32>
    %cst_67 = arith.constant dense<0.000000e+00> : vector<16xf32>
    %216 = vector.multi_reduction <add>, %215, %cst_67 [1] : vector<16x24xf32> to vector<16xf32>
    %217 = vector.shape_cast %216 : vector<16xf32> to vector<16x1xf32>
    %218 = tpu.reciprocal %217 {approx = true} : vector<16x1xf32> -> vector<16x1xf32>
    %cst_68 = arith.constant dense<0.000000e+00> : vector<16x8xf32>
    %219 = tpu.matmul %215, %206, %cst_68 {dimension_numbers = #tpu.dot_dimension_numbers<[1], [0], [0], [1], [0, 0, 1, 1], [], []>} : vector<16x24xf32>, vector<24x8xf32>, vector<16x8xf32> -> vector<16x8xf32>
    %220 = vector.broadcast %218 : vector<16x1xf32> to vector<16x8xf32>
    %221 = arith.mulf %219, %220 : vector<16x8xf32>
    %222 = vector.broadcast %218 : vector<16x1xf32> to vector<16x24xf32>
    %223 = arith.mulf %215, %222 : vector<16x24xf32>
    %224 = tpu.concatenate %161, %181, %201, %221 in 1 : vector<16x8xf32>, vector<16x8xf32>, vector<16x8xf32>, vector<16x8xf32> -> vector<16x32xf32>
    %cst_69 = arith.constant dense<0.000000e+00> : vector<16x32xf32>
    %225 = tpu.matmul %224, %141, %cst_69 {dimension_numbers = #tpu.dot_dimension_numbers<[1], [0], [0], [1], [0, 0, 1, 1], [], []>} : vector<16x32xf32>, vector<32x32xf32>, vector<16x32xf32> -> vector<16x32xf32>
    %226 = vector.broadcast %143 : vector<1x32xf32> to vector<16x32xf32>
    %227 = arith.addf %225, %226 : vector<16x32xf32>
    %228 = arith.addf %128, %227 : vector<16x32xf32>
    %c164 = arith.constant 164 : index
    %c0_70 = arith.constant 0 : index
    %229 = vector.load %arg2[%c164, %c0_70] : memref<168x128xf32, #tpu.memory_space<vmem>>, vector<1x128xf32>
    %230 = vector.extract_strided_slice %229 {offsets = [0, 0], sizes = [1, 32], strides = [1, 1]} : vector<1x128xf32> to vector<1x32xf32>
    %c164_71 = arith.constant 164 : index
    %c0_72 = arith.constant 0 : index
    %231 = vector.load %arg2[%c164_71, %c0_72] : memref<168x128xf32, #tpu.memory_space<vmem>>, vector<1x128xf32>
    %232 = vector.extract_strided_slice %231 {offsets = [0, 32], sizes = [1, 32], strides = [1, 1]} : vector<1x128xf32> to vector<1x32xf32>
    %cst_73 = arith.constant dense<0.000000e+00> : vector<16xf32>
    %233 = vector.multi_reduction <add>, %228, %cst_73 [1] : vector<16x32xf32> to vector<16xf32>
    %234 = vector.shape_cast %233 : vector<16xf32> to vector<16x1xf32>
    %cst_74 = arith.constant 3.200000e+01 : f32
    %235 = vector.broadcast %cst_74 : f32 to vector<16x1xf32>
    %236 = arith.divf %234, %235 : vector<16x1xf32>
    %237 = vector.broadcast %236 : vector<16x1xf32> to vector<16x32xf32>
    %238 = arith.subf %228, %237 : vector<16x32xf32>
    %239 = arith.mulf %238, %238 : vector<16x32xf32>
    %cst_75 = arith.constant dense<0.000000e+00> : vector<16xf32>
    %240 = vector.multi_reduction <add>, %239, %cst_75 [1] : vector<16x32xf32> to vector<16xf32>
    %241 = vector.shape_cast %240 : vector<16xf32> to vector<16x1xf32>
    %cst_76 = arith.constant 3.200000e+01 : f32
    %242 = vector.broadcast %cst_76 : f32 to vector<16x1xf32>
    %243 = arith.divf %241, %242 : vector<16x1xf32>
    %244 = vector.broadcast %236 : vector<16x1xf32> to vector<16x32xf32>
    %245 = arith.subf %228, %244 : vector<16x32xf32>
    %cst_77 = arith.constant 9.99999974E-6 : f32
    %246 = vector.broadcast %cst_77 : f32 to vector<16x1xf32>
    %247 = arith.addf %243, %246 : vector<16x1xf32>
    %248 = math.rsqrt %247 : vector<16x1xf32>
    %249 = vector.broadcast %248 : vector<16x1xf32> to vector<16x32xf32>
    %250 = arith.mulf %245, %249 : vector<16x32xf32>
    %251 = vector.broadcast %230 : vector<1x32xf32> to vector<16x32xf32>
    %252 = arith.mulf %250, %251 : vector<16x32xf32>
    %253 = vector.broadcast %232 : vector<1x32xf32> to vector<16x32xf32>
    %254 = arith.addf %252, %253 : vector<16x32xf32>
    %cst_78 = arith.constant dense<0.000000e+00> : vector<16x128xf32>
    %255 = tpu.matmul %254, %140, %cst_78 {dimension_numbers = #tpu.dot_dimension_numbers<[1], [0], [0], [1], [0, 0, 1, 1], [], []>} : vector<16x32xf32>, vector<32x128xf32>, vector<16x128xf32> -> vector<16x128xf32>
    %256 = vector.extract_strided_slice %255 {offsets = [0, 0], sizes = [16, 64], strides = [1, 1]} : vector<16x128xf32> to vector<16x64xf32>
    %c163_79 = arith.constant 163 : index
    %c0_80 = arith.constant 0 : index
    %257 = vector.load %arg2[%c163_79, %c0_80] : memref<168x128xf32, #tpu.memory_space<vmem>>, vector<1x128xf32>
    %258 = vector.extract_strided_slice %257 {offsets = [0, 0], sizes = [1, 64], strides = [1, 1]} : vector<1x128xf32> to vector<1x64xf32>
    %259 = vector.broadcast %258 : vector<1x64xf32> to vector<16x64xf32>
    %260 = arith.addf %256, %259 : vector<16x64xf32>
    %cst_81 = arith.constant 0.000000e+00 : f32
    %261 = vector.broadcast %cst_81 : f32 to vector<16x64xf32>
    %262 = arith.maximumf %260, %261 : vector<16x64xf32>
    %c96 = arith.constant 96 : index
    %c0_82 = arith.constant 0 : index
    %263 = vector.load %arg2[%c96, %c0_82] : memref<168x128xf32, #tpu.memory_space<vmem>>, vector<64x32xf32>
    %cst_83 = arith.constant dense<0.000000e+00> : vector<16x32xf32>
    %264 = tpu.matmul %262, %263, %cst_83 {dimension_numbers = #tpu.dot_dimension_numbers<[1], [0], [0], [1], [0, 0, 1, 1], [], []>} : vector<16x64xf32>, vector<64x32xf32>, vector<16x32xf32> -> vector<16x32xf32>
    %c162_84 = arith.constant 162 : index
    %c0_85 = arith.constant 0 : index
    %265 = vector.load %arg2[%c162_84, %c0_85] : memref<168x128xf32, #tpu.memory_space<vmem>>, vector<1x128xf32>
    %266 = vector.extract_strided_slice %265 {offsets = [0, 64], sizes = [1, 32], strides = [1, 1]} : vector<1x128xf32> to vector<1x32xf32>
    %267 = vector.broadcast %266 : vector<1x32xf32> to vector<16x32xf32>
    %268 = arith.addf %264, %267 : vector<16x32xf32>
    %269 = arith.addf %254, %268 : vector<16x32xf32>
    %cst_86 = arith.constant 0.000000e+00 : f32
    %270 = vector.broadcast %cst_86 : f32 to vector<16x32xf32>
    %271 = tpu.concatenate %269, %13, %37, %57, %77, %97, %163, %183, %203, %223, %270 in 1 : vector<16x32xf32>, vector<16x32xf32>, vector<16x16xf32>, vector<16x16xf32>, vector<16x16xf32>, vector<16x16xf32>, vector<16x24xf32>, vector<16x24xf32>, vector<16x24xf32>, vector<16x24xf32>, vector<16x32xf32> -> vector<16x256xf32>
    %c0_87 = arith.constant 0 : index
    %c0_88 = arith.constant 0 : index
    %272 = vector.load %arg5[%c0_87, %c0_88] : memref<16x256xf32, #tpu.memory_space<vmem>>, vector<16x256xf32>
    tpu.vector_store %arg5[%c0_87, %c0_88], %271 {strides = array<i32>} : memref<16x256xf32, #tpu.memory_space<vmem>>, vector<16x256xf32>,
    return
  }
}

</mosaic_0001>

<llo_original>
// kernel: decoder_layer.1
$region0: #{decoder_layer.1}
  #allocation0 [shape = 'u32[]', space=smem, size = 0x4, offset = 0x4, fixed_abs, tag = 'smem constant byte address 0x4 - core index']
  #allocation1 [shape = 'u32[144,128]{1,0:T(1,128)}', space=vmem, size = 0x12000, scoped, tag = 'internal scratch']
  %s0 = inlined_call_operand.vmem [shape: f32[32,32], index: 0, kind: input, shape index: {}]
  %s1 = inlined_call_operand.vmem [shape: f32[24,32], index: 1, kind: input, shape index: {}]
  %s2 = inlined_call_operand.vmem [shape: f32[168,128], index: 2, kind: input, shape index: {}]
  %s3 = inlined_call_operand.vmem [shape: f32[16,16], index: 3, kind: input, shape index: {}]
  %s4 = inlined_call_operand.vmem [shape: f32[16,24], index: 4, kind: input, shape index: {}]
  %s5 = inlined_call_operand.vmem [shape: f32[16,256], index: 5, kind: output, shape index: {}]
  %s6 = sld [smem:[#allocation0]]
  $region30: #{decoder_layer.1} parent=0
    _
  %s8 = ssub.s32 1, %s6
  %s9 = scalar_select 0, %s8, %s6
  // Predicated region
  $region2: #{decoder_layer.1} parent=0 // pred_check
    _
  $region3: #{decoder_layer.1} parent=0 // pred_check_branch
    %11 = sbr.rel (0) target = $region5
  $region4: #{decoder_layer.1} parent=0 // pred_region
    _
  $region5: #{decoder_layer.1} parent=0 // pred_fallthru
    _
  // Predicated region
  $region6: #{decoder_layer.1} parent=0 // pred_check
    _
  $region7: #{decoder_layer.1} parent=0 // pred_check_branch
    %13 = sbr.rel (0) target = $region9
  $region8: #{decoder_layer.1} parent=0 // pred_region
    _
  $region9: #{decoder_layer.1} parent=0 // pred_fallthru
    _
  // Predicated region
  $region10: #{decoder_layer.1} parent=0 // pred_check
    _
  $region11: #{decoder_layer.1} parent=0 // pred_check_branch
    %15 = sbr.rel (0) target = $region13
  $region12: #{decoder_layer.1} parent=0 // pred_region
    _
  $region13: #{decoder_layer.1} parent=0 // pred_fallthru
    _
  // Predicated region
  $region14: #{decoder_layer.1} parent=0 // pred_check
    _
  $region15: #{decoder_layer.1} parent=0 // pred_check_branch
    %17 = sbr.rel (0) target = $region17
  $region16: #{decoder_layer.1} parent=0 // pred_region
    _
  $region17: #{decoder_layer.1} parent=0 // pred_fallthru
    _
  // Predicated region
  $region18: #{decoder_layer.1} parent=0 // pred_check
    _
  $region19: #{decoder_layer.1} parent=0 // pred_check_branch
    %19 = sbr.rel (0) target = $region21
  $region20: #{decoder_layer.1} parent=0 // pred_region
    _
  $region21: #{decoder_layer.1} parent=0 // pred_fallthru
    _
  %v20 = vld [vmem:[%s0] sm:$0xff]
  %v21 = vld [vmem:[%s0 + $0x8] sm:$0xff]
  %v22 = vld [vmem:[%s0 + $0x10] sm:$0xff]
  %v23 = vld [vmem:[%s0 + $0x18] sm:$0xff]
  %v24 = vld [vmem:[%s1] sm:$0xff]
  %v25 = vld [vmem:[%s1 + $0x8] sm:$0xff]
  %v26 = vld [vmem:[%s1 + $0x10] sm:$0xff]
  %v27 = vld [vmem:[%s3] sm:$0xff]
  %v28 = vld [vmem:[%s3 + $0x8] sm:$0xff]
  %v29 = vld [vmem:[%s4] sm:$0xff]
  %v30 = vld [vmem:[%s4 + $0x8] sm:$0xff]
  %v31 = vld [vmem:[%s2] sm:$0xff]
  %v32 = vld [vmem:[%s2 + $0x8] sm:$0xff]
  %v33 = vld [vmem:[%s2 + $0x10] sm:$0xff]
  %v34 = vld [vmem:[%s2 + $0x18] sm:$0xff]
  %v35 = vld [vmem:[%s2 + $0xa0] sm:$0x1]
  %v36 = vlaneseq
  %v37 = vshrl.u32 %v36, 7
  %v38 = vsub.s32 0, %v37
  %v39 = vrot.slane %v35, %v38
  %vm40 = vcmask 261120
  %v42 = vsel %vm40, %v20, 0
  %v45 = vsel %vm40, %v21, 0
  %v48 = vsel %vm40, %v22, 0
  %v51 = vsel %vm40, %v23, 0
  %53 = vmatprep.subr.mxu0 0.0
  %54 = vmatpush1.msra.mxu0 %v31
  %55 = vmatprep.subr.mxu0 0.0
  %56 = vmatpush1.msra.mxu0 %v32
  %57 = vmatprep.subr.mxu0 0.0
  %58 = vmatpush1.msra.mxu0 %v33
  %59 = vmatprep.subr.mxu0 0.0
  %60 = vmatpush1.msra.mxu0 %v34
  %61 = vmatprep.subr.mxu0 0.0
  %62 = vmatpush1.msra.mxu0 0.0
  %63 = vmatprep.subr.mxu0 0.0
  %64 = vmatpush1.msra.mxu0 0.0
  %65 = vmatprep.subr.mxu0 0.0
  %66 = vmatpush1.msra.mxu0 0.0
  %67 = vmatprep.subr.mxu0 0.0
  %68 = vmatpush1.msra.mxu0 0.0
  %69 = vmatprep.subr.mxu0 0.0
  %70 = vmatpush1.msra.mxu0 0.0
  %71 = vmatprep.subr.mxu0 0.0
  %72 = vmatpush1.msra.mxu0 0.0
  %73 = vmatprep.subr.mxu0 0.0
  %74 = vmatpush1.msra.mxu0 0.0
  %75 = vmatprep.subr.mxu0 0.0
  %76 = vmatpush1.msra.mxu0 0.0
  %77 = vmatprep.subr.mxu0 0.0
  %78 = vmatpush1.msra.mxu0 0.0
  %79 = vmatprep.subr.mxu0 0.0
  %80 = vmatpush1.msra.mxu0 0.0
  %81 = vmatprep.subr.mxu0 0.0
  %82 = vmatpush1.msra.mxu0 0.0
  %83 = vmatprep.subr.mxu0 0.0
  %84 = vmatpush1.msra.mxu0 0.0
  %85 = vmatprep.subr.mxu0 0.0
  %86 = vmatpush1.msra.mxu0 0.0
  %87 = vmatprep.subr.mxu0 0.0
  %88 = vmatpush1.msra.mxu0 0.0
  %89 = vmatprep.subr.mxu0 0.0
  %90 = vmatpush1.msra.mxu0 0.0
  %91 = vmatprep.subr.mxu0 0.0
  %92 = vmatpush1.msra.mxu0 0.0
  %93 = vmatprep.subr.mxu0 0.0
  %94 = vmatpush1.msra.mxu0 0.0
  %95 = vmatprep.subr.mxu0 0.0
  %96 = vmatpush1.msra.mxu0 0.0
  %97 = vmatprep.subr.mxu0 0.0
  %98 = vmatpush1.msra.mxu0 0.0
  %99 = vmatprep.subr.mxu0 0.0
  %100 = vmatpush1.msra.mxu0 0.0
  %101 = vmatprep.subr.mxu0 0.0
  %102 = vmatpush1.msra.mxu0 0.0
  %103 = vmatprep.subr.mxu0 0.0
  %104 = vmatpush1.msra.mxu0 0.0
  %105 = vmatprep.subr.mxu0 0.0
  %106 = vmatpush1.msra.mxu0 0.0
  %107 = vmatprep.subr.mxu0 0.0
  %108 = vmatpush1.msra.mxu0 0.0
  %109 = vmatprep.subr.mxu0 0.0
  %110 = vmatpush1.msra.mxu0 0.0
  %111 = vmatprep.subr.mxu0 0.0
  %112 = vmatpush1.msra.mxu0 0.0
  %113 = vmatprep.subr.mxu0 0.0
  %114 = vmatpush1.msra.mxu0 0.0
  %115 = vmatprep.subr.mxu0 0.0
  %116 = vmatpush1.msra.mxu0 0.0
  %117 = vmatprep.mubr.f32.mxu0 0.0
  %118 = vmatmul.mubr.f32.gmra.mrb[0].mxu0 %v42
  %v119 = vpop.f32.mrb[0].mxu0
  %v120 = vadd.f32 %v39, %v119
  %v121 = vpop.f32.mrb[0].mxu0
  %122 = vmatprep.mubr.f32.mxu0 0.0
  %123 = vmatmul.mubr.f32.gmra.mrb[0].mxu0 %v45
  %v124 = vpop.f32.mrb[0].mxu0
  %v125 = vadd.f32 %v39, %v124
  %v126 = vpop.f32.mrb[0].mxu0
  %127 = vmatprep.mubr.f32.mxu0 0.0
  %128 = vmatmul.mubr.f32.gmra.mrb[0].mxu0 %v48
  %v129 = vpop.f32.mrb[0].mxu0
  %v130 = vadd.f32 %v39, %v129
  %v131 = vpop.f32.mrb[0].mxu0
  %132 = vmatprep.mubr.f32.mxu0 0.0
  %133 = vmatmul.mubr.f32.gmra.mrb[0].mxu0 %v51
  %v134 = vpop.f32.mrb[0].mxu0
  %v135 = vadd.f32 %v39, %v134
  %v136 = vpop.f32.mrb[0].mxu0
  %137 = vdwg.mxu0
  %v138 = vld [vmem:[%s2 + $0x20] sm:$0xff]
  %v139 = vld [vmem:[%s2 + $0x28] sm:$0xff]
  %v140 = vld [vmem:[%s2 + $0x30] sm:$0xff]
  %v141 = vld [vmem:[%s2 + $0x38] sm:$0xff]
  %v142 = vld [vmem:[%s2 + $0xa2] sm:$0x1]
  %145 = vrot.lane.b32.xlu0 %v120, 96
  %v146 = vpop.permute.xlu0 %145
  %147 = vrot.lane.b32.xlu0 %v125, 96
  %v148 = vpop.permute.xlu0 %147
  %vm149 = vcmask 64512
  %v150 = vsel %vm149, %v120, 0
  %v152 = vsel %vm149, %v125, 0
  %v154 = vsel %vm149, %v146, 0
  %v156 = vsel %vm149, %v148, 0
  %158 = vmatprep.subr.mxu0 0.0
  %159 = vmatpush1.xpose.msra.mxu0 %v154
  %160 = vmatprep.subr.mxu0 0.0
  %161 = vmatpush1.xpose.msra.mxu0 %v156
  %162 = vmatprep.subr.mxu0 0.0
  %163 = vmatpush1.xpose.msra.mxu0 0.0
  %164 = vmatprep.subr.mxu0 0.0
  %165 = vmatpush1.xpose.msra.mxu0 0.0
  %166 = vmatprep.subr.mxu0 0.0
  %167 = vmatpush1.xpose.msra.mxu0 0.0
  %168 = vmatprep.subr.mxu0 0.0
  %169 = vmatpush1.xpose.msra.mxu0 0.0
  %170 = vmatprep.subr.mxu0 0.0
  %171 = vmatpush1.xpose.msra.mxu0 0.0
  %172 = vmatprep.subr.mxu0 0.0
  %173 = vmatpush1.xpose.msra.mxu0 0.0
  %174 = vmatprep.subr.mxu0 0.0
  %175 = vmatpush1.xpose.msra.mxu0 0.0
  %176 = vmatprep.subr.mxu0 0.0
  %177 = vmatpush1.xpose.msra.mxu0 0.0
  %178 = vmatprep.subr.mxu0 0.0
  %179 = vmatpush1.xpose.msra.mxu0 0.0
  %180 = vmatprep.subr.mxu0 0.0
  %181 = vmatpush1.xpose.msra.mxu0 0.0
  %182 = vmatprep.subr.mxu0 0.0
  %183 = vmatpush1.xpose.msra.mxu0 0.0
  %184 = vmatprep.subr.mxu0 0.0
  %185 = vmatpush1.xpose.msra.mxu0 0.0
  %186 = vmatprep.subr.mxu0 0.0
  %187 = vmatpush1.xpose.msra.mxu0 0.0
  %188 = vmatprep.subr.mxu0 0.0
  %189 = vmatpush1.xpose.msra.mxu0 0.0
  %190 = vmatprep.subr.mxu0 0.0
  %191 = vmatpush1.xpose.msra.mxu0 0.0
  %192 = vmatprep.subr.mxu0 0.0
  %193 = vmatpush1.xpose.msra.mxu0 0.0
  %194 = vmatprep.subr.mxu0 0.0
  %195 = vmatpush1.xpose.msra.mxu0 0.0
  %196 = vmatprep.subr.mxu0 0.0
  %197 = vmatpush1.xpose.msra.mxu0 0.0
  %198 = vmatprep.subr.mxu0 0.0
  %199 = vmatpush1.xpose.msra.mxu0 0.0
  %200 = vmatprep.subr.mxu0 0.0
  %201 = vmatpush1.xpose.msra.mxu0 0.0
  %202 = vmatprep.subr.mxu0 0.0
  %203 = vmatpush1.xpose.msra.mxu0 0.0
  %204 = vmatprep.subr.mxu0 0.0
  %205 = vmatpush1.xpose.msra.mxu0 0.0
  %206 = vmatprep.subr.mxu0 0.0
  %207 = vmatpush1.xpose.msra.mxu0 0.0
  %208 = vmatprep.subr.mxu0 0.0
  %209 = vmatpush1.xpose.msra.mxu0 0.0
  %210 = vmatprep.subr.mxu0 0.0
  %211 = vmatpush1.xpose.msra.mxu0 0.0
  %212 = vmatprep.subr.mxu0 0.0
  %213 = vmatpush1.xpose.msra.mxu0 0.0
  %214 = vmatprep.subr.mxu0 0.0
  %215 = vmatpush1.xpose.msra.mxu0 0.0
  %216 = vmatprep.subr.mxu0 0.0
  %217 = vmatpush1.xpose.msra.mxu0 0.0
  %218 = vmatprep.subr.mxu0 0.0
  %219 = vmatpush1.xpose.msra.mxu0 0.0
  %220 = vmatprep.subr.mxu0 0.0
  %221 = vmatpush1.xpose.msra.mxu0 0.0
  %222 = vmatprep.mubr.f32.mxu0 0.0
  %223 = vmatmul.mubr.f32.gmra.mrb[0].mxu0 %v150
  %v224 = vpop.f32.mrb[0].mxu0
  %v225 = vadd.f32 0.0, %v224
  %v226 = vpop.f32.mrb[0].mxu0
  %227 = vmatprep.mubr.f32.mxu0 0.0
  %228 = vmatmul.mubr.f32.gmra.mrb[0].mxu0 %v152
  %v229 = vpop.f32.mrb[0].mxu0
  %v230 = vadd.f32 0.0, %v229
  %v231 = vpop.f32.mrb[0].mxu0
  %232 = vdwg.mxu0
  %v233 = vmul.f32 %v225, 0.35355338
  %v234 = vmul.f32 %v230, 0.35355338
  %v235 = vadd.f32 %v233, %v27
  %v236 = vadd.f32 %v234, %v28
  %vm237 = vcmask 130048
  %v238 = vsel %vm237, %v235, -inf
  %239 = vmax.xlane.f32.xlu0 %v238
  %v240 = vpop.xlane.xlu0 %239
  %v241 = vsel %vm237, %v236, -inf
  %242 = vmax.xlane.f32.xlu0 %v241
  %v243 = vpop.xlane.xlu0 %242
  %v244 = vsub.f32 %v235, %v240
  %v245 = vsub.f32 %v236, %v243
  %v246 = vmul.f32 %v244, 1.442695
  %v247 = vpow.pop %v246
  %v248 = vmul.f32 %v245, 1.442695
  %v249 = vpow.pop %v248
  %v250 = vsel %vm237, %v247, 0.0
  %251 = vadd.xlane.f32.xlu0 %v250
  %v252 = vpop.xlane.xlu0 %251
  %v253 = vsel %vm237, %v249, 0.0
  %254 = vadd.xlane.f32.xlu0 %v253
  %v255 = vpop.xlane.xlu0 %254
  %v256 = vrcp.pop %v252
  %v257 = vrcp.pop %v255
  %258 = vrot.lane.b32.xlu0 %v120, 64
  %v259 = vpop.permute.xlu0 %258
  %260 = vrot.lane.b32.xlu0 %v125, 64
  %v261 = vpop.permute.xlu0 %260
  %v265 = vsel %vm237, %v247, 0
  %v268 = vsel %vm237, %v249, 0
  %270 = vmatprep.subr.mxu0 0.0
  %271 = vmatpush1.msra.mxu0 %v259
  %272 = vmatprep.subr.mxu0 0.0
  %273 = vmatpush1.msra.mxu0 %v261
  %274 = vmatprep.subr.mxu0 0.0
  %275 = vmatpush1.msra.mxu0 0.0
  %276 = vmatprep.subr.mxu0 0.0
  %277 = vmatpush1.msra.mxu0 0.0
  %278 = vmatprep.subr.mxu0 0.0
  %279 = vmatpush1.msra.mxu0 0.0
  %280 = vmatprep.subr.mxu0 0.0
  %281 = vmatpush1.msra.mxu0 0.0
  %282 = vmatprep.subr.mxu0 0.0
  %283 = vmatpush1.msra.mxu0 0.0
  %284 = vmatprep.subr.mxu0 0.0
  %285 = vmatpush1.msra.mxu0 0.0
  %286 = vmatprep.subr.mxu0 0.0
  %287 = vmatpush1.msra.mxu0 0.0
  %288 = vmatprep.subr.mxu0 0.0
  %289 = vmatpush1.msra.mxu0 0.0
  %290 = vmatprep.subr.mxu0 0.0
  %291 = vmatpush1.msra.mxu0 0.0
  %292 = vmatprep.subr.mxu0 0.0
  %293 = vmatpush1.msra.mxu0 0.0
  %294 = vmatprep.subr.mxu0 0.0
  %295 = vmatpush1.msra.mxu0 0.0
  %296 = vmatprep.subr.mxu0 0.0
  %297 = vmatpush1.msra.mxu0 0.0
  %298 = vmatprep.subr.mxu0 0.0
  %299 = vmatpush1.msra.mxu0 0.0
  %300 = vmatprep.subr.mxu0 0.0
  %301 = vmatpush1.msra.mxu0 0.0
  %302 = vmatprep.subr.mxu0 0.0
  %303 = vmatpush1.msra.mxu0 0.0
  %304 = vmatprep.subr.mxu0 0.0
  %305 = vmatpush1.msra.mxu0 0.0
  %306 = vmatprep.subr.mxu0 0.0
  %307 = vmatpush1.msra.mxu0 0.0
  %308 = vmatprep.subr.mxu0 0.0
  %309 = vmatpush1.msra.mxu0 0.0
  %310 = vmatprep.subr.mxu0 0.0
  %311 = vmatpush1.msra.mxu0 0.0
  %312 = vmatprep.subr.mxu0 0.0
  %313 = vmatpush1.msra.mxu0 0.0
  %314 = vmatprep.subr.mxu0 0.0
  %315 = vmatpush1.msra.mxu0 0.0
  %316 = vmatprep.subr.mxu0 0.0
  %317 = vmatpush1.msra.mxu0 0.0
  %318 = vmatprep.subr.mxu0 0.0
  %319 = vmatpush1.msra.mxu0 0.0
  %320 = vmatprep.subr.mxu0 0.0
  %321 = vmatpush1.msra.mxu0 0.0
  %322 = vmatprep.subr.mxu0 0.0
  %323 = vmatpush1.msra.mxu0 0.0
  %324 = vmatprep.subr.mxu0 0.0
  %325 = vmatpush1.msra.mxu0 0.0
  %326 = vmatprep.subr.mxu0 0.0
  %327 = vmatpush1.msra.mxu0 0.0
  %328 = vmatprep.subr.mxu0 0.0
  %329 = vmatpush1.msra.mxu0 0.0
  %330 = vmatprep.subr.mxu0 0.0
  %331 = vmatpush1.msra.mxu0 0.0
  %332 = vmatprep.subr.mxu0 0.0
  %333 = vmatpush1.msra.mxu0 0.0
  %334 = vmatprep.mubr.f32.mxu0 0.0
  %335 = vmatmul.mubr.f32.gmra.mrb[0].mxu0 %v265
  %v336 = vpop.f32.mrb[0].mxu0
  %v337 = vadd.f32 0.0, %v336
  %v338 = vpop.f32.mrb[0].mxu0
  %339 = vmatprep.mubr.f32.mxu0 0.0
  %340 = vmatmul.mubr.f32.gmra.mrb[0].mxu0 %v268
  %v341 = vpop.f32.mrb[0].mxu0
  %v342 = vadd.f32 0.0, %v341
  %v343 = vpop.f32.mrb[0].mxu0
  %344 = vdwg.mxu0
  %v345 = vmul.f32 %v337, %v256
  %v346 = vmul.f32 %v342, %v257
  %v347 = vmul.f32 %v247, %v256
  %v348 = vmul.f32 %v249, %v257
  %349 = vrot.lane.b32.xlu0 %v120, 120
  %v350 = vpop.permute.xlu0 %349
  %351 = vrot.lane.b32.xlu0 %v125, 120
  %v352 = vpop.permute.xlu0 %351
  %353 = vrot.lane.b32.xlu0 %v120, 88
  %v354 = vpop.permute.xlu0 %353
  %355 = vrot.lane.b32.xlu0 %v125, 88
  %v356 = vpop.permute.xlu0 %355
  %v357 = vsel %vm149, %v350, 0
  %v359 = vsel %vm149, %v352, 0
  %v361 = vsel %vm149, %v354, 0
  %v363 = vsel %vm149, %v356, 0
  %365 = vmatprep.subr.mxu0 0.0
  %366 = vmatpush1.xpose.msra.mxu0 %v361
  %367 = vmatprep.subr.mxu0 0.0
  %368 = vmatpush1.xpose.msra.mxu0 %v363
  %369 = vmatprep.subr.mxu0 0.0
  %370 = vmatpush1.xpose.msra.mxu0 0.0
  %371 = vmatprep.subr.mxu0 0.0
  %372 = vmatpush1.xpose.msra.mxu0 0.0
  %373 = vmatprep.subr.mxu0 0.0
  %374 = vmatpush1.xpose.msra.mxu0 0.0
  %375 = vmatprep.subr.mxu0 0.0
  %376 = vmatpush1.xpose.msra.mxu0 0.0
  %377 = vmatprep.subr.mxu0 0.0
  %378 = vmatpush1.xpose.msra.mxu0 0.0
  %379 = vmatprep.subr.mxu0 0.0
  %380 = vmatpush1.xpose.msra.mxu0 0.0
  %381 = vmatprep.subr.mxu0 0.0
  %382 = vmatpush1.xpose.msra.mxu0 0.0
  %383 = vmatprep.subr.mxu0 0.0
  %384 = vmatpush1.xpose.msra.mxu0 0.0
  %385 = vmatprep.subr.mxu0 0.0
  %386 = vmatpush1.xpose.msra.mxu0 0.0
  %387 = vmatprep.subr.mxu0 0.0
  %388 = vmatpush1.xpose.msra.mxu0 0.0
  %389 = vmatprep.subr.mxu0 0.0
  %390 = vmatpush1.xpose.msra.mxu0 0.0
  %391 = vmatprep.subr.mxu0 0.0
  %392 = vmatpush1.xpose.msra.mxu0 0.0
  %393 = vmatprep.subr.mxu0 0.0
  %394 = vmatpush1.xpose.msra.mxu0 0.0
  %395 = vmatprep.subr.mxu0 0.0
  %396 = vmatpush1.xpose.msra.mxu0 0.0
  %397 = vmatprep.subr.mxu0 0.0
  %398 = vmatpush1.xpose.msra.mxu0 0.0
  %399 = vmatprep.subr.mxu0 0.0
  %400 = vmatpush1.xpose.msra.mxu0 0.0
  %401 = vmatprep.subr.mxu0 0.0
  %402 = vmatpush1.xpose.msra.mxu0 0.0
  %403 = vmatprep.subr.mxu0 0.0
  %404 = vmatpush1.xpose.msra.mxu0 0.0
  %405 = vmatprep.subr.mxu0 0.0
  %406 = vmatpush1.xpose.msra.mxu0 0.0
  %407 = vmatprep.subr.mxu0 0.0
  %408 = vmatpush1.xpose.msra.mxu0 0.0
  %409 = vmatprep.subr.mxu0 0.0
  %410 = vmatpush1.xpose.msra.mxu0 0.0
  %411 = vmatprep.subr.mxu0 0.0
  %412 = vmatpush1.xpose.msra.mxu0 0.0
  %413 = vmatprep.subr.mxu0 0.0
  %414 = vmatpush1.xpose.msra.mxu0 0.0
  %415 = vmatprep.subr.mxu0 0.0
  %416 = vmatpush1.xpose.msra.mxu0 0.0
  %417 = vmatprep.subr.mxu0 0.0
  %418 = vmatpush1.xpose.msra.mxu0 0.0
  %419 = vmatprep.subr.mxu0 0.0
  %420 = vmatpush1.xpose.msra.mxu0 0.0
  %421 = vmatprep.subr.mxu0 0.0
  %422 = vmatpush1.xpose.msra.mxu0 0.0
  %423 = vmatprep.subr.mxu0 0.0
  %424 = vmatpush1.xpose.msra.mxu0 0.0
  %425 = vmatprep.subr.mxu0 0.0
  %426 = vmatpush1.xpose.msra.mxu0 0.0
  %427 = vmatprep.subr.mxu0 0.0
  %428 = vmatpush1.xpose.msra.mxu0 0.0
  %429 = vmatprep.mubr.f32.mxu0 0.0
  %430 = vmatmul.mubr.f32.gmra.mrb[0].mxu0 %v357
  %v431 = vpop.f32.mrb[0].mxu0
  %v432 = vadd.f32 0.0, %v431
  %v433 = vpop.f32.mrb[0].mxu0
  %434 = vmatprep.mubr.f32.mxu0 0.0
  %435 = vmatmul.mubr.f32.gmra.mrb[0].mxu0 %v359
  %v436 = vpop.f32.mrb[0].mxu0
  %v437 = vadd.f32 0.0, %v436
  %v438 = vpop.f32.mrb[0].mxu0
  %439 = vdwg.mxu0
  %v440 = vmul.f32 %v432, 0.35355338
  %v441 = vmul.f32 %v437, 0.35355338
  %v442 = vadd.f32 %v440, %v27
  %v443 = vadd.f32 %v441, %v28
  %v444 = vsel %vm237, %v442, -inf
  %445 = vmax.xlane.f32.xlu0 %v444
  %v446 = vpop.xlane.xlu0 %445
  %v447 = vsel %vm237, %v443, -inf
  %448 = vmax.xlane.f32.xlu0 %v447
  %v449 = vpop.xlane.xlu0 %448
  %v450 = vsub.f32 %v442, %v446
  %v451 = vsub.f32 %v443, %v449
  %v452 = vmul.f32 %v450, 1.442695
  %v453 = vpow.pop %v452
  %v454 = vmul.f32 %v451, 1.442695
  %v455 = vpow.pop %v454
  %v456 = vsel %vm237, %v453, 0.0
  %457 = vadd.xlane.f32.xlu0 %v456
  %v458 = vpop.xlane.xlu0 %457
  %v459 = vsel %vm237, %v455, 0.0
  %460 = vadd.xlane.f32.xlu0 %v459
  %v461 = vpop.xlane.xlu0 %460
  %v462 = vrcp.pop %v458
  %v463 = vrcp.pop %v461
  %464 = vrot.lane.b32.xlu0 %v120, 56
  %v465 = vpop.permute.xlu0 %464
  %466 = vrot.lane.b32.xlu0 %v125, 56
  %v467 = vpop.permute.xlu0 %466
  %v471 = vsel %vm237, %v453, 0
  %v474 = vsel %vm237, %v455, 0
  %476 = vmatprep.subr.mxu0 0.0
  %477 = vmatpush1.msra.mxu0 %v465
  %478 = vmatprep.subr.mxu0 0.0
  %479 = vmatpush1.msra.mxu0 %v467
  %480 = vmatprep.subr.mxu0 0.0
  %481 = vmatpush1.msra.mxu0 0.0
  %482 = vmatprep.subr.mxu0 0.0
  %483 = vmatpush1.msra.mxu0 0.0
  %484 = vmatprep.subr.mxu0 0.0
  %485 = vmatpush1.msra.mxu0 0.0
  %486 = vmatprep.subr.mxu0 0.0
  %487 = vmatpush1.msra.mxu0 0.0
  %488 = vmatprep.subr.mxu0 0.0
  %489 = vmatpush1.msra.mxu0 0.0
  %490 = vmatprep.subr.mxu0 0.0
  %491 = vmatpush1.msra.mxu0 0.0
  %492 = vmatprep.subr.mxu0 0.0
  %493 = vmatpush1.msra.mxu0 0.0
  %494 = vmatprep.subr.mxu0 0.0
  %495 = vmatpush1.msra.mxu0 0.0
  %496 = vmatprep.subr.mxu0 0.0
  %497 = vmatpush1.msra.mxu0 0.0
  %498 = vmatprep.subr.mxu0 0.0
  %499 = vmatpush1.msra.mxu0 0.0
  %500 = vmatprep.subr.mxu0 0.0
  %501 = vmatpush1.msra.mxu0 0.0
  %502 = vmatprep.subr.mxu0 0.0
  %503 = vmatpush1.msra.mxu0 0.0
  %504 = vmatprep.subr.mxu0 0.0
  %505 = vmatpush1.msra.mxu0 0.0
  %506 = vmatprep.subr.mxu0 0.0
  %507 = vmatpush1.msra.mxu0 0.0
  %508 = vmatprep.subr.mxu0 0.0
  %509 = vmatpush1.msra.mxu0 0.0
  %510 = vmatprep.subr.mxu0 0.0
  %511 = vmatpush1.msra.mxu0 0.0
  %512 = vmatprep.subr.mxu0 0.0
  %513 = vmatpush1.msra.mxu0 0.0
  %514 = vmatprep.subr.mxu0 0.0
  %515 = vmatpush1.msra.mxu0 0.0
  %516 = vmatprep.subr.mxu0 0.0
  %517 = vmatpush1.msra.mxu0 0.0
  %518 = vmatprep.subr.mxu0 0.0
  %519 = vmatpush1.msra.mxu0 0.0
  %520 = vmatprep.subr.mxu0 0.0
  %521 = vmatpush1.msra.mxu0 0.0
  %522 = vmatprep.subr.mxu0 0.0
  %523 = vmatpush1.msra.mxu0 0.0
  %524 = vmatprep.subr.mxu0 0.0
  %525 = vmatpush1.msra.mxu0 0.0
  %526 = vmatprep.subr.mxu0 0.0
  %527 = vmatpush1.msra.mxu0 0.0
  %528 = vmatprep.subr.mxu0 0.0
  %529 = vmatpush1.msra.mxu0 0.0
  %530 = vmatprep.subr.mxu0 0.0
  %531 = vmatpush1.msra.mxu0 0.0
  %532 = vmatprep.subr.mxu0 0.0
  %533 = vmatpush1.msra.mxu0 0.0
  %534 = vmatprep.subr.mxu0 0.0
  %535 = vmatpush1.msra.mxu0 0.0
  %536 = vmatprep.subr.mxu0 0.0
  %537 = vmatpush1.msra.mxu0 0.0
  %538 = vmatprep.subr.mxu0 0.0
  %539 = vmatpush1.msra.mxu0 0.0
  %540 = vmatprep.mubr.f32.mxu0 0.0
  %541 = vmatmul.mubr.f32.gmra.mrb[0].mxu0 %v471
  %v542 = vpop.f32.mrb[0].mxu0
  %v543 = vadd.f32 0.0, %v542
  %v544 = vpop.f32.mrb[0].mxu0
  %545 = vmatprep.mubr.f32.mxu0 0.0
  %546 = vmatmul.mubr.f32.gmra.mrb[0].mxu0 %v474
  %v547 = vpop.f32.mrb[0].mxu0
  %v548 = vadd.f32 0.0, %v547
  %v549 = vpop.f32.mrb[0].mxu0
  %550 = vdwg.mxu0
  %v551 = vmul.f32 %v543, %v462
  %v552 = vmul.f32 %v548, %v463
  %v553 = vmul.f32 %v453, %v462
  %v554 = vmul.f32 %v455, %v463
  %555 = vrot.lane.b32.xlu0 %v120, 112
  %v556 = vpop.permute.xlu0 %555
  %557 = vrot.lane.b32.xlu0 %v125, 112
  %v558 = vpop.permute.xlu0 %557
  %559 = vrot.lane.b32.xlu0 %v120, 80
  %v560 = vpop.permute.xlu0 %559
  %561 = vrot.lane.b32.xlu0 %v125, 80
  %v562 = vpop.permute.xlu0 %561
  %v563 = vsel %vm149, %v556, 0
  %v565 = vsel %vm149, %v558, 0
  %v567 = vsel %vm149, %v560, 0
  %v569 = vsel %vm149, %v562, 0
  %571 = vmatprep.subr.mxu0 0.0
  %572 = vmatpush1.xpose.msra.mxu0 %v567
  %573 = vmatprep.subr.mxu0 0.0
  %574 = vmatpush1.xpose.msra.mxu0 %v569
  %575 = vmatprep.subr.mxu0 0.0
  %576 = vmatpush1.xpose.msra.mxu0 0.0
  %577 = vmatprep.subr.mxu0 0.0
  %578 = vmatpush1.xpose.msra.mxu0 0.0
  %579 = vmatprep.subr.mxu0 0.0
  %580 = vmatpush1.xpose.msra.mxu0 0.0
  %581 = vmatprep.subr.mxu0 0.0
  %582 = vmatpush1.xpose.msra.mxu0 0.0
  %583 = vmatprep.subr.mxu0 0.0
  %584 = vmatpush1.xpose.msra.mxu0 0.0
  %585 = vmatprep.subr.mxu0 0.0
  %586 = vmatpush1.xpose.msra.mxu0 0.0
  %587 = vmatprep.subr.mxu0 0.0
  %588 = vmatpush1.xpose.msra.mxu0 0.0
  %589 = vmatprep.subr.mxu0 0.0
  %590 = vmatpush1.xpose.msra.mxu0 0.0
  %591 = vmatprep.subr.mxu0 0.0
  %592 = vmatpush1.xpose.msra.mxu0 0.0
  %593 = vmatprep.subr.mxu0 0.0
  %594 = vmatpush1.xpose.msra.mxu0 0.0
  %595 = vmatprep.subr.mxu0 0.0
  %596 = vmatpush1.xpose.msra.mxu0 0.0
  %597 = vmatprep.subr.mxu0 0.0
  %598 = vmatpush1.xpose.msra.mxu0 0.0
  %599 = vmatprep.subr.mxu0 0.0
  %600 = vmatpush1.xpose.msra.mxu0 0.0
  %601 = vmatprep.subr.mxu0 0.0
  %602 = vmatpush1.xpose.msra.mxu0 0.0
  %603 = vmatprep.subr.mxu0 0.0
  %604 = vmatpush1.xpose.msra.mxu0 0.0
  %605 = vmatprep.subr.mxu0 0.0
  %606 = vmatpush1.xpose.msra.mxu0 0.0
  %607 = vmatprep.subr.mxu0 0.0
  %608 = vmatpush1.xpose.msra.mxu0 0.0
  %609 = vmatprep.subr.mxu0 0.0
  %610 = vmatpush1.xpose.msra.mxu0 0.0
  %611 = vmatprep.subr.mxu0 0.0
  %612 = vmatpush1.xpose.msra.mxu0 0.0
  %613 = vmatprep.subr.mxu0 0.0
  %614 = vmatpush1.xpose.msra.mxu0 0.0
  %615 = vmatprep.subr.mxu0 0.0
  %616 = vmatpush1.xpose.msra.mxu0 0.0
  %617 = vmatprep.subr.mxu0 0.0
  %618 = vmatpush1.xpose.msra.mxu0 0.0
  %619 = vmatprep.subr.mxu0 0.0
  %620 = vmatpush1.xpose.msra.mxu0 0.0
  %621 = vmatprep.subr.mxu0 0.0
  %622 = vmatpush1.xpose.msra.mxu0 0.0
  %623 = vmatprep.subr.mxu0 0.0
  %624 = vmatpush1.xpose.msra.mxu0 0.0
  %625 = vmatprep.subr.mxu0 0.0
  %626 = vmatpush1.xpose.msra.mxu0 0.0
  %627 = vmatprep.subr.mxu0 0.0
  %628 = vmatpush1.xpose.msra.mxu0 0.0
  %629 = vmatprep.subr.mxu0 0.0
  %630 = vmatpush1.xpose.msra.mxu0 0.0
  %631 = vmatprep.subr.mxu0 0.0
  %632 = vmatpush1.xpose.msra.mxu0 0.0
  %633 = vmatprep.subr.mxu0 0.0
  %634 = vmatpush1.xpose.msra.mxu0 0.0
  %635 = vmatprep.mubr.f32.mxu0 0.0
  %636 = vmatmul.mubr.f32.gmra.mrb[0].mxu0 %v563
  %v637 = vpop.f32.mrb[0].mxu0
  %v638 = vadd.f32 0.0, %v637
  %v639 = vpop.f32.mrb[0].mxu0
  %640 = vmatprep.mubr.f32.mxu0 0.0
  %641 = vmatmul.mubr.f32.gmra.mrb[0].mxu0 %v565
  %v642 = vpop.f32.mrb[0].mxu0
  %v643 = vadd.f32 0.0, %v642
  %v644 = vpop.f32.mrb[0].mxu0
  %645 = vdwg.mxu0
  %v646 = vmul.f32 %v638, 0.35355338
  %v647 = vmul.f32 %v643, 0.35355338
  %v648 = vadd.f32 %v646, %v27
  %v649 = vadd.f32 %v647, %v28
  %v650 = vsel %vm237, %v648, -inf
  %651 = vmax.xlane.f32.xlu0 %v650
  %v652 = vpop.xlane.xlu0 %651
  %v653 = vsel %vm237, %v649, -inf
  %654 = vmax.xlane.f32.xlu0 %v653
  %v655 = vpop.xlane.xlu0 %654
  %v656 = vsub.f32 %v648, %v652
  %v657 = vsub.f32 %v649, %v655
  %v658 = vmul.f32 %v656, 1.442695
  %v659 = vpow.pop %v658
  %v660 = vmul.f32 %v657, 1.442695
  %v661 = vpow.pop %v660
  %v662 = vsel %vm237, %v659, 0.0
  %663 = vadd.xlane.f32.xlu0 %v662
  %v664 = vpop.xlane.xlu0 %663
  %v665 = vsel %vm237, %v661, 0.0
  %666 = vadd.xlane.f32.xlu0 %v665
  %v667 = vpop.xlane.xlu0 %666
  %v668 = vrcp.pop %v664
  %v669 = vrcp.pop %v667
  %670 = vrot.lane.b32.xlu0 %v120, 48
  %v671 = vpop.permute.xlu0 %670
  %672 = vrot.lane.b32.xlu0 %v125, 48
  %v673 = vpop.permute.xlu0 %672
  %v677 = vsel %vm237, %v659, 0
  %v680 = vsel %vm237, %v661, 0
  %682 = vmatprep.subr.mxu0 0.0
  %683 = vmatpush1.msra.mxu0 %v671
  %684 = vmatprep.subr.mxu0 0.0
  %685 = vmatpush1.msra.mxu0 %v673
  %686 = vmatprep.subr.mxu0 0.0
  %687 = vmatpush1.msra.mxu0 0.0
  %688 = vmatprep.subr.mxu0 0.0
  %689 = vmatpush1.msra.mxu0 0.0
  %690 = vmatprep.subr.mxu0 0.0
  %691 = vmatpush1.msra.mxu0 0.0
  %692 = vmatprep.subr.mxu0 0.0
  %693 = vmatpush1.msra.mxu0 0.0
  %694 = vmatprep.subr.mxu0 0.0
  %695 = vmatpush1.msra.mxu0 0.0
  %696 = vmatprep.subr.mxu0 0.0
  %697 = vmatpush1.msra.mxu0 0.0
  %698 = vmatprep.subr.mxu0 0.0
  %699 = vmatpush1.msra.mxu0 0.0
  %700 = vmatprep.subr.mxu0 0.0
  %701 = vmatpush1.msra.mxu0 0.0
  %702 = vmatprep.subr.mxu0 0.0
  %703 = vmatpush1.msra.mxu0 0.0
  %704 = vmatprep.subr.mxu0 0.0
  %705 = vmatpush1.msra.mxu0 0.0
  %706 = vmatprep.subr.mxu0 0.0
  %707 = vmatpush1.msra.mxu0 0.0
  %708 = vmatprep.subr.mxu0 0.0
  %709 = vmatpush1.msra.mxu0 0.0
  %710 = vmatprep.subr.mxu0 0.0
  %711 = vmatpush1.msra.mxu0 0.0
  %712 = vmatprep.subr.mxu0 0.0
  %713 = vmatpush1.msra.mxu0 0.0
  %714 = vmatprep.subr.mxu0 0.0
  %715 = vmatpush1.msra.mxu0 0.0
  %716 = vmatprep.subr.mxu0 0.0
  %717 = vmatpush1.msra.mxu0 0.0
  %718 = vmatprep.subr.mxu0 0.0
  %719 = vmatpush1.msra.mxu0 0.0
  %720 = vmatprep.subr.mxu0 0.0
  %721 = vmatpush1.msra.mxu0 0.0
  %722 = vmatprep.subr.mxu0 0.0
  %723 = vmatpush1.msra.mxu0 0.0
  %724 = vmatprep.subr.mxu0 0.0
  %725 = vmatpush1.msra.mxu0 0.0
  %726 = vmatprep.subr.mxu0 0.0
  %727 = vmatpush1.msra.mxu0 0.0
  %728 = vmatprep.subr.mxu0 0.0
  %729 = vmatpush1.msra.mxu0 0.0
  %730 = vmatprep.subr.mxu0 0.0
  %731 = vmatpush1.msra.mxu0 0.0
  %732 = vmatprep.subr.mxu0 0.0
  %733 = vmatpush1.msra.mxu0 0.0
  %734 = vmatprep.subr.mxu0 0.0
  %735 = vmatpush1.msra.mxu0 0.0
  %736 = vmatprep.subr.mxu0 0.0
  %737 = vmatpush1.msra.mxu0 0.0
  %738 = vmatprep.subr.mxu0 0.0
  %739 = vmatpush1.msra.mxu0 0.0
  %740 = vmatprep.subr.mxu0 0.0
  %741 = vmatpush1.msra.mxu0 0.0
  %742 = vmatprep.subr.mxu0 0.0
  %743 = vmatpush1.msra.mxu0 0.0
  %744 = vmatprep.subr.mxu0 0.0
  %745 = vmatpush1.msra.mxu0 0.0
  %746 = vmatprep.mubr.f32.mxu0 0.0
  %747 = vmatmul.mubr.f32.gmra.mrb[0].mxu0 %v677
  %v748 = vpop.f32.mrb[0].mxu0
  %v749 = vadd.f32 0.0, %v748
  %v750 = vpop.f32.mrb[0].mxu0
  %751 = vmatprep.mubr.f32.mxu0 0.0
  %752 = vmatmul.mubr.f32.gmra.mrb[0].mxu0 %v680
  %v753 = vpop.f32.mrb[0].mxu0
  %v754 = vadd.f32 0.0, %v753
  %v755 = vpop.f32.mrb[0].mxu0
  %756 = vdwg.mxu0
  %v757 = vmul.f32 %v749, %v668
  %v758 = vmul.f32 %v754, %v669
  %v759 = vmul.f32 %v659, %v668
  %v760 = vmul.f32 %v661, %v669
  %761 = vrot.lane.b32.xlu0 %v120, 104
  %v762 = vpop.permute.xlu0 %761
  %763 = vrot.lane.b32.xlu0 %v125, 104
  %v764 = vpop.permute.xlu0 %763
  %765 = vrot.lane.b32.xlu0 %v120, 72
  %v766 = vpop.permute.xlu0 %765
  %767 = vrot.lane.b32.xlu0 %v125, 72
  %v768 = vpop.permute.xlu0 %767
  %v769 = vsel %vm149, %v762, 0
  %v771 = vsel %vm149, %v764, 0
  %v773 = vsel %vm149, %v766, 0
  %v775 = vsel %vm149, %v768, 0
  %777 = vmatprep.subr.mxu0 0.0
  %778 = vmatpush1.xpose.msra.mxu0 %v773
  %779 = vmatprep.subr.mxu0 0.0
  %780 = vmatpush1.xpose.msra.mxu0 %v775
  %781 = vmatprep.subr.mxu0 0.0
  %782 = vmatpush1.xpose.msra.mxu0 0.0
  %783 = vmatprep.subr.mxu0 0.0
  %784 = vmatpush1.xpose.msra.mxu0 0.0
  %785 = vmatprep.subr.mxu0 0.0
  %786 = vmatpush1.xpose.msra.mxu0 0.0
  %787 = vmatprep.subr.mxu0 0.0
  %788 = vmatpush1.xpose.msra.mxu0 0.0
  %789 = vmatprep.subr.mxu0 0.0
  %790 = vmatpush1.xpose.msra.mxu0 0.0
  %791 = vmatprep.subr.mxu0 0.0
  %792 = vmatpush1.xpose.msra.mxu0 0.0
  %793 = vmatprep.subr.mxu0 0.0
  %794 = vmatpush1.xpose.msra.mxu0 0.0
  %795 = vmatprep.subr.mxu0 0.0
  %796 = vmatpush1.xpose.msra.mxu0 0.0
  %797 = vmatprep.subr.mxu0 0.0
  %798 = vmatpush1.xpose.msra.mxu0 0.0
  %799 = vmatprep.subr.mxu0 0.0
  %800 = vmatpush1.xpose.msra.mxu0 0.0
  %801 = vmatprep.subr.mxu0 0.0
  %802 = vmatpush1.xpose.msra.mxu0 0.0
  %803 = vmatprep.subr.mxu0 0.0
  %804 = vmatpush1.xpose.msra.mxu0 0.0
  %805 = vmatprep.subr.mxu0 0.0
  %806 = vmatpush1.xpose.msra.mxu0 0.0
  %807 = vmatprep.subr.mxu0 0.0
  %808 = vmatpush1.xpose.msra.mxu0 0.0
  %809 = vmatprep.subr.mxu0 0.0
  %810 = vmatpush1.xpose.msra.mxu0 0.0
  %811 = vmatprep.subr.mxu0 0.0
  %812 = vmatpush1.xpose.msra.mxu0 0.0
  %813 = vmatprep.subr.mxu0 0.0
  %814 = vmatpush1.xpose.msra.mxu0 0.0
  %815 = vmatprep.subr.mxu0 0.0
  %816 = vmatpush1.xpose.msra.mxu0 0.0
  %817 = vmatprep.subr.mxu0 0.0
  %818 = vmatpush1.xpose.msra.mxu0 0.0
  %819 = vmatprep.subr.mxu0 0.0
  %820 = vmatpush1.xpose.msra.mxu0 0.0
  %821 = vmatprep.subr.mxu0 0.0
  %822 = vmatpush1.xpose.msra.mxu0 0.0
  %823 = vmatprep.subr.mxu0 0.0
  %824 = vmatpush1.xpose.msra.mxu0 0.0
  %825 = vmatprep.subr.mxu0 0.0
  %826 = vmatpush1.xpose.msra.mxu0 0.0
  %827 = vmatprep.subr.mxu0 0.0
  %828 = vmatpush1.xpose.msra.mxu0 0.0
  %829 = vmatprep.subr.mxu0 0.0
  %830 = vmatpush1.xpose.msra.mxu0 0.0
  %831 = vmatprep.subr.mxu0 0.0
  %832 = vmatpush1.xpose.msra.mxu0 0.0
  %833 = vmatprep.subr.mxu0 0.0
  %834 = vmatpush1.xpose.msra.mxu0 0.0
  %835 = vmatprep.subr.mxu0 0.0
  %836 = vmatpush1.xpose.msra.mxu0 0.0
  %837 = vmatprep.subr.mxu0 0.0
  %838 = vmatpush1.xpose.msra.mxu0 0.0
  %839 = vmatprep.subr.mxu0 0.0
  %840 = vmatpush1.xpose.msra.mxu0 0.0
  %841 = vmatprep.mubr.f32.mxu0 0.0
  %842 = vmatmul.mubr.f32.gmra.mrb[0].mxu0 %v769
  %v843 = vpop.f32.mrb[0].mxu0
  %v844 = vadd.f32 0.0, %v843
  %v845 = vpop.f32.mrb[0].mxu0
  %846 = vmatprep.mubr.f32.mxu0 0.0
  %847 = vmatmul.mubr.f32.gmra.mrb[0].mxu0 %v771
  %v848 = vpop.f32.mrb[0].mxu0
  %v849 = vadd.f32 0.0, %v848
  %v850 = vpop.f32.mrb[0].mxu0
  %851 = vdwg.mxu0
  %v852 = vmul.f32 %v844, 0.35355338
  %v853 = vmul.f32 %v849, 0.35355338
  %v854 = vadd.f32 %v852, %v27
  %v855 = vadd.f32 %v853, %v28
  %v856 = vsel %vm237, %v854, -inf
  %857 = vmax.xlane.f32.xlu0 %v856
  %v858 = vpop.xlane.xlu0 %857
  %v859 = vsel %vm237, %v855, -inf
  %860 = vmax.xlane.f32.xlu0 %v859
  %v861 = vpop.xlane.xlu0 %860
  %v862 = vsub.f32 %v854, %v858
  %v863 = vsub.f32 %v855, %v861
  %v864 = vmul.f32 %v862, 1.442695
  %v865 = vpow.pop %v864
  %v866 = vmul.f32 %v863, 1.442695
  %v867 = vpow.pop %v866
  %v868 = vsel %vm237, %v865, 0.0
  %869 = vadd.xlane.f32.xlu0 %v868
  %v870 = vpop.xlane.xlu0 %869
  %v871 = vsel %vm237, %v867, 0.0
  %872 = vadd.xlane.f32.xlu0 %v871
  %v873 = vpop.xlane.xlu0 %872
  %v874 = vrcp.pop %v870
  %v875 = vrcp.pop %v873
  %876 = vrot.lane.b32.xlu0 %v120, 40
  %v877 = vpop.permute.xlu0 %876
  %878 = vrot.lane.b32.xlu0 %v125, 40
  %v879 = vpop.permute.xlu0 %878
  %v883 = vsel %vm237, %v865, 0
  %v886 = vsel %vm237, %v867, 0
  %888 = vmatprep.subr.mxu0 0.0
  %889 = vmatpush1.msra.mxu0 %v877
  %890 = vmatprep.subr.mxu0 0.0
  %891 = vmatpush1.msra.mxu0 %v879
  %892 = vmatprep.subr.mxu0 0.0
  %893 = vmatpush1.msra.mxu0 0.0
  %894 = vmatprep.subr.mxu0 0.0
  %895 = vmatpush1.msra.mxu0 0.0
  %896 = vmatprep.subr.mxu0 0.0
  %897 = vmatpush1.msra.mxu0 0.0
  %898 = vmatprep.subr.mxu0 0.0
  %899 = vmatpush1.msra.mxu0 0.0
  %900 = vmatprep.subr.mxu0 0.0
  %901 = vmatpush1.msra.mxu0 0.0
  %902 = vmatprep.subr.mxu0 0.0
  %903 = vmatpush1.msra.mxu0 0.0
  %904 = vmatprep.subr.mxu0 0.0
  %905 = vmatpush1.msra.mxu0 0.0
  %906 = vmatprep.subr.mxu0 0.0
  %907 = vmatpush1.msra.mxu0 0.0
  %908 = vmatprep.subr.mxu0 0.0
  %909 = vmatpush1.msra.mxu0 0.0
  %910 = vmatprep.subr.mxu0 0.0
  %911 = vmatpush1.msra.mxu0 0.0
  %912 = vmatprep.subr.mxu0 0.0
  %913 = vmatpush1.msra.mxu0 0.0
  %914 = vmatprep.subr.mxu0 0.0
  %915 = vmatpush1.msra.mxu0 0.0
  %916 = vmatprep.subr.mxu0 0.0
  %917 = vmatpush1.msra.mxu0 0.0
  %918 = vmatprep.subr.mxu0 0.0
  %919 = vmatpush1.msra.mxu0 0.0
  %920 = vmatprep.subr.mxu0 0.0
  %921 = vmatpush1.msra.mxu0 0.0
  %922 = vmatprep.subr.mxu0 0.0
  %923 = vmatpush1.msra.mxu0 0.0
  %924 = vmatprep.subr.mxu0 0.0
  %925 = vmatpush1.msra.mxu0 0.0
  %926 = vmatprep.subr.mxu0 0.0
  %927 = vmatpush1.msra.mxu0 0.0
  %928 = vmatprep.subr.mxu0 0.0
  %929 = vmatpush1.msra.mxu0 0.0
  %930 = vmatprep.subr.mxu0 0.0
  %931 = vmatpush1.msra.mxu0 0.0
  %932 = vmatprep.subr.mxu0 0.0
  %933 = vmatpush1.msra.mxu0 0.0
  %934 = vmatprep.subr.mxu0 0.0
  %935 = vmatpush1.msra.mxu0 0.0
  %936 = vmatprep.subr.mxu0 0.0
  %937 = vmatpush1.msra.mxu0 0.0
  %938 = vmatprep.subr.mxu0 0.0
  %939 = vmatpush1.msra.mxu0 0.0
  %940 = vmatprep.subr.mxu0 0.0
  %941 = vmatpush1.msra.mxu0 0.0
  %942 = vmatprep.subr.mxu0 0.0
  %943 = vmatpush1.msra.mxu0 0.0
  %944 = vmatprep.subr.mxu0 0.0
  %945 = vmatpush1.msra.mxu0 0.0
  %946 = vmatprep.subr.mxu0 0.0
  %947 = vmatpush1.msra.mxu0 0.0
  %948 = vmatprep.subr.mxu0 0.0
  %949 = vmatpush1.msra.mxu0 0.0
  %950 = vmatprep.subr.mxu0 0.0
  %951 = vmatpush1.msra.mxu0 0.0
  %952 = vmatprep.mubr.f32.mxu0 0.0
  %953 = vmatmul.mubr.f32.gmra.mrb[0].mxu0 %v883
  %v954 = vpop.f32.mrb[0].mxu0
  %v955 = vadd.f32 0.0, %v954
  %v956 = vpop.f32.mrb[0].mxu0
  %957 = vmatprep.mubr.f32.mxu0 0.0
  %958 = vmatmul.mubr.f32.gmra.mrb[0].mxu0 %v886
  %v959 = vpop.f32.mrb[0].mxu0
  %v960 = vadd.f32 0.0, %v959
  %v961 = vpop.f32.mrb[0].mxu0
  %962 = vdwg.mxu0
  %v963 = vmul.f32 %v955, %v874
  %v964 = vmul.f32 %v960, %v875
  %v965 = vmul.f32 %v865, %v874
  %v966 = vmul.f32 %v867, %v875
  %969 = vrot.lane.b32.xlu0 %v551, 8
  %v970 = vpop.permute.xlu0 %969
  %971 = vrot.lane.b32.xlu0 %v552, 8
  %v972 = vpop.permute.xlu0 %971
  %977 = vrot.lane.b32.xlu0 %v757, 16
  %v978 = vpop.permute.xlu0 %977
  %979 = vrot.lane.b32.xlu0 %v758, 16
  %v980 = vpop.permute.xlu0 %979
  %985 = vrot.lane.b32.xlu0 %v963, 24
  %v986 = vpop.permute.xlu0 %985
  %987 = vrot.lane.b32.xlu0 %v964, 24
  %v988 = vpop.permute.xlu0 %987
  %v991 = vsel %vm149, %v345, %v970
  %v992 = vsel %vm149, %v346, %v972
  %v993 = vsel %vm237, %v991, %v978
  %v994 = vsel %vm237, %v992, %v980
  %vm995 = vcmask 195584
  %v996 = vsel %vm995, %v993, %v986
  %v997 = vsel %vm995, %v994, %v988
  %v998 = vlaneseq
  %v999 = vshrl.u32 %v998, 7
  %v1000 = vsub.s32 0, %v999
  %v1001 = vrot.slane %v142, %v1000
  %1006 = vrot.lane.b32.xlu0 %v138, 32
  %v1007 = vpop.permute.xlu0 %1006
  %1008 = vrot.lane.b32.xlu0 %v139, 32
  %v1009 = vpop.permute.xlu0 %1008
  %1010 = vrot.lane.b32.xlu0 %v140, 32
  %v1011 = vpop.permute.xlu0 %1010
  %1012 = vrot.lane.b32.xlu0 %v141, 32
  %v1013 = vpop.permute.xlu0 %1012
  %v1019 = vsel %vm40, %v996, 0
  %v1022 = vsel %vm40, %v997, 0
  %1024 = vmatprep.subr.mxu0 0.0
  %1025 = vmatpush1.msra.mxu0 %v1007
  %1026 = vmatprep.subr.mxu0 0.0
  %1027 = vmatpush1.msra.mxu0 %v1009
  %1028 = vmatprep.subr.mxu0 0.0
  %1029 = vmatpush1.msra.mxu0 %v1011
  %1030 = vmatprep.subr.mxu0 0.0
  %1031 = vmatpush1.msra.mxu0 %v1013
  %1032 = vmatprep.subr.mxu0 0.0
  %1033 = vmatpush1.msra.mxu0 0.0
  %1034 = vmatprep.subr.mxu0 0.0
  %1035 = vmatpush1.msra.mxu0 0.0
  %1036 = vmatprep.subr.mxu0 0.0
  %1037 = vmatpush1.msra.mxu0 0.0
  %1038 = vmatprep.subr.mxu0 0.0
  %1039 = vmatpush1.msra.mxu0 0.0
  %1040 = vmatprep.subr.mxu0 0.0
  %1041 = vmatpush1.msra.mxu0 0.0
  %1042 = vmatprep.subr.mxu0 0.0
  %1043 = vmatpush1.msra.mxu0 0.0
  %1044 = vmatprep.subr.mxu0 0.0
  %1045 = vmatpush1.msra.mxu0 0.0
  %1046 = vmatprep.subr.mxu0 0.0
  %1047 = vmatpush1.msra.mxu0 0.0
  %1048 = vmatprep.subr.mxu0 0.0
  %1049 = vmatpush1.msra.mxu0 0.0
  %1050 = vmatprep.subr.mxu0 0.0
  %1051 = vmatpush1.msra.mxu0 0.0
  %1052 = vmatprep.subr.mxu0 0.0
  %1053 = vmatpush1.msra.mxu0 0.0
  %1054 = vmatprep.subr.mxu0 0.0
  %1055 = vmatpush1.msra.mxu0 0.0
  %1056 = vmatprep.subr.mxu0 0.0
  %1057 = vmatpush1.msra.mxu0 0.0
  %1058 = vmatprep.subr.mxu0 0.0
  %1059 = vmatpush1.msra.mxu0 0.0
  %1060 = vmatprep.subr.mxu0 0.0
  %1061 = vmatpush1.msra.mxu0 0.0
  %1062 = vmatprep.subr.mxu0 0.0
  %1063 = vmatpush1.msra.mxu0 0.0
  %1064 = vmatprep.subr.mxu0 0.0
  %1065 = vmatpush1.msra.mxu0 0.0
  %1066 = vmatprep.subr.mxu0 0.0
  %1067 = vmatpush1.msra.mxu0 0.0
  %1068 = vmatprep.subr.mxu0 0.0
  %1069 = vmatpush1.msra.mxu0 0.0
  %1070 = vmatprep.subr.mxu0 0.0
  %1071 = vmatpush1.msra.mxu0 0.0
  %1072 = vmatprep.subr.mxu0 0.0
  %1073 = vmatpush1.msra.mxu0 0.0
  %1074 = vmatprep.subr.mxu0 0.0
  %1075 = vmatpush1.msra.mxu0 0.0
  %1076 = vmatprep.subr.mxu0 0.0
  %1077 = vmatpush1.msra.mxu0 0.0
  %1078 = vmatprep.subr.mxu0 0.0
  %1079 = vmatpush1.msra.mxu0 0.0
  %1080 = vmatprep.subr.mxu0 0.0
  %1081 = vmatpush1.msra.mxu0 0.0
  %1082 = vmatprep.subr.mxu0 0.0
  %1083 = vmatpush1.msra.mxu0 0.0
  %1084 = vmatprep.subr.mxu0 0.0
  %1085 = vmatpush1.msra.mxu0 0.0
  %1086 = vmatprep.subr.mxu0 0.0
  %1087 = vmatpush1.msra.mxu0 0.0
  %1088 = vmatprep.mubr.f32.mxu0 0.0
  %1089 = vmatmul.mubr.f32.gmra.mrb[0].mxu0 %v1019
  %v1090 = vpop.f32.mrb[0].mxu0
  %v1091 = vadd.f32 %v1001, %v1090
  %v1092 = vpop.f32.mrb[0].mxu0
  %1093 = vmatprep.mubr.f32.mxu0 0.0
  %1094 = vmatmul.mubr.f32.gmra.mrb[0].mxu0 %v1022
  %v1095 = vpop.f32.mrb[0].mxu0
  %v1096 = vadd.f32 %v1001, %v1095
  %v1097 = vpop.f32.mrb[0].mxu0
  %1098 = vdwg.mxu0
  %v1099 = vadd.f32 %v20, %v1091
  %v1100 = vadd.f32 %v21, %v1096
  %v1101 = vld [vmem:[%s2 + $0xa3] sm:$0x1]
  %v1102 = vsel %vm40, %v1099, 0.0
  %1103 = vadd.xlane.f32.xlu0 %v1102
  %v1104 = vpop.xlane.xlu0 %1103
  %v1105 = vsel %vm40, %v1100, 0.0
  %1106 = vadd.xlane.f32.xlu0 %v1105
  %v1107 = vpop.xlane.xlu0 %1106
  %v1108 = vrcp.pop 32.0
  %v1109 = vmul.f32 %v1104, %v1108
  %v1110 = vmul.f32 %v1107, %v1108
  %v1111 = vsub.f32 %v1099, %v1109
  %v1112 = vsub.f32 %v1100, %v1110
  %v1113 = vmul.f32 %v1111, %v1111
  %v1114 = vmul.f32 %v1112, %v1112
  %v1115 = vsel %vm40, %v1113, 0.0
  %1116 = vadd.xlane.f32.xlu0 %v1115
  %v1117 = vpop.xlane.xlu0 %1116
  %v1118 = vsel %vm40, %v1114, 0.0
  %1119 = vadd.xlane.f32.xlu0 %v1118
  %v1120 = vpop.xlane.xlu0 %1119
  %v1121 = vmul.f32 %v1117, %v1108
  %v1122 = vmul.f32 %v1120, %v1108
  %v1123 = vadd.f32 %v1121, 1e-05
  %v1124 = vadd.f32 %v1122, 1e-05
  %v1125 = vrsqrt.pop %v1123
  %v1126 = vrsqrt.pop %v1124
  %v1127 = vmul.f32 %v1111, %v1125
  %v1128 = vmul.f32 %v1112, %v1126
  %v1129 = vlaneseq
  %v1130 = vshrl.u32 %v1129, 7
  %v1131 = vsub.s32 0, %v1130
  %v1132 = vrot.slane %v1101, %v1131
  %1134 = vrot.lane.b32.xlu0 %v1132, 64
  %v1135 = vpop.permute.xlu0 %1134
  %v1137 = vmul.f32 %v1127, %v1135
  %v1138 = vmul.f32 %v1128, %v1135
  %1139 = vrot.lane.b32.xlu0 %v1132, 32
  %v1140 = vpop.permute.xlu0 %1139
  %v1142 = vadd.f32 %v1137, %v1140
  %v1143 = vadd.f32 %v1138, %v1140
  %v1144 = vld [vmem:[%s2 + $0xa1] sm:$0x1]
  %v1145 = vlaneseq
  %v1146 = vshrl.u32 %v1145, 7
  %v1147 = vsub.s32 0, %v1146
  %v1148 = vrot.slane %v1144, %v1147
  %v1150 = vsel %vm40, %v1142, 0
  %v1153 = vsel %vm40, %v1143, 0
  %1155 = vmatprep.subr.mxu0 0.0
  %1156 = vmatpush1.msra.mxu0 %v138
  %1157 = vmatprep.subr.mxu0 0.0
  %1158 = vmatpush1.msra.mxu0 %v139
  %1159 = vmatprep.subr.mxu0 0.0
  %1160 = vmatpush1.msra.mxu0 %v140
  %1161 = vmatprep.subr.mxu0 0.0
  %1162 = vmatpush1.msra.mxu0 %v141
  %1163 = vmatprep.subr.mxu0 0.0
  %1164 = vmatpush1.msra.mxu0 0.0
  %1165 = vmatprep.subr.mxu0 0.0
  %1166 = vmatpush1.msra.mxu0 0.0
  %1167 = vmatprep.subr.mxu0 0.0
  %1168 = vmatpush1.msra.mxu0 0.0
  %1169 = vmatprep.subr.mxu0 0.0
  %1170 = vmatpush1.msra.mxu0 0.0
  %1171 = vmatprep.subr.mxu0 0.0
  %1172 = vmatpush1.msra.mxu0 0.0
  %1173 = vmatprep.subr.mxu0 0.0
  %1174 = vmatpush1.msra.mxu0 0.0
  %1175 = vmatprep.subr.mxu0 0.0
  %1176 = vmatpush1.msra.mxu0 0.0
  %1177 = vmatprep.subr.mxu0 0.0
  %1178 = vmatpush1.msra.mxu0 0.0
  %1179 = vmatprep.subr.mxu0 0.0
  %1180 = vmatpush1.msra.mxu0 0.0
  %1181 = vmatprep.subr.mxu0 0.0
  %1182 = vmatpush1.msra.mxu0 0.0
  %1183 = vmatprep.subr.mxu0 0.0
  %1184 = vmatpush1.msra.mxu0 0.0
  %1185 = vmatprep.subr.mxu0 0.0
  %1186 = vmatpush1.msra.mxu0 0.0
  %1187 = vmatprep.subr.mxu0 0.0
  %1188 = vmatpush1.msra.mxu0 0.0
  %1189 = vmatprep.subr.mxu0 0.0
  %1190 = vmatpush1.msra.mxu0 0.0
  %1191 = vmatprep.subr.mxu0 0.0
  %1192 = vmatpush1.msra.mxu0 0.0
  %1193 = vmatprep.subr.mxu0 0.0
  %1194 = vmatpush1.msra.mxu0 0.0
  %1195 = vmatprep.subr.mxu0 0.0
  %1196 = vmatpush1.msra.mxu0 0.0
  %1197 = vmatprep.subr.mxu0 0.0
  %1198 = vmatpush1.msra.mxu0 0.0
  %1199 = vmatprep.subr.mxu0 0.0
  %1200 = vmatpush1.msra.mxu0 0.0
  %1201 = vmatprep.subr.mxu0 0.0
  %1202 = vmatpush1.msra.mxu0 0.0
  %1203 = vmatprep.subr.mxu0 0.0
  %1204 = vmatpush1.msra.mxu0 0.0
  %1205 = vmatprep.subr.mxu0 0.0
  %1206 = vmatpush1.msra.mxu0 0.0
  %1207 = vmatprep.subr.mxu0 0.0
  %1208 = vmatpush1.msra.mxu0 0.0
  %1209 = vmatprep.subr.mxu0 0.0
  %1210 = vmatpush1.msra.mxu0 0.0
  %1211 = vmatprep.subr.mxu0 0.0
  %1212 = vmatpush1.msra.mxu0 0.0
  %1213 = vmatprep.subr.mxu0 0.0
  %1214 = vmatpush1.msra.mxu0 0.0
  %1215 = vmatprep.subr.mxu0 0.0
  %1216 = vmatpush1.msra.mxu0 0.0
  %1217 = vmatprep.subr.mxu0 0.0
  %1218 = vmatpush1.msra.mxu0 0.0
  %1219 = vmatprep.mubr.f32.mxu0 0.0
  %1220 = vmatmul.mubr.f32.gmra.mrb[0].mxu0 %v1150
  %v1221 = vpop.f32.mrb[0].mxu0
  %v1222 = vadd.f32 %v1148, %v1221
  %v1223 = vpop.f32.mrb[0].mxu0
  %1224 = vmatprep.mubr.f32.mxu0 0.0
  %1225 = vmatmul.mubr.f32.gmra.mrb[0].mxu0 %v1153
  %v1226 = vpop.f32.mrb[0].mxu0
  %v1227 = vadd.f32 %v1148, %v1226
  %v1228 = vpop.f32.mrb[0].mxu0
  %1229 = vdwg.mxu0
  %v1231 = vsel %vm40, %v24, 0
  %v1234 = vsel %vm40, %v25, 0
  %v1237 = vsel %vm40, %v26, 0
  %1239 = vmatprep.subr.mxu0 0.0
  %1240 = vmatpush1.msra.mxu0 %v138
  %1241 = vmatprep.subr.mxu0 0.0
  %1242 = vmatpush1.msra.mxu0 %v139
  %1243 = vmatprep.subr.mxu0 0.0
  %1244 = vmatpush1.msra.mxu0 %v140
  %1245 = vmatprep.subr.mxu0 0.0
  %1246 = vmatpush1.msra.mxu0 %v141
  %1247 = vmatprep.subr.mxu0 0.0
  %1248 = vmatpush1.msra.mxu0 0.0
  %1249 = vmatprep.subr.mxu0 0.0
  %1250 = vmatpush1.msra.mxu0 0.0
  %1251 = vmatprep.subr.mxu0 0.0
  %1252 = vmatpush1.msra.mxu0 0.0
  %1253 = vmatprep.subr.mxu0 0.0
  %1254 = vmatpush1.msra.mxu0 0.0
  %1255 = vmatprep.subr.mxu0 0.0
  %1256 = vmatpush1.msra.mxu0 0.0
  %1257 = vmatprep.subr.mxu0 0.0
  %1258 = vmatpush1.msra.mxu0 0.0
  %1259 = vmatprep.subr.mxu0 0.0
  %1260 = vmatpush1.msra.mxu0 0.0
  %1261 = vmatprep.subr.mxu0 0.0
  %1262 = vmatpush1.msra.mxu0 0.0
  %1263 = vmatprep.subr.mxu0 0.0
  %1264 = vmatpush1.msra.mxu0 0.0
  %1265 = vmatprep.subr.mxu0 0.0
  %1266 = vmatpush1.msra.mxu0 0.0
  %1267 = vmatprep.subr.mxu0 0.0
  %1268 = vmatpush1.msra.mxu0 0.0
  %1269 = vmatprep.subr.mxu0 0.0
  %1270 = vmatpush1.msra.mxu0 0.0
  %1271 = vmatprep.subr.mxu0 0.0
  %1272 = vmatpush1.msra.mxu0 0.0
  %1273 = vmatprep.subr.mxu0 0.0
  %1274 = vmatpush1.msra.mxu0 0.0
  %1275 = vmatprep.subr.mxu0 0.0
  %1276 = vmatpush1.msra.mxu0 0.0
  %1277 = vmatprep.subr.mxu0 0.0
  %1278 = vmatpush1.msra.mxu0 0.0
  %1279 = vmatprep.subr.mxu0 0.0
  %1280 = vmatpush1.msra.mxu0 0.0
  %1281 = vmatprep.subr.mxu0 0.0
  %1282 = vmatpush1.msra.mxu0 0.0
  %1283 = vmatprep.subr.mxu0 0.0
  %1284 = vmatpush1.msra.mxu0 0.0
  %1285 = vmatprep.subr.mxu0 0.0
  %1286 = vmatpush1.msra.mxu0 0.0
  %1287 = vmatprep.subr.mxu0 0.0
  %1288 = vmatpush1.msra.mxu0 0.0
  %1289 = vmatprep.subr.mxu0 0.0
  %1290 = vmatpush1.msra.mxu0 0.0
  %1291 = vmatprep.subr.mxu0 0.0
  %1292 = vmatpush1.msra.mxu0 0.0
  %1293 = vmatprep.subr.mxu0 0.0
  %1294 = vmatpush1.msra.mxu0 0.0
  %1295 = vmatprep.subr.mxu0 0.0
  %1296 = vmatpush1.msra.mxu0 0.0
  %1297 = vmatprep.subr.mxu0 0.0
  %1298 = vmatpush1.msra.mxu0 0.0
  %1299 = vmatprep.subr.mxu0 0.0
  %1300 = vmatpush1.msra.mxu0 0.0
  %1301 = vmatprep.subr.mxu0 0.0
  %1302 = vmatpush1.msra.mxu0 0.0
  %1303 = vmatprep.mubr.f32.mxu0 0.0
  %1304 = vmatmul.mubr.f32.gmra.mrb[0].mxu0 %v1231
  %v1305 = vpop.f32.mrb[0].mxu0
  %v1306 = vadd.f32 %v1148, %v1305
  %v1307 = vpop.f32.mrb[0].mxu0
  %1308 = vmatprep.mubr.f32.mxu0 0.0
  %1309 = vmatmul.mubr.f32.gmra.mrb[0].mxu0 %v1234
  %v1310 = vpop.f32.mrb[0].mxu0
  %v1311 = vadd.f32 %v1148, %v1310
  %v1312 = vpop.f32.mrb[0].mxu0
  %1313 = vmatprep.mubr.f32.mxu0 0.0
  %1314 = vmatmul.mubr.f32.gmra.mrb[0].mxu0 %v1237
  %v1315 = vpop.f32.mrb[0].mxu0
  %v1316 = vadd.f32 %v1148, %v1315
  %v1317 = vpop.f32.mrb[0].mxu0
  %1318 = vdwg.mxu0
  %v1319 = vld [vmem:[%s2 + $0x40] sm:$0xff]
  %v1320 = vld [vmem:[%s2 + $0x48] sm:$0xff]
  %v1321 = vld [vmem:[%s2 + $0x50] sm:$0xff]
  %v1322 = vld [vmem:[%s2 + $0x58] sm:$0xff]
  %1326 = vrot.lane.b32.xlu0 %v1306, 96
  %v1327 = vpop.permute.xlu0 %1326
  %1328 = vrot.lane.b32.xlu0 %v1311, 96
  %v1329 = vpop.permute.xlu0 %1328
  %1330 = vrot.lane.b32.xlu0 %v1316, 96
  %v1331 = vpop.permute.xlu0 %1330
  %v1333 = vsel %vm149, %v1222, 0
  %v1336 = vsel %vm149, %v1227, 0
  %v1338 = vsel %vm149, %v1327, 0
  %v1340 = vsel %vm149, %v1329, 0
  %v1342 = vsel %vm149, %v1331, 0
  %1344 = vmatprep.subr.mxu0 0.0
  %1345 = vmatpush1.xpose.msra.mxu0 %v1338
  %1346 = vmatprep.subr.mxu0 0.0
  %1347 = vmatpush1.xpose.msra.mxu0 %v1340
  %1348 = vmatprep.subr.mxu0 0.0
  %1349 = vmatpush1.xpose.msra.mxu0 %v1342
  %1350 = vmatprep.subr.mxu0 0.0
  %1351 = vmatpush1.xpose.msra.mxu0 0.0
  %1352 = vmatprep.subr.mxu0 0.0
  %1353 = vmatpush1.xpose.msra.mxu0 0.0
  %1354 = vmatprep.subr.mxu0 0.0
  %1355 = vmatpush1.xpose.msra.mxu0 0.0
  %1356 = vmatprep.subr.mxu0 0.0
  %1357 = vmatpush1.xpose.msra.mxu0 0.0
  %1358 = vmatprep.subr.mxu0 0.0
  %1359 = vmatpush1.xpose.msra.mxu0 0.0
  %1360 = vmatprep.subr.mxu0 0.0
  %1361 = vmatpush1.xpose.msra.mxu0 0.0
  %1362 = vmatprep.subr.mxu0 0.0
  %1363 = vmatpush1.xpose.msra.mxu0 0.0
  %1364 = vmatprep.subr.mxu0 0.0
  %1365 = vmatpush1.xpose.msra.mxu0 0.0
  %1366 = vmatprep.subr.mxu0 0.0
  %1367 = vmatpush1.xpose.msra.mxu0 0.0
  %1368 = vmatprep.subr.mxu0 0.0
  %1369 = vmatpush1.xpose.msra.mxu0 0.0
  %1370 = vmatprep.subr.mxu0 0.0
  %1371 = vmatpush1.xpose.msra.mxu0 0.0
  %1372 = vmatprep.subr.mxu0 0.0
  %1373 = vmatpush1.xpose.msra.mxu0 0.0
  %1374 = vmatprep.subr.mxu0 0.0
  %1375 = vmatpush1.xpose.msra.mxu0 0.0
  %1376 = vmatprep.subr.mxu0 0.0
  %1377 = vmatpush1.xpose.msra.mxu0 0.0
  %1378 = vmatprep.subr.mxu0 0.0
  %1379 = vmatpush1.xpose.msra.mxu0 0.0
  %1380 = vmatprep.subr.mxu0 0.0
  %1381 = vmatpush1.xpose.msra.mxu0 0.0
  %1382 = vmatprep.subr.mxu0 0.0
  %1383 = vmatpush1.xpose.msra.mxu0 0.0
  %1384 = vmatprep.subr.mxu0 0.0
  %1385 = vmatpush1.xpose.msra.mxu0 0.0
  %1386 = vmatprep.subr.mxu0 0.0
  %1387 = vmatpush1.xpose.msra.mxu0 0.0
  %1388 = vmatprep.subr.mxu0 0.0
  %1389 = vmatpush1.xpose.msra.mxu0 0.0
  %1390 = vmatprep.subr.mxu0 0.0
  %1391 = vmatpush1.xpose.msra.mxu0 0.0
  %1392 = vmatprep.subr.mxu0 0.0
  %1393 = vmatpush1.xpose.msra.mxu0 0.0
  %1394 = vmatprep.subr.mxu0 0.0
  %1395 = vmatpush1.xpose.msra.mxu0 0.0
  %1396 = vmatprep.subr.mxu0 0.0
  %1397 = vmatpush1.xpose.msra.mxu0 0.0
  %1398 = vmatprep.subr.mxu0 0.0
  %1399 = vmatpush1.xpose.msra.mxu0 0.0
  %1400 = vmatprep.subr.mxu0 0.0
  %1401 = vmatpush1.xpose.msra.mxu0 0.0
  %1402 = vmatprep.subr.mxu0 0.0
  %1403 = vmatpush1.xpose.msra.mxu0 0.0
  %1404 = vmatprep.subr.mxu0 0.0
  %1405 = vmatpush1.xpose.msra.mxu0 0.0
  %1406 = vmatprep.subr.mxu0 0.0
  %1407 = vmatpush1.xpose.msra.mxu0 0.0
  %1408 = vmatprep.mubr.f32.mxu0 0.0
  %1409 = vmatmul.mubr.f32.gmra.mrb[0].mxu0 %v1333
  %v1410 = vpop.f32.mrb[0].mxu0
  %v1411 = vadd.f32 0.0, %v1410
  %v1412 = vpop.f32.mrb[0].mxu0
  %1413 = vmatprep.mubr.f32.mxu0 0.0
  %1414 = vmatmul.mubr.f32.gmra.mrb[0].mxu0 %v1336
  %v1415 = vpop.f32.mrb[0].mxu0
  %v1416 = vadd.f32 0.0, %v1415
  %v1417 = vpop.f32.mrb[0].mxu0
  %1418 = vdwg.mxu0
  %v1419 = vmul.f32 %v1411, 0.35355338
  %v1420 = vmul.f32 %v1416, 0.35355338
  %v1421 = vadd.f32 %v1419, %v29
  %v1422 = vadd.f32 %v1420, %v30
  %v1423 = vsel %vm995, %v1421, -inf
  %1424 = vmax.xlane.f32.xlu0 %v1423
  %v1425 = vpop.xlane.xlu0 %1424
  %v1426 = vsel %vm995, %v1422, -inf
  %1427 = vmax.xlane.f32.xlu0 %v1426
  %v1428 = vpop.xlane.xlu0 %1427
  %v1429 = vsub.f32 %v1421, %v1425
  %v1430 = vsub.f32 %v1422, %v1428
  %v1431 = vmul.f32 %v1429, 1.442695
  %v1432 = vpow.pop %v1431
  %v1433 = vmul.f32 %v1430, 1.442695
  %v1434 = vpow.pop %v1433
  %v1435 = vsel %vm995, %v1432, 0.0
  %1436 = vadd.xlane.f32.xlu0 %v1435
  %v1437 = vpop.xlane.xlu0 %1436
  %v1438 = vsel %vm995, %v1434, 0.0
  %1439 = vadd.xlane.f32.xlu0 %v1438
  %v1440 = vpop.xlane.xlu0 %1439
  %v1441 = vrcp.pop %v1437
  %v1442 = vrcp.pop %v1440
  %1443 = vrot.lane.b32.xlu0 %v1306, 64
  %v1444 = vpop.permute.xlu0 %1443
  %1445 = vrot.lane.b32.xlu0 %v1311, 64
  %v1446 = vpop.permute.xlu0 %1445
  %1447 = vrot.lane.b32.xlu0 %v1316, 64
  %v1448 = vpop.permute.xlu0 %1447
  %v1453 = vsel %vm995, %v1432, 0
  %v1456 = vsel %vm995, %v1434, 0
  %1458 = vmatprep.subr.mxu0 0.0
  %1459 = vmatpush1.msra.mxu0 %v1444
  %1460 = vmatprep.subr.mxu0 0.0
  %1461 = vmatpush1.msra.mxu0 %v1446
  %1462 = vmatprep.subr.mxu0 0.0
  %1463 = vmatpush1.msra.mxu0 %v1448
  %1464 = vmatprep.subr.mxu0 0.0
  %1465 = vmatpush1.msra.mxu0 0.0
  %1466 = vmatprep.subr.mxu0 0.0
  %1467 = vmatpush1.msra.mxu0 0.0
  %1468 = vmatprep.subr.mxu0 0.0
  %1469 = vmatpush1.msra.mxu0 0.0
  %1470 = vmatprep.subr.mxu0 0.0
  %1471 = vmatpush1.msra.mxu0 0.0
  %1472 = vmatprep.subr.mxu0 0.0
  %1473 = vmatpush1.msra.mxu0 0.0
  %1474 = vmatprep.subr.mxu0 0.0
  %1475 = vmatpush1.msra.mxu0 0.0
  %1476 = vmatprep.subr.mxu0 0.0
  %1477 = vmatpush1.msra.mxu0 0.0
  %1478 = vmatprep.subr.mxu0 0.0
  %1479 = vmatpush1.msra.mxu0 0.0
  %1480 = vmatprep.subr.mxu0 0.0
  %1481 = vmatpush1.msra.mxu0 0.0
  %1482 = vmatprep.subr.mxu0 0.0
  %1483 = vmatpush1.msra.mxu0 0.0
  %1484 = vmatprep.subr.mxu0 0.0
  %1485 = vmatpush1.msra.mxu0 0.0
  %1486 = vmatprep.subr.mxu0 0.0
  %1487 = vmatpush1.msra.mxu0 0.0
  %1488 = vmatprep.subr.mxu0 0.0
  %1489 = vmatpush1.msra.mxu0 0.0
  %1490 = vmatprep.subr.mxu0 0.0
  %1491 = vmatpush1.msra.mxu0 0.0
  %1492 = vmatprep.subr.mxu0 0.0
  %1493 = vmatpush1.msra.mxu0 0.0
  %1494 = vmatprep.subr.mxu0 0.0
  %1495 = vmatpush1.msra.mxu0 0.0
  %1496 = vmatprep.subr.mxu0 0.0
  %1497 = vmatpush1.msra.mxu0 0.0
  %1498 = vmatprep.subr.mxu0 0.0
  %1499 = vmatpush1.msra.mxu0 0.0
  %1500 = vmatprep.subr.mxu0 0.0
  %1501 = vmatpush1.msra.mxu0 0.0
  %1502 = vmatprep.subr.mxu0 0.0
  %1503 = vmatpush1.msra.mxu0 0.0
  %1504 = vmatprep.subr.mxu0 0.0
  %1505 = vmatpush1.msra.mxu0 0.0
  %1506 = vmatprep.subr.mxu0 0.0
  %1507 = vmatpush1.msra.mxu0 0.0
  %1508 = vmatprep.subr.mxu0 0.0
  %1509 = vmatpush1.msra.mxu0 0.0
  %1510 = vmatprep.subr.mxu0 0.0
  %1511 = vmatpush1.msra.mxu0 0.0
  %1512 = vmatprep.subr.mxu0 0.0
  %1513 = vmatpush1.msra.mxu0 0.0
  %1514 = vmatprep.subr.mxu0 0.0
  %1515 = vmatpush1.msra.mxu0 0.0
  %1516 = vmatprep.subr.mxu0 0.0
  %1517 = vmatpush1.msra.mxu0 0.0
  %1518 = vmatprep.subr.mxu0 0.0
  %1519 = vmatpush1.msra.mxu0 0.0
  %1520 = vmatprep.subr.mxu0 0.0
  %1521 = vmatpush1.msra.mxu0 0.0
  %1522 = vmatprep.mubr.f32.mxu0 0.0
  %1523 = vmatmul.mubr.f32.gmra.mrb[0].mxu0 %v1453
  %v1524 = vpop.f32.mrb[0].mxu0
  %v1525 = vadd.f32 0.0, %v1524
  %v1526 = vpop.f32.mrb[0].mxu0
  %1527 = vmatprep.mubr.f32.mxu0 0.0
  %1528 = vmatmul.mubr.f32.gmra.mrb[0].mxu0 %v1456
  %v1529 = vpop.f32.mrb[0].mxu0
  %v1530 = vadd.f32 0.0, %v1529
  %v1531 = vpop.f32.mrb[0].mxu0
  %1532 = vdwg.mxu0
  %v1533 = vmul.f32 %v1525, %v1441
  %v1534 = vmul.f32 %v1530, %v1442
  %v1535 = vmul.f32 %v1432, %v1441
  %v1536 = vmul.f32 %v1434, %v1442
  %1537 = vrot.lane.b32.xlu0 %v1222, 120
  %v1538 = vpop.permute.xlu0 %1537
  %1539 = vrot.lane.b32.xlu0 %v1227, 120
  %v1540 = vpop.permute.xlu0 %1539
  %1541 = vrot.lane.b32.xlu0 %v1306, 88
  %v1542 = vpop.permute.xlu0 %1541
  %1543 = vrot.lane.b32.xlu0 %v1311, 88
  %v1544 = vpop.permute.xlu0 %1543
  %1545 = vrot.lane.b32.xlu0 %v1316, 88
  %v1546 = vpop.permute.xlu0 %1545
  %v1547 = vsel %vm149, %v1538, 0
  %v1549 = vsel %vm149, %v1540, 0
  %v1551 = vsel %vm149, %v1542, 0
  %v1553 = vsel %vm149, %v1544, 0
  %v1555 = vsel %vm149, %v1546, 0
  %1557 = vmatprep.subr.mxu0 0.0
  %1558 = vmatpush1.xpose.msra.mxu0 %v1551
  %1559 = vmatprep.subr.mxu0 0.0
  %1560 = vmatpush1.xpose.msra.mxu0 %v1553
  %1561 = vmatprep.subr.mxu0 0.0
  %1562 = vmatpush1.xpose.msra.mxu0 %v1555
  %1563 = vmatprep.subr.mxu0 0.0
  %1564 = vmatpush1.xpose.msra.mxu0 0.0
  %1565 = vmatprep.subr.mxu0 0.0
  %1566 = vmatpush1.xpose.msra.mxu0 0.0
  %1567 = vmatprep.subr.mxu0 0.0
  %1568 = vmatpush1.xpose.msra.mxu0 0.0
  %1569 = vmatprep.subr.mxu0 0.0
  %1570 = vmatpush1.xpose.msra.mxu0 0.0
  %1571 = vmatprep.subr.mxu0 0.0
  %1572 = vmatpush1.xpose.msra.mxu0 0.0
  %1573 = vmatprep.subr.mxu0 0.0
  %1574 = vmatpush1.xpose.msra.mxu0 0.0
  %1575 = vmatprep.subr.mxu0 0.0
  %1576 = vmatpush1.xpose.msra.mxu0 0.0
  %1577 = vmatprep.subr.mxu0 0.0
  %1578 = vmatpush1.xpose.msra.mxu0 0.0
  %1579 = vmatprep.subr.mxu0 0.0
  %1580 = vmatpush1.xpose.msra.mxu0 0.0
  %1581 = vmatprep.subr.mxu0 0.0
  %1582 = vmatpush1.xpose.msra.mxu0 0.0
  %1583 = vmatprep.subr.mxu0 0.0
  %1584 = vmatpush1.xpose.msra.mxu0 0.0
  %1585 = vmatprep.subr.mxu0 0.0
  %1586 = vmatpush1.xpose.msra.mxu0 0.0
  %1587 = vmatprep.subr.mxu0 0.0
  %1588 = vmatpush1.xpose.msra.mxu0 0.0
  %1589 = vmatprep.subr.mxu0 0.0
  %1590 = vmatpush1.xpose.msra.mxu0 0.0
  %1591 = vmatprep.subr.mxu0 0.0
  %1592 = vmatpush1.xpose.msra.mxu0 0.0
  %1593 = vmatprep.subr.mxu0 0.0
  %1594 = vmatpush1.xpose.msra.mxu0 0.0
  %1595 = vmatprep.subr.mxu0 0.0
  %1596 = vmatpush1.xpose.msra.mxu0 0.0
  %1597 = vmatprep.subr.mxu0 0.0
  %1598 = vmatpush1.xpose.msra.mxu0 0.0
  %1599 = vmatprep.subr.mxu0 0.0
  %1600 = vmatpush1.xpose.msra.mxu0 0.0
  %1601 = vmatprep.subr.mxu0 0.0
  %1602 = vmatpush1.xpose.msra.mxu0 0.0
  %1603 = vmatprep.subr.mxu0 0.0
  %1604 = vmatpush1.xpose.msra.mxu0 0.0
  %1605 = vmatprep.subr.mxu0 0.0
  %1606 = vmatpush1.xpose.msra.mxu0 0.0
  %1607 = vmatprep.subr.mxu0 0.0
  %1608 = vmatpush1.xpose.msra.mxu0 0.0
  %1609 = vmatprep.subr.mxu0 0.0
  %1610 = vmatpush1.xpose.msra.mxu0 0.0
  %1611 = vmatprep.subr.mxu0 0.0
  %1612 = vmatpush1.xpose.msra.mxu0 0.0
  %1613 = vmatprep.subr.mxu0 0.0
  %1614 = vmatpush1.xpose.msra.mxu0 0.0
  %1615 = vmatprep.subr.mxu0 0.0
  %1616 = vmatpush1.xpose.msra.mxu0 0.0
  %1617 = vmatprep.subr.mxu0 0.0
  %1618 = vmatpush1.xpose.msra.mxu0 0.0
  %1619 = vmatprep.subr.mxu0 0.0
  %1620 = vmatpush1.xpose.msra.mxu0 0.0
  %1621 = vmatprep.mubr.f32.mxu0 0.0
  %1622 = vmatmul.mubr.f32.gmra.mrb[0].mxu0 %v1547
  %v1623 = vpop.f32.mrb[0].mxu0
  %v1624 = vadd.f32 0.0, %v1623
  %v1625 = vpop.f32.mrb[0].mxu0
  %1626 = vmatprep.mubr.f32.mxu0 0.0
  %1627 = vmatmul.mubr.f32.gmra.mrb[0].mxu0 %v1549
  %v1628 = vpop.f32.mrb[0].mxu0
  %v1629 = vadd.f32 0.0, %v1628
  %v1630 = vpop.f32.mrb[0].mxu0
  %1631 = vdwg.mxu0
  %v1632 = vmul.f32 %v1624, 0.35355338
  %v1633 = vmul.f32 %v1629, 0.35355338
  %v1634 = vadd.f32 %v1632, %v29
  %v1635 = vadd.f32 %v1633, %v30
  %v1636 = vsel %vm995, %v1634, -inf
  %1637 = vmax.xlane.f32.xlu0 %v1636
  %v1638 = vpop.xlane.xlu0 %1637
  %v1639 = vsel %vm995, %v1635, -inf
  %1640 = vmax.xlane.f32.xlu0 %v1639
  %v1641 = vpop.xlane.xlu0 %1640
  %v1642 = vsub.f32 %v1634, %v1638
  %v1643 = vsub.f32 %v1635, %v1641
  %v1644 = vmul.f32 %v1642, 1.442695
  %v1645 = vpow.pop %v1644
  %v1646 = vmul.f32 %v1643, 1.442695
  %v1647 = vpow.pop %v1646
  %v1648 = vsel %vm995, %v1645, 0.0
  %1649 = vadd.xlane.f32.xlu0 %v1648
  %v1650 = vpop.xlane.xlu0 %1649
  %v1651 = vsel %vm995, %v1647, 0.0
  %1652 = vadd.xlane.f32.xlu0 %v1651
  %v1653 = vpop.xlane.xlu0 %1652
  %v1654 = vrcp.pop %v1650
  %v1655 = vrcp.pop %v1653
  %1656 = vrot.lane.b32.xlu0 %v1306, 56
  %v1657 = vpop.permute.xlu0 %1656
  %1658 = vrot.lane.b32.xlu0 %v1311, 56
  %v1659 = vpop.permute.xlu0 %1658
  %1660 = vrot.lane.b32.xlu0 %v1316, 56
  %v1661 = vpop.permute.xlu0 %1660
  %v1666 = vsel %vm995, %v1645, 0
  %v1669 = vsel %vm995, %v1647, 0
  %1671 = vmatprep.subr.mxu0 0.0
  %1672 = vmatpush1.msra.mxu0 %v1657
  %1673 = vmatprep.subr.mxu0 0.0
  %1674 = vmatpush1.msra.mxu0 %v1659
  %1675 = vmatprep.subr.mxu0 0.0
  %1676 = vmatpush1.msra.mxu0 %v1661
  %1677 = vmatprep.subr.mxu0 0.0
  %1678 = vmatpush1.msra.mxu0 0.0
  %1679 = vmatprep.subr.mxu0 0.0
  %1680 = vmatpush1.msra.mxu0 0.0
  %1681 = vmatprep.subr.mxu0 0.0
  %1682 = vmatpush1.msra.mxu0 0.0
  %1683 = vmatprep.subr.mxu0 0.0
  %1684 = vmatpush1.msra.mxu0 0.0
  %1685 = vmatprep.subr.mxu0 0.0
  %1686 = vmatpush1.msra.mxu0 0.0
  %1687 = vmatprep.subr.mxu0 0.0
  %1688 = vmatpush1.msra.mxu0 0.0
  %1689 = vmatprep.subr.mxu0 0.0
  %1690 = vmatpush1.msra.mxu0 0.0
  %1691 = vmatprep.subr.mxu0 0.0
  %1692 = vmatpush1.msra.mxu0 0.0
  %1693 = vmatprep.subr.mxu0 0.0
  %1694 = vmatpush1.msra.mxu0 0.0
  %1695 = vmatprep.subr.mxu0 0.0
  %1696 = vmatpush1.msra.mxu0 0.0
  %1697 = vmatprep.subr.mxu0 0.0
  %1698 = vmatpush1.msra.mxu0 0.0
  %1699 = vmatprep.subr.mxu0 0.0
  %1700 = vmatpush1.msra.mxu0 0.0
  %1701 = vmatprep.subr.mxu0 0.0
  %1702 = vmatpush1.msra.mxu0 0.0
  %1703 = vmatprep.subr.mxu0 0.0
  %1704 = vmatpush1.msra.mxu0 0.0
  %1705 = vmatprep.subr.mxu0 0.0
  %1706 = vmatpush1.msra.mxu0 0.0
  %1707 = vmatprep.subr.mxu0 0.0
  %1708 = vmatpush1.msra.mxu0 0.0
  %1709 = vmatprep.subr.mxu0 0.0
  %1710 = vmatpush1.msra.mxu0 0.0
  %1711 = vmatprep.subr.mxu0 0.0
  %1712 = vmatpush1.msra.mxu0 0.0
  %1713 = vmatprep.subr.mxu0 0.0
  %1714 = vmatpush1.msra.mxu0 0.0
  %1715 = vmatprep.subr.mxu0 0.0
  %1716 = vmatpush1.msra.mxu0 0.0
  %1717 = vmatprep.subr.mxu0 0.0
  %1718 = vmatpush1.msra.mxu0 0.0
  %1719 = vmatprep.subr.mxu0 0.0
  %1720 = vmatpush1.msra.mxu0 0.0
  %1721 = vmatprep.subr.mxu0 0.0
  %1722 = vmatpush1.msra.mxu0 0.0
  %1723 = vmatprep.subr.mxu0 0.0
  %1724 = vmatpush1.msra.mxu0 0.0
  %1725 = vmatprep.subr.mxu0 0.0
  %1726 = vmatpush1.msra.mxu0 0.0
  %1727 = vmatprep.subr.mxu0 0.0
  %1728 = vmatpush1.msra.mxu0 0.0
  %1729 = vmatprep.subr.mxu0 0.0
  %1730 = vmatpush1.msra.mxu0 0.0
  %1731 = vmatprep.subr.mxu0 0.0
  %1732 = vmatpush1.msra.mxu0 0.0
  %1733 = vmatprep.subr.mxu0 0.0
  %1734 = vmatpush1.msra.mxu0 0.0
  %1735 = vmatprep.mubr.f32.mxu0 0.0
  %1736 = vmatmul.mubr.f32.gmra.mrb[0].mxu0 %v1666
  %v1737 = vpop.f32.mrb[0].mxu0
  %v1738 = vadd.f32 0.0, %v1737
  %v1739 = vpop.f32.mrb[0].mxu0
  %1740 = vmatprep.mubr.f32.mxu0 0.0
  %1741 = vmatmul.mubr.f32.gmra.mrb[0].mxu0 %v1669
  %v1742 = vpop.f32.mrb[0].mxu0
  %v1743 = vadd.f32 0.0, %v1742
  %v1744 = vpop.f32.mrb[0].mxu0
  %1745 = vdwg.mxu0
  %v1746 = vmul.f32 %v1738, %v1654
  %v1747 = vmul.f32 %v1743, %v1655
  %v1748 = vmul.f32 %v1645, %v1654
  %v1749 = vmul.f32 %v1647, %v1655
  %1750 = vrot.lane.b32.xlu0 %v1222, 112
  %v1751 = vpop.permute.xlu0 %1750
  %1752 = vrot.lane.b32.xlu0 %v1227, 112
  %v1753 = vpop.permute.xlu0 %1752
  %1754 = vrot.lane.b32.xlu0 %v1306, 80
  %v1755 = vpop.permute.xlu0 %1754
  %1756 = vrot.lane.b32.xlu0 %v1311, 80
  %v1757 = vpop.permute.xlu0 %1756
  %1758 = vrot.lane.b32.xlu0 %v1316, 80
  %v1759 = vpop.permute.xlu0 %1758
  %v1760 = vsel %vm149, %v1751, 0
  %v1762 = vsel %vm149, %v1753, 0
  %v1764 = vsel %vm149, %v1755, 0
  %v1766 = vsel %vm149, %v1757, 0
  %v1768 = vsel %vm149, %v1759, 0
  %1770 = vmatprep.subr.mxu0 0.0
  %1771 = vmatpush1.xpose.msra.mxu0 %v1764
  %1772 = vmatprep.subr.mxu0 0.0
  %1773 = vmatpush1.xpose.msra.mxu0 %v1766
  %1774 = vmatprep.subr.mxu0 0.0
  %1775 = vmatpush1.xpose.msra.mxu0 %v1768
  %1776 = vmatprep.subr.mxu0 0.0
  %1777 = vmatpush1.xpose.msra.mxu0 0.0
  %1778 = vmatprep.subr.mxu0 0.0
  %1779 = vmatpush1.xpose.msra.mxu0 0.0
  %1780 = vmatprep.subr.mxu0 0.0
  %1781 = vmatpush1.xpose.msra.mxu0 0.0
  %1782 = vmatprep.subr.mxu0 0.0
  %1783 = vmatpush1.xpose.msra.mxu0 0.0
  %1784 = vmatprep.subr.mxu0 0.0
  %1785 = vmatpush1.xpose.msra.mxu0 0.0
  %1786 = vmatprep.subr.mxu0 0.0
  %1787 = vmatpush1.xpose.msra.mxu0 0.0
  %1788 = vmatprep.subr.mxu0 0.0
  %1789 = vmatpush1.xpose.msra.mxu0 0.0
  %1790 = vmatprep.subr.mxu0 0.0
  %1791 = vmatpush1.xpose.msra.mxu0 0.0
  %1792 = vmatprep.subr.mxu0 0.0
  %1793 = vmatpush1.xpose.msra.mxu0 0.0
  %1794 = vmatprep.subr.mxu0 0.0
  %1795 = vmatpush1.xpose.msra.mxu0 0.0
  %1796 = vmatprep.subr.mxu0 0.0
  %1797 = vmatpush1.xpose.msra.mxu0 0.0
  %1798 = vmatprep.subr.mxu0 0.0
  %1799 = vmatpush1.xpose.msra.mxu0 0.0
  %1800 = vmatprep.subr.mxu0 0.0
  %1801 = vmatpush1.xpose.msra.mxu0 0.0
  %1802 = vmatprep.subr.mxu0 0.0
  %1803 = vmatpush1.xpose.msra.mxu0 0.0
  %1804 = vmatprep.subr.mxu0 0.0
  %1805 = vmatpush1.xpose.msra.mxu0 0.0
  %1806 = vmatprep.subr.mxu0 0.0
  %1807 = vmatpush1.xpose.msra.mxu0 0.0
  %1808 = vmatprep.subr.mxu0 0.0
  %1809 = vmatpush1.xpose.msra.mxu0 0.0
  %1810 = vmatprep.subr.mxu0 0.0
  %1811 = vmatpush1.xpose.msra.mxu0 0.0
  %1812 = vmatprep.subr.mxu0 0.0
  %1813 = vmatpush1.xpose.msra.mxu0 0.0
  %1814 = vmatprep.subr.mxu0 0.0
  %1815 = vmatpush1.xpose.msra.mxu0 0.0
  %1816 = vmatprep.subr.mxu0 0.0
  %1817 = vmatpush1.xpose.msra.mxu0 0.0
  %1818 = vmatprep.subr.mxu0 0.0
  %1819 = vmatpush1.xpose.msra.mxu0 0.0
  %1820 = vmatprep.subr.mxu0 0.0
  %1821 = vmatpush1.xpose.msra.mxu0 0.0
  %1822 = vmatprep.subr.mxu0 0.0
  %1823 = vmatpush1.xpose.msra.mxu0 0.0
  %1824 = vmatprep.subr.mxu0 0.0
  %1825 = vmatpush1.xpose.msra.mxu0 0.0
  %1826 = vmatprep.subr.mxu0 0.0
  %1827 = vmatpush1.xpose.msra.mxu0 0.0
  %1828 = vmatprep.subr.mxu0 0.0
  %1829 = vmatpush1.xpose.msra.mxu0 0.0
  %1830 = vmatprep.subr.mxu0 0.0
  %1831 = vmatpush1.xpose.msra.mxu0 0.0
  %1832 = vmatprep.subr.mxu0 0.0
  %1833 = vmatpush1.xpose.msra.mxu0 0.0
  %1834 = vmatprep.mubr.f32.mxu0 0.0
  %1835 = vmatmul.mubr.f32.gmra.mrb[0].mxu0 %v1760
  %v1836 = vpop.f32.mrb[0].mxu0
  %v1837 = vadd.f32 0.0, %v1836
  %v1838 = vpop.f32.mrb[0].mxu0
  %1839 = vmatprep.mubr.f32.mxu0 0.0
  %1840 = vmatmul.mubr.f32.gmra.mrb[0].mxu0 %v1762
  %v1841 = vpop.f32.mrb[0].mxu0
  %v1842 = vadd.f32 0.0, %v1841
  %v1843 = vpop.f32.mrb[0].mxu0
  %1844 = vdwg.mxu0
  %v1845 = vmul.f32 %v1837, 0.35355338
  %v1846 = vmul.f32 %v1842, 0.35355338
  %v1847 = vadd.f32 %v1845, %v29
  %v1848 = vadd.f32 %v1846, %v30
  %v1849 = vsel %vm995, %v1847, -inf
  %1850 = vmax.xlane.f32.xlu0 %v1849
  %v1851 = vpop.xlane.xlu0 %1850
  %v1852 = vsel %vm995, %v1848, -inf
  %1853 = vmax.xlane.f32.xlu0 %v1852
  %v1854 = vpop.xlane.xlu0 %1853
  %v1855 = vsub.f32 %v1847, %v1851
  %v1856 = vsub.f32 %v1848, %v1854
  %v1857 = vmul.f32 %v1855, 1.442695
  %v1858 = vpow.pop %v1857
  %v1859 = vmul.f32 %v1856, 1.442695
  %v1860 = vpow.pop %v1859
  %v1861 = vsel %vm995, %v1858, 0.0
  %1862 = vadd.xlane.f32.xlu0 %v1861
  %v1863 = vpop.xlane.xlu0 %1862
  %v1864 = vsel %vm995, %v1860, 0.0
  %1865 = vadd.xlane.f32.xlu0 %v1864
  %v1866 = vpop.xlane.xlu0 %1865
  %v1867 = vrcp.pop %v1863
  %v1868 = vrcp.pop %v1866
  %1869 = vrot.lane.b32.xlu0 %v1306, 48
  %v1870 = vpop.permute.xlu0 %1869
  %1871 = vrot.lane.b32.xlu0 %v1311, 48
  %v1872 = vpop.permute.xlu0 %1871
  %1873 = vrot.lane.b32.xlu0 %v1316, 48
  %v1874 = vpop.permute.xlu0 %1873
  %v1879 = vsel %vm995, %v1858, 0
  %v1882 = vsel %vm995, %v1860, 0
  %1884 = vmatprep.subr.mxu0 0.0
  %1885 = vmatpush1.msra.mxu0 %v1870
  %1886 = vmatprep.subr.mxu0 0.0
  %1887 = vmatpush1.msra.mxu0 %v1872
  %1888 = vmatprep.subr.mxu0 0.0
  %1889 = vmatpush1.msra.mxu0 %v1874
  %1890 = vmatprep.subr.mxu0 0.0
  %1891 = vmatpush1.msra.mxu0 0.0
  %1892 = vmatprep.subr.mxu0 0.0
  %1893 = vmatpush1.msra.mxu0 0.0
  %1894 = vmatprep.subr.mxu0 0.0
  %1895 = vmatpush1.msra.mxu0 0.0
  %1896 = vmatprep.subr.mxu0 0.0
  %1897 = vmatpush1.msra.mxu0 0.0
  %1898 = vmatprep.subr.mxu0 0.0
  %1899 = vmatpush1.msra.mxu0 0.0
  %1900 = vmatprep.subr.mxu0 0.0
  %1901 = vmatpush1.msra.mxu0 0.0
  %1902 = vmatprep.subr.mxu0 0.0
  %1903 = vmatpush1.msra.mxu0 0.0
  %1904 = vmatprep.subr.mxu0 0.0
  %1905 = vmatpush1.msra.mxu0 0.0
  %1906 = vmatprep.subr.mxu0 0.0
  %1907 = vmatpush1.msra.mxu0 0.0
  %1908 = vmatprep.subr.mxu0 0.0
  %1909 = vmatpush1.msra.mxu0 0.0
  %1910 = vmatprep.subr.mxu0 0.0
  %1911 = vmatpush1.msra.mxu0 0.0
  %1912 = vmatprep.subr.mxu0 0.0
  %1913 = vmatpush1.msra.mxu0 0.0
  %1914 = vmatprep.subr.mxu0 0.0
  %1915 = vmatpush1.msra.mxu0 0.0
  %1916 = vmatprep.subr.mxu0 0.0
  %1917 = vmatpush1.msra.mxu0 0.0
  %1918 = vmatprep.subr.mxu0 0.0
  %1919 = vmatpush1.msra.mxu0 0.0
  %1920 = vmatprep.subr.mxu0 0.0
  %1921 = vmatpush1.msra.mxu0 0.0
  %1922 = vmatprep.subr.mxu0 0.0
  %1923 = vmatpush1.msra.mxu0 0.0
  %1924 = vmatprep.subr.mxu0 0.0
  %1925 = vmatpush1.msra.mxu0 0.0
  %1926 = vmatprep.subr.mxu0 0.0
  %1927 = vmatpush1.msra.mxu0 0.0
  %1928 = vmatprep.subr.mxu0 0.0
  %1929 = vmatpush1.msra.mxu0 0.0
  %1930 = vmatprep.subr.mxu0 0.0
  %1931 = vmatpush1.msra.mxu0 0.0
  %1932 = vmatprep.subr.mxu0 0.0
  %1933 = vmatpush1.msra.mxu0 0.0
  %1934 = vmatprep.subr.mxu0 0.0
  %1935 = vmatpush1.msra.mxu0 0.0
  %1936 = vmatprep.subr.mxu0 0.0
  %1937 = vmatpush1.msra.mxu0 0.0
  %1938 = vmatprep.subr.mxu0 0.0
  %1939 = vmatpush1.msra.mxu0 0.0
  %1940 = vmatprep.subr.mxu0 0.0
  %1941 = vmatpush1.msra.mxu0 0.0
  %1942 = vmatprep.subr.mxu0 0.0
  %1943 = vmatpush1.msra.mxu0 0.0
  %1944 = vmatprep.subr.mxu0 0.0
  %1945 = vmatpush1.msra.mxu0 0.0
  %1946 = vmatprep.subr.mxu0 0.0
  %1947 = vmatpush1.msra.mxu0 0.0
  %1948 = vmatprep.mubr.f32.mxu0 0.0
  %1949 = vmatmul.mubr.f32.gmra.mrb[0].mxu0 %v1879
  %v1950 = vpop.f32.mrb[0].mxu0
  %v1951 = vadd.f32 0.0, %v1950
  %v1952 = vpop.f32.mrb[0].mxu0
  %1953 = vmatprep.mubr.f32.mxu0 0.0
  %1954 = vmatmul.mubr.f32.gmra.mrb[0].mxu0 %v1882
  %v1955 = vpop.f32.mrb[0].mxu0
  %v1956 = vadd.f32 0.0, %v1955
  %v1957 = vpop.f32.mrb[0].mxu0
  %1958 = vdwg.mxu0
  %v1959 = vmul.f32 %v1951, %v1867
  %v1960 = vmul.f32 %v1956, %v1868
  %v1961 = vmul.f32 %v1858, %v1867
  %v1962 = vmul.f32 %v1860, %v1868
  %1963 = vrot.lane.b32.xlu0 %v1222, 104
  %v1964 = vpop.permute.xlu0 %1963
  %1965 = vrot.lane.b32.xlu0 %v1227, 104
  %v1966 = vpop.permute.xlu0 %1965
  %1967 = vrot.lane.b32.xlu0 %v1306, 72
  %v1968 = vpop.permute.xlu0 %1967
  %1969 = vrot.lane.b32.xlu0 %v1311, 72
  %v1970 = vpop.permute.xlu0 %1969
  %1971 = vrot.lane.b32.xlu0 %v1316, 72
  %v1972 = vpop.permute.xlu0 %1971
  %v1973 = vsel %vm149, %v1964, 0
  %v1975 = vsel %vm149, %v1966, 0
  %v1977 = vsel %vm149, %v1968, 0
  %v1979 = vsel %vm149, %v1970, 0
  %v1981 = vsel %vm149, %v1972, 0
  %1983 = vmatprep.subr.mxu0 0.0
  %1984 = vmatpush1.xpose.msra.mxu0 %v1977
  %1985 = vmatprep.subr.mxu0 0.0
  %1986 = vmatpush1.xpose.msra.mxu0 %v1979
  %1987 = vmatprep.subr.mxu0 0.0
  %1988 = vmatpush1.xpose.msra.mxu0 %v1981
  %1989 = vmatprep.subr.mxu0 0.0
  %1990 = vmatpush1.xpose.msra.mxu0 0.0
  %1991 = vmatprep.subr.mxu0 0.0
  %1992 = vmatpush1.xpose.msra.mxu0 0.0
  %1993 = vmatprep.subr.mxu0 0.0
  %1994 = vmatpush1.xpose.msra.mxu0 0.0
  %1995 = vmatprep.subr.mxu0 0.0
  %1996 = vmatpush1.xpose.msra.mxu0 0.0
  %1997 = vmatprep.subr.mxu0 0.0
  %1998 = vmatpush1.xpose.msra.mxu0 0.0
  %1999 = vmatprep.subr.mxu0 0.0
  %2000 = vmatpush1.xpose.msra.mxu0 0.0
  %2001 = vmatprep.subr.mxu0 0.0
  %2002 = vmatpush1.xpose.msra.mxu0 0.0
  %2003 = vmatprep.subr.mxu0 0.0
  %2004 = vmatpush1.xpose.msra.mxu0 0.0
  %2005 = vmatprep.subr.mxu0 0.0
  %2006 = vmatpush1.xpose.msra.mxu0 0.0
  %2007 = vmatprep.subr.mxu0 0.0
  %2008 = vmatpush1.xpose.msra.mxu0 0.0
  %2009 = vmatprep.subr.mxu0 0.0
  %2010 = vmatpush1.xpose.msra.mxu0 0.0
  %2011 = vmatprep.subr.mxu0 0.0
  %2012 = vmatpush1.xpose.msra.mxu0 0.0
  %2013 = vmatprep.subr.mxu0 0.0
  %2014 = vmatpush1.xpose.msra.mxu0 0.0
  %2015 = vmatprep.subr.mxu0 0.0
  %2016 = vmatpush1.xpose.msra.mxu0 0.0
  %2017 = vmatprep.subr.mxu0 0.0
  %2018 = vmatpush1.xpose.msra.mxu0 0.0
  %2019 = vmatprep.subr.mxu0 0.0
  %2020 = vmatpush1.xpose.msra.mxu0 0.0
  %2021 = vmatprep.subr.mxu0 0.0
  %2022 = vmatpush1.xpose.msra.mxu0 0.0
  %2023 = vmatprep.subr.mxu0 0.0
  %2024 = vmatpush1.xpose.msra.mxu0 0.0
  %2025 = vmatprep.subr.mxu0 0.0
  %2026 = vmatpush1.xpose.msra.mxu0 0.0
  %2027 = vmatprep.subr.mxu0 0.0
  %2028 = vmatpush1.xpose.msra.mxu0 0.0
  %2029 = vmatprep.subr.mxu0 0.0
  %2030 = vmatpush1.xpose.msra.mxu0 0.0
  %2031 = vmatprep.subr.mxu0 0.0
  %2032 = vmatpush1.xpose.msra.mxu0 0.0
  %2033 = vmatprep.subr.mxu0 0.0
  %2034 = vmatpush1.xpose.msra.mxu0 0.0
  %2035 = vmatprep.subr.mxu0 0.0
  %2036 = vmatpush1.xpose.msra.mxu0 0.0
  %2037 = vmatprep.subr.mxu0 0.0
  %2038 = vmatpush1.xpose.msra.mxu0 0.0
  %2039 = vmatprep.subr.mxu0 0.0
  %2040 = vmatpush1.xpose.msra.mxu0 0.0
  %2041 = vmatprep.subr.mxu0 0.0
  %2042 = vmatpush1.xpose.msra.mxu0 0.0
  %2043 = vmatprep.subr.mxu0 0.0
  %2044 = vmatpush1.xpose.msra.mxu0 0.0
  %2045 = vmatprep.subr.mxu0 0.0
  %2046 = vmatpush1.xpose.msra.mxu0 0.0
  %2047 = vmatprep.mubr.f32.mxu0 0.0
  %2048 = vmatmul.mubr.f32.gmra.mrb[0].mxu0 %v1973
  %v2049 = vpop.f32.mrb[0].mxu0
  %v2050 = vadd.f32 0.0, %v2049
  %v2051 = vpop.f32.mrb[0].mxu0
  %2052 = vmatprep.mubr.f32.mxu0 0.0
  %2053 = vmatmul.mubr.f32.gmra.mrb[0].mxu0 %v1975
  %v2054 = vpop.f32.mrb[0].mxu0
  %v2055 = vadd.f32 0.0, %v2054
  %v2056 = vpop.f32.mrb[0].mxu0
  %2057 = vdwg.mxu0
  %v2058 = vmul.f32 %v2050, 0.35355338
  %v2059 = vmul.f32 %v2055, 0.35355338
  %v2060 = vadd.f32 %v2058, %v29
  %v2061 = vadd.f32 %v2059, %v30
  %v2062 = vsel %vm995, %v2060, -inf
  %2063 = vmax.xlane.f32.xlu0 %v2062
  %v2064 = vpop.xlane.xlu0 %2063
  %v2065 = vsel %vm995, %v2061, -inf
  %2066 = vmax.xlane.f32.xlu0 %v2065
  %v2067 = vpop.xlane.xlu0 %2066
  %v2068 = vsub.f32 %v2060, %v2064
  %v2069 = vsub.f32 %v2061, %v2067
  %v2070 = vmul.f32 %v2068, 1.442695
  %v2071 = vpow.pop %v2070
  %v2072 = vmul.f32 %v2069, 1.442695
  %v2073 = vpow.pop %v2072
  %v2074 = vsel %vm995, %v2071, 0.0
  %2075 = vadd.xlane.f32.xlu0 %v2074
  %v2076 = vpop.xlane.xlu0 %2075
  %v2077 = vsel %vm995, %v2073, 0.0
  %2078 = vadd.xlane.f32.xlu0 %v2077
  %v2079 = vpop.xlane.xlu0 %2078
  %v2080 = vrcp.pop %v2076
  %v2081 = vrcp.pop %v2079
  %2082 = vrot.lane.b32.xlu0 %v1306, 40
  %v2083 = vpop.permute.xlu0 %2082
  %2084 = vrot.lane.b32.xlu0 %v1311, 40
  %v2085 = vpop.permute.xlu0 %2084
  %2086 = vrot.lane.b32.xlu0 %v1316, 40
  %v2087 = vpop.permute.xlu0 %2086
  %v2092 = vsel %vm995, %v2071, 0
  %v2095 = vsel %vm995, %v2073, 0
  %2097 = vmatprep.subr.mxu0 0.0
  %2098 = vmatpush1.msra.mxu0 %v2083
  %2099 = vmatprep.subr.mxu0 0.0
  %2100 = vmatpush1.msra.mxu0 %v2085
  %2101 = vmatprep.subr.mxu0 0.0
  %2102 = vmatpush1.msra.mxu0 %v2087
  %2103 = vmatprep.subr.mxu0 0.0
  %2104 = vmatpush1.msra.mxu0 0.0
  %2105 = vmatprep.subr.mxu0 0.0
  %2106 = vmatpush1.msra.mxu0 0.0
  %2107 = vmatprep.subr.mxu0 0.0
  %2108 = vmatpush1.msra.mxu0 0.0
  %2109 = vmatprep.subr.mxu0 0.0
  %2110 = vmatpush1.msra.mxu0 0.0
  %2111 = vmatprep.subr.mxu0 0.0
  %2112 = vmatpush1.msra.mxu0 0.0
  %2113 = vmatprep.subr.mxu0 0.0
  %2114 = vmatpush1.msra.mxu0 0.0
  %2115 = vmatprep.subr.mxu0 0.0
  %2116 = vmatpush1.msra.mxu0 0.0
  %2117 = vmatprep.subr.mxu0 0.0
  %2118 = vmatpush1.msra.mxu0 0.0
  %2119 = vmatprep.subr.mxu0 0.0
  %2120 = vmatpush1.msra.mxu0 0.0
  %2121 = vmatprep.subr.mxu0 0.0
  %2122 = vmatpush1.msra.mxu0 0.0
  %2123 = vmatprep.subr.mxu0 0.0
  %2124 = vmatpush1.msra.mxu0 0.0
  %2125 = vmatprep.subr.mxu0 0.0
  %2126 = vmatpush1.msra.mxu0 0.0
  %2127 = vmatprep.subr.mxu0 0.0
  %2128 = vmatpush1.msra.mxu0 0.0
  %2129 = vmatprep.subr.mxu0 0.0
  %2130 = vmatpush1.msra.mxu0 0.0
  %2131 = vmatprep.subr.mxu0 0.0
  %2132 = vmatpush1.msra.mxu0 0.0
  %2133 = vmatprep.subr.mxu0 0.0
  %2134 = vmatpush1.msra.mxu0 0.0
  %2135 = vmatprep.subr.mxu0 0.0
  %2136 = vmatpush1.msra.mxu0 0.0
  %2137 = vmatprep.subr.mxu0 0.0
  %2138 = vmatpush1.msra.mxu0 0.0
  %2139 = vmatprep.subr.mxu0 0.0
  %2140 = vmatpush1.msra.mxu0 0.0
  %2141 = vmatprep.subr.mxu0 0.0
  %2142 = vmatpush1.msra.mxu0 0.0
  %2143 = vmatprep.subr.mxu0 0.0
  %2144 = vmatpush1.msra.mxu0 0.0
  %2145 = vmatprep.subr.mxu0 0.0
  %2146 = vmatpush1.msra.mxu0 0.0
  %2147 = vmatprep.subr.mxu0 0.0
  %2148 = vmatpush1.msra.mxu0 0.0
  %2149 = vmatprep.subr.mxu0 0.0
  %2150 = vmatpush1.msra.mxu0 0.0
  %2151 = vmatprep.subr.mxu0 0.0
  %2152 = vmatpush1.msra.mxu0 0.0
  %2153 = vmatprep.subr.mxu0 0.0
  %2154 = vmatpush1.msra.mxu0 0.0
  %2155 = vmatprep.subr.mxu0 0.0
  %2156 = vmatpush1.msra.mxu0 0.0
  %2157 = vmatprep.subr.mxu0 0.0
  %2158 = vmatpush1.msra.mxu0 0.0
  %2159 = vmatprep.subr.mxu0 0.0
  %2160 = vmatpush1.msra.mxu0 0.0
  %2161 = vmatprep.mubr.f32.mxu0 0.0
  %2162 = vmatmul.mubr.f32.gmra.mrb[0].mxu0 %v2092
  %v2163 = vpop.f32.mrb[0].mxu0
  %v2164 = vadd.f32 0.0, %v2163
  %v2165 = vpop.f32.mrb[0].mxu0
  %2166 = vmatprep.mubr.f32.mxu0 0.0
  %2167 = vmatmul.mubr.f32.gmra.mrb[0].mxu0 %v2095
  %v2168 = vpop.f32.mrb[0].mxu0
  %v2169 = vadd.f32 0.0, %v2168
  %v2170 = vpop.f32.mrb[0].mxu0
  %2171 = vdwg.mxu0
  %v2172 = vmul.f32 %v2164, %v2080
  %v2173 = vmul.f32 %v2169, %v2081
  %v2174 = vmul.f32 %v2071, %v2080
  %v2175 = vmul.f32 %v2073, %v2081
  %2178 = vrot.lane.b32.xlu0 %v1746, 8
  %v2179 = vpop.permute.xlu0 %2178
  %2180 = vrot.lane.b32.xlu0 %v1747, 8
  %v2181 = vpop.permute.xlu0 %2180
  %2186 = vrot.lane.b32.xlu0 %v1959, 16
  %v2187 = vpop.permute.xlu0 %2186
  %2188 = vrot.lane.b32.xlu0 %v1960, 16
  %v2189 = vpop.permute.xlu0 %2188
  %2194 = vrot.lane.b32.xlu0 %v2172, 24
  %v2195 = vpop.permute.xlu0 %2194
  %2196 = vrot.lane.b32.xlu0 %v2173, 24
  %v2197 = vpop.permute.xlu0 %2196
  %v2200 = vsel %vm149, %v1533, %v2179
  %v2201 = vsel %vm149, %v1534, %v2181
  %v2202 = vsel %vm237, %v2200, %v2187
  %v2203 = vsel %vm237, %v2201, %v2189
  %v2204 = vsel %vm995, %v2202, %v2195
  %v2205 = vsel %vm995, %v2203, %v2197
  %2210 = vrot.lane.b32.xlu0 %v1319, 64
  %v2211 = vpop.permute.xlu0 %2210
  %2212 = vrot.lane.b32.xlu0 %v1320, 64
  %v2213 = vpop.permute.xlu0 %2212
  %2214 = vrot.lane.b32.xlu0 %v1321, 64
  %v2215 = vpop.permute.xlu0 %2214
  %2216 = vrot.lane.b32.xlu0 %v1322, 64
  %v2217 = vpop.permute.xlu0 %2216
  %2223 = vrot.lane.b32.xlu0 %v1001, 96
  %v2224 = vpop.permute.xlu0 %2223
  %v2227 = vsel %vm40, %v2204, 0
  %v2230 = vsel %vm40, %v2205, 0
  %2232 = vmatprep.subr.mxu0 0.0
  %2233 = vmatpush1.msra.mxu0 %v2211
  %2234 = vmatprep.subr.mxu0 0.0
  %2235 = vmatpush1.msra.mxu0 %v2213
  %2236 = vmatprep.subr.mxu0 0.0
  %2237 = vmatpush1.msra.mxu0 %v2215
  %2238 = vmatprep.subr.mxu0 0.0
  %2239 = vmatpush1.msra.mxu0 %v2217
  %2240 = vmatprep.subr.mxu0 0.0
  %2241 = vmatpush1.msra.mxu0 0.0
  %2242 = vmatprep.subr.mxu0 0.0
  %2243 = vmatpush1.msra.mxu0 0.0
  %2244 = vmatprep.subr.mxu0 0.0
  %2245 = vmatpush1.msra.mxu0 0.0
  %2246 = vmatprep.subr.mxu0 0.0
  %2247 = vmatpush1.msra.mxu0 0.0
  %2248 = vmatprep.subr.mxu0 0.0
  %2249 = vmatpush1.msra.mxu0 0.0
  %2250 = vmatprep.subr.mxu0 0.0
  %2251 = vmatpush1.msra.mxu0 0.0
  %2252 = vmatprep.subr.mxu0 0.0
  %2253 = vmatpush1.msra.mxu0 0.0
  %2254 = vmatprep.subr.mxu0 0.0
  %2255 = vmatpush1.msra.mxu0 0.0
  %2256 = vmatprep.subr.mxu0 0.0
  %2257 = vmatpush1.msra.mxu0 0.0
  %2258 = vmatprep.subr.mxu0 0.0
  %2259 = vmatpush1.msra.mxu0 0.0
  %2260 = vmatprep.subr.mxu0 0.0
  %2261 = vmatpush1.msra.mxu0 0.0
  %2262 = vmatprep.subr.mxu0 0.0
  %2263 = vmatpush1.msra.mxu0 0.0
  %2264 = vmatprep.subr.mxu0 0.0
  %2265 = vmatpush1.msra.mxu0 0.0
  %2266 = vmatprep.subr.mxu0 0.0
  %2267 = vmatpush1.msra.mxu0 0.0
  %2268 = vmatprep.subr.mxu0 0.0
  %2269 = vmatpush1.msra.mxu0 0.0
  %2270 = vmatprep.subr.mxu0 0.0
  %2271 = vmatpush1.msra.mxu0 0.0
  %2272 = vmatprep.subr.mxu0 0.0
  %2273 = vmatpush1.msra.mxu0 0.0
  %2274 = vmatprep.subr.mxu0 0.0
  %2275 = vmatpush1.msra.mxu0 0.0
  %2276 = vmatprep.subr.mxu0 0.0
  %2277 = vmatpush1.msra.mxu0 0.0
  %2278 = vmatprep.subr.mxu0 0.0
  %2279 = vmatpush1.msra.mxu0 0.0
  %2280 = vmatprep.subr.mxu0 0.0
  %2281 = vmatpush1.msra.mxu0 0.0
  %2282 = vmatprep.subr.mxu0 0.0
  %2283 = vmatpush1.msra.mxu0 0.0
  %2284 = vmatprep.subr.mxu0 0.0
  %2285 = vmatpush1.msra.mxu0 0.0
  %2286 = vmatprep.subr.mxu0 0.0
  %2287 = vmatpush1.msra.mxu0 0.0
  %2288 = vmatprep.subr.mxu0 0.0
  %2289 = vmatpush1.msra.mxu0 0.0
  %2290 = vmatprep.subr.mxu0 0.0
  %2291 = vmatpush1.msra.mxu0 0.0
  %2292 = vmatprep.subr.mxu0 0.0
  %2293 = vmatpush1.msra.mxu0 0.0
  %2294 = vmatprep.subr.mxu0 0.0
  %2295 = vmatpush1.msra.mxu0 0.0
  %2296 = vmatprep.mubr.f32.mxu0 0.0
  %2297 = vmatmul.mubr.f32.gmra.mrb[0].mxu0 %v2227
  %v2298 = vpop.f32.mrb[0].mxu0
  %v2299 = vadd.f32 %v2224, %v2298
  %v2300 = vpop.f32.mrb[0].mxu0
  %2301 = vmatprep.mubr.f32.mxu0 0.0
  %2302 = vmatmul.mubr.f32.gmra.mrb[0].mxu0 %v2230
  %v2303 = vpop.f32.mrb[0].mxu0
  %v2304 = vadd.f32 %v2224, %v2303
  %v2305 = vpop.f32.mrb[0].mxu0
  %2306 = vdwg.mxu0
  %v2307 = vadd.f32 %v1142, %v2299
  %v2308 = vadd.f32 %v1143, %v2304
  %v2309 = vld [vmem:[%s2 + $0xa4] sm:$0x1]
  %v2310 = vsel %vm40, %v2307, 0.0
  %2311 = vadd.xlane.f32.xlu0 %v2310
  %v2312 = vpop.xlane.xlu0 %2311
  %v2313 = vsel %vm40, %v2308, 0.0
  %2314 = vadd.xlane.f32.xlu0 %v2313
  %v2315 = vpop.xlane.xlu0 %2314
  %v2316 = vmul.f32 %v2312, %v1108
  %v2317 = vmul.f32 %v2315, %v1108
  %v2318 = vsub.f32 %v2307, %v2316
  %v2319 = vsub.f32 %v2308, %v2317
  %v2320 = vmul.f32 %v2318, %v2318
  %v2321 = vmul.f32 %v2319, %v2319
  %v2322 = vsel %vm40, %v2320, 0.0
  %2323 = vadd.xlane.f32.xlu0 %v2322
  %v2324 = vpop.xlane.xlu0 %2323
  %v2325 = vsel %vm40, %v2321, 0.0
  %2326 = vadd.xlane.f32.xlu0 %v2325
  %v2327 = vpop.xlane.xlu0 %2326
  %v2328 = vmul.f32 %v2324, %v1108
  %v2329 = vmul.f32 %v2327, %v1108
  %v2330 = vadd.f32 %v2328, 1e-05
  %v2331 = vadd.f32 %v2329, 1e-05
  %v2332 = vrsqrt.pop %v2330
  %v2333 = vrsqrt.pop %v2331
  %v2334 = vmul.f32 %v2318, %v2332
  %v2335 = vmul.f32 %v2319, %v2333
  %v2336 = vlaneseq
  %v2337 = vshrl.u32 %v2336, 7
  %v2338 = vsub.s32 0, %v2337
  %v2339 = vrot.slane %v2309, %v2338
  %v2340 = vmul.f32 %v2334, %v2339
  %v2341 = vmul.f32 %v2335, %v2339
  %2343 = vrot.lane.b32.xlu0 %v2339, 96
  %v2344 = vpop.permute.xlu0 %2343
  %v2346 = vadd.f32 %v2340, %v2344
  %v2347 = vadd.f32 %v2341, %v2344
  %v2349 = vsel %vm40, %v2346, 0
  %v2352 = vsel %vm40, %v2347, 0
  %2354 = vmatprep.subr.mxu0 0.0
  %2355 = vmatpush1.msra.mxu0 %v1319
  %2356 = vmatprep.subr.mxu0 0.0
  %2357 = vmatpush1.msra.mxu0 %v1320
  %2358 = vmatprep.subr.mxu0 0.0
  %2359 = vmatpush1.msra.mxu0 %v1321
  %2360 = vmatprep.subr.mxu0 0.0
  %2361 = vmatpush1.msra.mxu0 %v1322
  %2362 = vmatprep.subr.mxu0 0.0
  %2363 = vmatpush1.msra.mxu0 0.0
  %2364 = vmatprep.subr.mxu0 0.0
  %2365 = vmatpush1.msra.mxu0 0.0
  %2366 = vmatprep.subr.mxu0 0.0
  %2367 = vmatpush1.msra.mxu0 0.0
  %2368 = vmatprep.subr.mxu0 0.0
  %2369 = vmatpush1.msra.mxu0 0.0
  %2370 = vmatprep.subr.mxu0 0.0
  %2371 = vmatpush1.msra.mxu0 0.0
  %2372 = vmatprep.subr.mxu0 0.0
  %2373 = vmatpush1.msra.mxu0 0.0
  %2374 = vmatprep.subr.mxu0 0.0
  %2375 = vmatpush1.msra.mxu0 0.0
  %2376 = vmatprep.subr.mxu0 0.0
  %2377 = vmatpush1.msra.mxu0 0.0
  %2378 = vmatprep.subr.mxu0 0.0
  %2379 = vmatpush1.msra.mxu0 0.0
  %2380 = vmatprep.subr.mxu0 0.0
  %2381 = vmatpush1.msra.mxu0 0.0
  %2382 = vmatprep.subr.mxu0 0.0
  %2383 = vmatpush1.msra.mxu0 0.0
  %2384 = vmatprep.subr.mxu0 0.0
  %2385 = vmatpush1.msra.mxu0 0.0
  %2386 = vmatprep.subr.mxu0 0.0
  %2387 = vmatpush1.msra.mxu0 0.0
  %2388 = vmatprep.subr.mxu0 0.0
  %2389 = vmatpush1.msra.mxu0 0.0
  %2390 = vmatprep.subr.mxu0 0.0
  %2391 = vmatpush1.msra.mxu0 0.0
  %2392 = vmatprep.subr.mxu0 0.0
  %2393 = vmatpush1.msra.mxu0 0.0
  %2394 = vmatprep.subr.mxu0 0.0
  %2395 = vmatpush1.msra.mxu0 0.0
  %2396 = vmatprep.subr.mxu0 0.0
  %2397 = vmatpush1.msra.mxu0 0.0
  %2398 = vmatprep.subr.mxu0 0.0
  %2399 = vmatpush1.msra.mxu0 0.0
  %2400 = vmatprep.subr.mxu0 0.0
  %2401 = vmatpush1.msra.mxu0 0.0
  %2402 = vmatprep.subr.mxu0 0.0
  %2403 = vmatpush1.msra.mxu0 0.0
  %2404 = vmatprep.subr.mxu0 0.0
  %2405 = vmatpush1.msra.mxu0 0.0
  %2406 = vmatprep.subr.mxu0 0.0
  %2407 = vmatpush1.msra.mxu0 0.0
  %2408 = vmatprep.subr.mxu0 0.0
  %2409 = vmatpush1.msra.mxu0 0.0
  %2410 = vmatprep.subr.mxu0 0.0
  %2411 = vmatpush1.msra.mxu0 0.0
  %2412 = vmatprep.subr.mxu0 0.0
  %2413 = vmatpush1.msra.mxu0 0.0
  %2414 = vmatprep.subr.mxu0 0.0
  %2415 = vmatpush1.msra.mxu0 0.0
  %2416 = vmatprep.subr.mxu0 0.0
  %2417 = vmatpush1.msra.mxu0 0.0
  %2418 = vmatprep.mubr.f32.mxu0 0.0
  %2419 = vmatmul.mubr.f32.gmra.mrb[0].mxu0 %v2349
  %v2420 = vpop.f32.mrb[0].mxu0
  %v2421 = vadd.f32 0.0, %v2420
  %v2422 = vpop.f32.mrb[0].mxu0
  %2423 = vmatprep.mubr.f32.mxu0 0.0
  %2424 = vmatmul.mubr.f32.gmra.mrb[0].mxu0 %v2352
  %v2425 = vpop.f32.mrb[0].mxu0
  %v2426 = vadd.f32 0.0, %v2425
  %v2427 = vpop.f32.mrb[0].mxu0
  %2428 = vdwg.mxu0
  %v2429 = vadd.f32 %v2421, %v1132
  %v2430 = vadd.f32 %v2426, %v1132
  %v2431 = vmax.f32 %v2429, 0.0
  %v2432 = vmax.f32 %v2430, 0.0
  %v2433 = vld [vmem:[%s2 + $0x60] sm:$0xff]
  %v2434 = vld [vmem:[%s2 + $0x68] sm:$0xff]
  %v2435 = vld [vmem:[%s2 + $0x70] sm:$0xff]
  %v2436 = vld [vmem:[%s2 + $0x78] sm:$0xff]
  %v2437 = vld [vmem:[%s2 + $0x80] sm:$0xff]
  %v2438 = vld [vmem:[%s2 + $0x88] sm:$0xff]
  %v2439 = vld [vmem:[%s2 + $0x90] sm:$0xff]
  %v2440 = vld [vmem:[%s2 + $0x98] sm:$0xff]
  %2441 = vrot.lane.b32.xlu0 %v1001, 64
  %v2442 = vpop.permute.xlu0 %2441
  %vm2444 = vcmask 523264
  %v2446 = vsel %vm2444, %v2431, 0
  %v2449 = vsel %vm2444, %v2432, 0
  %2451 = vmatprep.subr.mxu0 0.0
  %2452 = vmatpush1.msra.mxu0 %v2433
  %2453 = vmatprep.subr.mxu0 0.0
  %2454 = vmatpush1.msra.mxu0 %v2434
  %2455 = vmatprep.subr.mxu0 0.0
  %2456 = vmatpush1.msra.mxu0 %v2435
  %2457 = vmatprep.subr.mxu0 0.0
  %2458 = vmatpush1.msra.mxu0 %v2436
  %2459 = vmatprep.subr.mxu0 0.0
  %2460 = vmatpush1.msra.mxu0 %v2437
  %2461 = vmatprep.subr.mxu0 0.0
  %2462 = vmatpush1.msra.mxu0 %v2438
  %2463 = vmatprep.subr.mxu0 0.0
  %2464 = vmatpush1.msra.mxu0 %v2439
  %2465 = vmatprep.subr.mxu0 0.0
  %2466 = vmatpush1.msra.mxu0 %v2440
  %2467 = vmatprep.subr.mxu0 0.0
  %2468 = vmatpush1.msra.mxu0 0.0
  %2469 = vmatprep.subr.mxu0 0.0
  %2470 = vmatpush1.msra.mxu0 0.0
  %2471 = vmatprep.subr.mxu0 0.0
  %2472 = vmatpush1.msra.mxu0 0.0
  %2473 = vmatprep.subr.mxu0 0.0
  %2474 = vmatpush1.msra.mxu0 0.0
  %2475 = vmatprep.subr.mxu0 0.0
  %2476 = vmatpush1.msra.mxu0 0.0
  %2477 = vmatprep.subr.mxu0 0.0
  %2478 = vmatpush1.msra.mxu0 0.0
  %2479 = vmatprep.subr.mxu0 0.0
  %2480 = vmatpush1.msra.mxu0 0.0
  %2481 = vmatprep.subr.mxu0 0.0
  %2482 = vmatpush1.msra.mxu0 0.0
  %2483 = vmatprep.subr.mxu0 0.0
  %2484 = vmatpush1.msra.mxu0 0.0
  %2485 = vmatprep.subr.mxu0 0.0
  %2486 = vmatpush1.msra.mxu0 0.0
  %2487 = vmatprep.subr.mxu0 0.0
  %2488 = vmatpush1.msra.mxu0 0.0
  %2489 = vmatprep.subr.mxu0 0.0
  %2490 = vmatpush1.msra.mxu0 0.0
  %2491 = vmatprep.subr.mxu0 0.0
  %2492 = vmatpush1.msra.mxu0 0.0
  %2493 = vmatprep.subr.mxu0 0.0
  %2494 = vmatpush1.msra.mxu0 0.0
  %2495 = vmatprep.subr.mxu0 0.0
  %2496 = vmatpush1.msra.mxu0 0.0
  %2497 = vmatprep.subr.mxu0 0.0
  %2498 = vmatpush1.msra.mxu0 0.0
  %2499 = vmatprep.subr.mxu0 0.0
  %2500 = vmatpush1.msra.mxu0 0.0
  %2501 = vmatprep.subr.mxu0 0.0
  %2502 = vmatpush1.msra.mxu0 0.0
  %2503 = vmatprep.subr.mxu0 0.0
  %2504 = vmatpush1.msra.mxu0 0.0
  %2505 = vmatprep.subr.mxu0 0.0
  %2506 = vmatpush1.msra.mxu0 0.0
  %2507 = vmatprep.subr.mxu0 0.0
  %2508 = vmatpush1.msra.mxu0 0.0
  %2509 = vmatprep.subr.mxu0 0.0
  %2510 = vmatpush1.msra.mxu0 0.0
  %2511 = vmatprep.subr.mxu0 0.0
  %2512 = vmatpush1.msra.mxu0 0.0
  %2513 = vmatprep.subr.mxu0 0.0
  %2514 = vmatpush1.msra.mxu0 0.0
  %2515 = vmatprep.mubr.f32.mxu0 0.0
  %2516 = vmatmul.mubr.f32.gmra.mrb[0].mxu0 %v2446
  %v2517 = vpop.f32.mrb[0].mxu0
  %v2518 = vadd.f32 %v2442, %v2517
  %v2519 = vpop.f32.mrb[0].mxu0
  %2520 = vmatprep.mubr.f32.mxu0 0.0
  %2521 = vmatmul.mubr.f32.gmra.mrb[0].mxu0 %v2449
  %v2522 = vpop.f32.mrb[0].mxu0
  %v2523 = vadd.f32 %v2442, %v2522
  %v2524 = vpop.f32.mrb[0].mxu0
  %2525 = vdwg.mxu0
  %v2526 = vadd.f32 %v2346, %v2518
  %v2527 = vadd.f32 %v2347, %v2523
  %2530 = vrot.lane.b32.xlu0 %v130, 64
  %v2531 = vpop.permute.xlu0 %2530
  %2532 = vrot.lane.b32.xlu0 %v135, 64
  %v2533 = vpop.permute.xlu0 %2532
  %2538 = vrot.lane.b32.xlu0 %v347, 64
  %v2539 = vpop.permute.xlu0 %2538
  %2540 = vrot.lane.b32.xlu0 %v348, 64
  %v2541 = vpop.permute.xlu0 %2540
  %2546 = vrot.lane.b32.xlu0 %v553, 80
  %v2547 = vpop.permute.xlu0 %2546
  %2548 = vrot.lane.b32.xlu0 %v554, 80
  %v2549 = vpop.permute.xlu0 %2548
  %2554 = vrot.lane.b32.xlu0 %v759, 96
  %v2555 = vpop.permute.xlu0 %2554
  %2556 = vrot.lane.b32.xlu0 %v760, 96
  %v2557 = vpop.permute.xlu0 %2556
  %2562 = vrot.lane.b32.xlu0 %v965, 112
  %v2563 = vpop.permute.xlu0 %2562
  %2564 = vrot.lane.b32.xlu0 %v966, 112
  %v2565 = vpop.permute.xlu0 %2564
  %2570 = vrot.lane.b32.xlu0 %v1748, 24
  %v2571 = vpop.permute.xlu0 %2570
  %2572 = vrot.lane.b32.xlu0 %v1749, 24
  %v2573 = vpop.permute.xlu0 %2572
  %2578 = vrot.lane.b32.xlu0 %v1961, 48
  %v2579 = vpop.permute.xlu0 %2578
  %2580 = vrot.lane.b32.xlu0 %v1962, 48
  %v2581 = vpop.permute.xlu0 %2580
  %2586 = vrot.lane.b32.xlu0 %v2174, 72
  %v2587 = vpop.permute.xlu0 %2586
  %2588 = vrot.lane.b32.xlu0 %v2175, 72
  %v2589 = vpop.permute.xlu0 %2588
  %v2592 = vsel %vm40, %v2526, %v2531
  %v2593 = vsel %vm40, %v2527, %v2533
  %v2594 = vsel %vm2444, %v2592, %v2539
  %v2595 = vsel %vm2444, %v2593, %v2541
  %vm2596 = vcmask 654336
  %v2597 = vsel %vm2596, %v2594, %v2547
  %v2598 = vsel %vm2596, %v2595, %v2549
  %vm2599 = vcmask 785408
  %v2600 = vsel %vm2599, %v2597, %v2555
  %v2601 = vsel %vm2599, %v2598, %v2557
  %vm2602 = vcmask 916480
  %v2603 = vsel %vm2602, %v2600, %v2563
  %v2604 = vsel %vm2602, %v2601, %v2565
  %v2605 = vsel %vm995, %v1535, %v2571
  %v2606 = vsel %vm995, %v1536, %v2573
  %vm2607 = vcmask 392192
  %v2608 = vsel %vm2607, %v2605, %v2579
  %v2609 = vsel %vm2607, %v2606, %v2581
  %vm2610 = vcmask 588800
  %v2611 = vsel %vm2610, %v2608, %v2587
  %v2612 = vsel %vm2610, %v2609, %v2589
  %v2613 = vsel %vm2599, %v2611, 0.0
  %v2614 = vsel %vm2599, %v2612, 0.0
  %2615 = vst [vmem:[%s5] sm:$0xff] %v2603
  %2616 = vst [vmem:[%s5 + $0x8] sm:$0xff] %v2613
  %2617 = vst [vmem:[%s5 + $0x10] sm:$0xff] %v2604
  %2618 = vst [vmem:[%s5 + $0x18] sm:$0xff] %v2614
  // Predicated region
  $region22: #{decoder_layer.1} parent=0 // pred_check
    _
  $region23: #{decoder_layer.1} parent=0 // pred_check_branch
    %2620 = sbr.rel (0) target = $region25
  $region24: #{decoder_layer.1} parent=0 // pred_region
    _
  $region25: #{decoder_layer.1} parent=0 // pred_fallthru
    _
  // Predicated region
  $region26: #{decoder_layer.1} parent=0 // pred_check
    _
  $region27: #{decoder_layer.1} parent=0 // pred_check_branch
    %2622 = sbr.rel (0) target = $region29
  $region28: #{decoder_layer.1} parent=0 // pred_region
    _
  $region29: #{decoder_layer.1} parent=0 // pred_fallthru
    _

</llo_original>
